<compile_context>
chip_gen: v6e
topology: v6e:2x2x1
jax: 0.10.0
libtpu: 0.0.40
codegen_flags: <defaults>
</compile_context>

<pallas_src>
import functools

import numpy as np
import jax
import jax.numpy as jnp
from jax.experimental import pallas as pl
from jax.experimental.pallas import tpu as pltpu


_LANE_OFF = 128   # lane offset of the wi=1 pool-column half (vreg-aligned)


# ----------------------------------------------------------------------------
# Fused forward kernel (one grid step = one batch tile, everything in VMEM)
# ----------------------------------------------------------------------------
def _net_kernel(x_ref, t1_ref, b1_ref, t2_ref, b2_ref,
                v1_ref, bf1_ref, v2_ref, bf2_ref, o_ref):
    f32 = jnp.float32
    bf16 = jnp.bfloat16
    bt = x_ref.shape[2]                      # batch tile

    t1 = t1_ref[...]                         # (140, 248) bf16  conv1 band
    t2 = t2_ref[...]                         # (5, 120, 208) bf16  conv2 bands
    v1 = v1_ref[...]                         # (4, 80, 50) bf16   fc1 per-hp blocks

    # ---- conv1 5x5 (1 -> 10) + bias + 2x2 max-pool + ReLU -------------------
    # One K=140 GEMM per (pooled-row parity p, pool-row offset hi); the two
    # pool-column offsets live in the two lane halves of the band matrix.
    # h1_banks[p][u, b, wo*10 + c] = relu(maxpool(conv1(x)))[b, c, 2u+p, wo]
    h1_banks = []
    for p in range(2):
        best = None
        for hi in range(2):
            s = 2 * p + hi                                   # input row phase
            slab = x_ref[s].reshape(6 * bt, 140)             # bf16, lazy slice
            y = jnp.dot(slab, t1, preferred_element_type=f32)   # (6bt, 248)
            best = y if best is None else jnp.maximum(best, y)
        pooled = jnp.maximum(best[:, :120], best[:, _LANE_OFF:])  # (6bt, 120)
        h1 = jnp.maximum(pooled + b1_ref[...], 0.0).astype(bf16)  # cast once
        h1_banks.append(h1.reshape(6, bt, 120))

    # ---- conv2 5x5 (10 -> 20) + bias + 2x2 max-pool + ReLU ------------------
    # TODO(synk): Dropout2d implemented as inference-mode identity (no
    # stochastic training-mode dropout in the kernel).
    best = None
    for hi in range(2):
        acc = None
        for dh in range(5):
            s = hi + dh                                      # h1 row phase
            slab = h1_banks[s % 2][s // 2: s // 2 + 4].reshape(4 * bt, 120)
            y = jnp.dot(slab, t2[dh], preferred_element_type=f32)  # (4bt, 208)
            acc = y if acc is None else acc + y
        best = acc if best is None else jnp.maximum(best, acc)
    pooled2 = jnp.maximum(best[:, :80], best[:, _LANE_OFF:])        # (4bt, 80)
    h2 = jnp.maximum(pooled2 + b2_ref[...], 0.0).astype(bf16)       # cast once
    h2 = h2.reshape(4, bt, 80)               # [hp, b, wp*20 + co]

    # ---- fc1 (320 -> 50) + ReLU ---------------------------------------------
    # fc1 weight pre-permuted into 4 per-hp blocks so the NCHW flatten is free.
    z = None
    for hp in range(4):
        y = jnp.dot(h2[hp], v1[hp], preferred_element_type=f32)     # (bt, 50)
        z = y if z is None else z + y
    z = jnp.maximum(z + bf1_ref[...], 0.0)
    # TODO(synk): F.dropout implemented as inference-mode identity.

    # ---- fc2 (50 -> 10) + log_softmax ---------------------------------------
    logits = jnp.dot(z.astype(bf16), v2_ref[...],
                     preferred_element_type=f32) + bf2_ref[...]     # (bt, 10)
    m = jnp.max(logits, axis=-1, keepdims=True)
    sh = logits - m
    lse = jnp.log(jnp.sum(jnp.exp(sh), axis=-1, keepdims=True))
    o_ref[...] = (sh - lse).astype(o_ref.dtype)


# ----------------------------------------------------------------------------
# One-time host-side weight preparation (hoisted out of the forward pass)
# ----------------------------------------------------------------------------
def _conv1_band(w1):
    """(140, 248) band matrix: rows = (dh, w_in) im2col lanes, cols = pooled
    conv1 outputs, wi=0 half at lanes [0:120), wi=1 half at lanes [128:248)."""
    cout, _, kh, kw = w1.shape               # (10, 1, 5, 5)
    in_w, out_w = 28, 12
    T = np.zeros((kh * in_w, _LANE_OFF + out_w * cout), np.float32)
    for wi in range(2):
        off = wi * _LANE_OFF
        for dh in range(kh):
            for dw in range(kw):
                for wo in range(out_w):
                    w_in = 2 * wo + wi + dw
                    T[dh * in_w + w_in,
                      off + wo * cout: off + (wo + 1) * cout] = w1[:, 0, dh, dw]
    return T


def _conv2_bands(w2):
    """(5, 120, 208) band matrices: T[dh][w_in*10+ci, off+wp*20+co], wi=0 half
    at lanes [0:80), wi=1 half at lanes [128:208)."""
    cout, cin, kh, kw = w2.shape             # (20, 10, 5, 5)
    in_w, out_w = 12, 4
    T = np.zeros((kh, in_w * cin, _LANE_OFF + out_w * cout), np.float32)
    for wi in range(2):
        off = wi * _LANE_OFF
        for dh in range(kh):
            for dw in range(kw):
                for wo in range(out_w):
                    w_in = 2 * wo + wi + dw
                    T[dh, w_in * cin:(w_in + 1) * cin,
                      off + wo * cout: off + (wo + 1) * cout] = w2[:, :, dh, dw].T
    return T


def prepare_params(params):
    """Pre-transpose / pre-permute / band-expand all weights once (bf16 MXU)."""
    w1 = np.asarray(params["conv1_w"], np.float32)        # (10, 1, 5, 5)
    w2 = np.asarray(params["conv2_w"], np.float32)        # (20, 10, 5, 5)
    fc1_w = np.asarray(params["fc1_w"], np.float32)       # (50, 320)
    fc2_w = np.asarray(params["fc2_w"], np.float32)       # (10, 50)

    t1 = _conv1_band(w1)                                  # (140, 248)
    t2 = _conv2_bands(w2)                                 # (5, 120, 208)

    # Biases tiled to the lane-dense (w, c) layouts.
    b1t = np.tile(np.asarray(params["conv1_b"], np.float32), 12)[None, :]  # (1,120)
    b2t = np.tile(np.asarray(params["conv2_b"], np.float32), 4)[None, :]   # (1,80)

    # fc1: PyTorch flatten index is c*16 + hp*4 + wp; regroup into 4 per-hp
    # blocks with rows ordered (wp, co) to match the kernel's h2 layout.
    v1 = fc1_w.reshape(50, 20, 4, 4).transpose(2, 3, 1, 0).reshape(4, 80, 50)
    v2 = fc2_w.T                                                           # (50,10)

    return {
        "t1": jnp.asarray(t1, jnp.bfloat16),
        "b1": jnp.asarray(b1t, jnp.float32),
        "t2": jnp.asarray(t2, jnp.bfloat16),
        "b2": jnp.asarray(b2t, jnp.float32),
        "v1": jnp.asarray(v1, jnp.bfloat16),
        "bf1": jnp.asarray(np.asarray(params["fc1_b"], np.float32)[None, :],
                           jnp.float32),
        "v2": jnp.asarray(v2, jnp.bfloat16),
        "bf2": jnp.asarray(np.asarray(params["fc2_b"], np.float32)[None, :],
                           jnp.float32),
    }


# ----------------------------------------------------------------------------
# Wrapper-side H-axis im2col: x2 (bp, 28, 28) -> (4, 6, bp, 140) where
# out[s, u, b, dh*28 + w] = x2[b, s + 4u + dh, w]
# ----------------------------------------------------------------------------
def _im2col_h(x2, bp):
    s = np.arange(4)[:, None, None]
    u = np.arange(6)[None, :, None]
    dh = np.arange(5)[None, None, :]
    ridx = jnp.asarray(s + 4 * u + dh)                # (4, 6, 5) row indices
    xg = x2[:, ridx, :]                               # (bp, 4, 6, 5, 28)
    return jnp.transpose(xg, (1, 2, 0, 3, 4)).reshape(4, 6, bp, 140)


# ----------------------------------------------------------------------------
# Public forward pass
# ----------------------------------------------------------------------------
def net_forward(x_nchw, prepped, *, batch_tile=256):
    B = x_nchw.shape[0]
    assert x_nchw.shape[1:] == (1, 28, 28), x_nchw.shape
    assert batch_tile % 8 == 0 and batch_tile > 0

    bp8 = ((B + 7) // 8) * 8
    bt = min(batch_tile, bp8)
    # Keep >= 2 grid steps when the batch allows it, so the ("parallel",) grid
    # can be split across TensorCores (v7x megacore) and the input DMA
    # double-buffers across steps.
    if bt == bp8 and bt >= 16:
        bt = ((bt // 2 + 7) // 8) * 8
    bp = ((B + bt - 1) // bt) * bt

    x = x_nchw.astype(jnp.float32)
    if bp != B:
        x = jnp.pad(x, ((0, bp - B), (0, 0), (0, 0), (0, 0)))
    # H-axis im2col (conv1 dh taps concatenated along lanes), cast to bf16 so
    # the dominant double-buffered input tile is half-size and the kernel does
    # no input casts.
    x4 = _im2col_h(x[:, 0], bp).astype(jnp.bfloat16)   # (4, 6, bp, 140)

    out = pl.pallas_call(
        _net_kernel,
        out_shape=jax.ShapeDtypeStruct((bp, 10), jnp.float32),
        grid=(bp // bt,),
        in_specs=[
            pl.BlockSpec((4, 6, bt, 140), lambda i: (0, 0, i, 0)),   # im2col input
            pl.BlockSpec((140, 248), lambda i: (0, 0)),              # conv1 band
            pl.BlockSpec((1, 120), lambda i: (0, 0)),                # conv1 bias
            pl.BlockSpec((5, 120, 208), lambda i: (0, 0, 0)),        # conv2 bands
            pl.BlockSpec((1, 80), lambda i: (0, 0)),                 # conv2 bias
            pl.BlockSpec((4, 80, 50), lambda i: (0, 0, 0)),          # fc1 (per-hp)
            pl.BlockSpec((1, 50), lambda i: (0, 0)),                 # fc1 bias
            pl.BlockSpec((50, 10), lambda i: (0, 0)),                # fc2
            pl.BlockSpec((1, 10), lambda i: (0, 0)),                 # fc2 bias
        ],
        out_specs=pl.BlockSpec((bt, 10), lambda i: (i, 0)),
        compiler_params=pltpu.CompilerParams(
            dimension_semantics=("parallel",),
            vmem_limit_bytes=48 * 1024 * 1024),
    )(x4, prepped["t1"], prepped["b1"], prepped["t2"], prepped["b2"],
      prepped["v1"], prepped["bf1"], prepped["v2"], prepped["bf2"])
    return out[:B]


# ----------------------------------------------------------------------------
# Pure-JAX reference (float32) for correctness checking
# ----------------------------------------------------------------------------
def net_forward_reference(x_nchw, params):
    hp = jax.lax.Precision.HIGHEST
    dn = ("NCHW", "OIHW", "NCHW")
    x = x_nchw.astype(jnp.float32)

    y = jax.lax.conv_general_dilated(x, params["conv1_w"], (1, 1), "VALID",
                                     dimension_numbers=dn, precision=hp)
    y = y + params["conv1_b"][None, :, None, None]
    y = jax.lax.reduce_window(y, -jnp.inf, jax.lax.max,
                              (1, 1, 2, 2), (1, 1, 2, 2), "VALID")
    y = jnp.maximum(y, 0.0)

    y = jax.lax.conv_general_dilated(y, params["conv2_w"], (1, 1), "VALID",
                                     dimension_numbers=dn, precision=hp)
    y = y + params["conv2_b"][None, :, None, None]
    y = jax.lax.reduce_window(y, -jnp.inf, jax.lax.max,
                              (1, 1, 2, 2), (1, 1, 2, 2), "VALID")
    y = jnp.maximum(y, 0.0)

    y = y.reshape(x.shape[0], 320)
    y = jnp.maximum(jnp.dot(y, params["fc1_w"].T, precision=hp) + params["fc1_b"], 0.0)
    y = jnp.dot(y, params["fc2_w"].T, precision=hp) + params["fc2_b"]
    return jax.nn.log_softmax(y, axis=-1)


# ----------------------------------------------------------------------------
# Deterministic parameter init (same shapes as Net.__init__)
# ----------------------------------------------------------------------------
def init_params(key):
    ks = jax.random.split(key, 8)

    def u(k, shape, fan_in):
        bound = 1.0 / jnp.sqrt(jnp.float32(fan_in))
        return jax.random.uniform(k, shape, jnp.float32, -bound, bound)

    return {
        "conv1_w": u(ks[0], (10, 1, 5, 5), 1 * 5 * 5),
        "conv1_b": u(ks[1], (10,), 1 * 5 * 5),
        "conv2_w": u(ks[2], (20, 10, 5, 5), 10 * 5 * 5),
        "conv2_b": u(ks[3], (20,), 10 * 5 * 5),
        "fc1_w": u(ks[4], (50, 320), 320),    # PyTorch Linear: (out, in)
        "fc1_b": u(ks[5], (50,), 320),
        "fc2_w": u(ks[6], (10, 50), 50),
        "fc2_b": u(ks[7], (10,), 50),
    }


if __name__ == "__main__":
    key = jax.random.PRNGKey(0)
    pkey, xkey = jax.random.split(key)
    params = init_params(pkey)
    prepped = prepare_params(params)      # one-time weight prep (hoisted)

    # Spatial size must be 28x28 so the 320-feature flatten is valid.
    B = 32
    x = jax.random.normal(xkey, (B, 1, 28, 28), dtype=jnp.float32)

    # Small tile for the example so we exercise a multi-step ("parallel") grid;
    # production default is batch_tile=256.
    fwd = jax.jit(functools.partial(net_forward, batch_tile=16))   # grid=(2,)
    out = jax.block_until_ready(fwd(x, prepped))

    assert out.shape == (B, 10), out.shape
    # rows of log_softmax must exp-sum to ~1
    assert jnp.allclose(jnp.sum(jnp.exp(out), axis=-1), 1.0, atol=1e-3)
    # match the float32 reference (bf16 input/weight MXU operands -> loose tol)
    ref = net_forward_reference(x, params)
    max_err = float(jnp.max(jnp.abs(out - ref)))
    assert max_err < 1.0e-1, f"max abs error vs reference: {max_err}"
    print("KERNEL_OK")
</pallas_src>

<mosaic_0001>
module attributes {stable_mosaic.version = 11 : i64} {
  func.func @_net_kernel(%arg0: i32, %arg1: memref<4x6x16x140xbf16, #tpu.memory_space<vmem>>, %arg2: memref<140x248xbf16, #tpu.memory_space<vmem>>, %arg3: memref<1x120xf32, #tpu.memory_space<vmem>>, %arg4: memref<5x120x208xbf16, #tpu.memory_space<vmem>>, %arg5: memref<1x80xf32, #tpu.memory_space<vmem>>, %arg6: memref<4x80x50xbf16, #tpu.memory_space<vmem>>, %arg7: memref<1x50xf32, #tpu.memory_space<vmem>>, %arg8: memref<50x10xbf16, #tpu.memory_space<vmem>>, %arg9: memref<1x10xf32, #tpu.memory_space<vmem>>, %arg10: memref<16x10xf32, #tpu.memory_space<vmem>>) attributes {dimension_semantics = [#tpu.dimension_semantics<parallel>], iteration_bounds = array<i64: 2>, scalar_prefetch = 0 : i64, scratch_operands = 0 : i64, tpu.core_type = #tpu.core_type<tc>, window_params = [{transform_indices = @transform_0, window_bounds = array<i64: 4, 6, 16, 140>}, {pipeline_mode = #tpu.pipeline_mode<synchronous>, transform_indices = @transform_1, window_bounds = array<i64: 140, 248>}, {pipeline_mode = #tpu.pipeline_mode<synchronous>, transform_indices = @transform_2, window_bounds = array<i64: 1, 120>}, {pipeline_mode = #tpu.pipeline_mode<synchronous>, transform_indices = @transform_3, window_bounds = array<i64: 5, 120, 208>}, {pipeline_mode = #tpu.pipeline_mode<synchronous>, transform_indices = @transform_4, window_bounds = array<i64: 1, 80>}, {pipeline_mode = #tpu.pipeline_mode<synchronous>, transform_indices = @transform_5, window_bounds = array<i64: 4, 80, 50>}, {pipeline_mode = #tpu.pipeline_mode<synchronous>, transform_indices = @transform_6, window_bounds = array<i64: 1, 50>}, {pipeline_mode = #tpu.pipeline_mode<synchronous>, transform_indices = @transform_7, window_bounds = array<i64: 50, 10>}, {pipeline_mode = #tpu.pipeline_mode<synchronous>, transform_indices = @transform_8, window_bounds = array<i64: 1, 10>}, {transform_indices = @transform_9, window_bounds = array<i64: 16, 10>}]} {
    %c0 = arith.constant 0 : index
    %c0_0 = arith.constant 0 : index
    %0 = vector.load %arg2[%c0, %c0_0] : memref<140x248xbf16, #tpu.memory_space<vmem>>, vector<140x248xbf16>
    %c0_1 = arith.constant 0 : index
    %c0_2 = arith.constant 0 : index
    %c0_3 = arith.constant 0 : index
    %1 = vector.load %arg4[%c0_1, %c0_2, %c0_3] : memref<5x120x208xbf16, #tpu.memory_space<vmem>>, vector<5x120x208xbf16>
    %c0_4 = arith.constant 0 : index
    %c0_5 = arith.constant 0 : index
    %c0_6 = arith.constant 0 : index
    %2 = vector.load %arg6[%c0_4, %c0_5, %c0_6] : memref<4x80x50xbf16, #tpu.memory_space<vmem>>, vector<4x80x50xbf16>
    %c0_7 = arith.constant 0 : index
    %c0_8 = arith.constant 0 : index
    %c0_9 = arith.constant 0 : index
    %c0_10 = arith.constant 0 : index
    %3 = vector.load %arg1[%c0_7, %c0_8, %c0_9, %c0_10] : memref<4x6x16x140xbf16, #tpu.memory_space<vmem>>, vector<1x6x16x140xbf16>
    %4 = vector.shape_cast %3 : vector<1x6x16x140xbf16> to vector<6x16x140xbf16>
    %5 = vector.shape_cast %4 : vector<6x16x140xbf16> to vector<96x140xbf16>
    %cst = arith.constant dense<0.000000e+00> : vector<96x248xf32>
    %6 = tpu.matmul %5, %0, %cst {dimension_numbers = #tpu.dot_dimension_numbers<[1], [0], [0], [1], [0, 0, 1, 1], [], []>} : vector<96x140xbf16>, vector<140x248xbf16>, vector<96x248xf32> -> vector<96x248xf32>
    %c1 = arith.constant 1 : index
    %c0_11 = arith.constant 0 : index
    %c0_12 = arith.constant 0 : index
    %c0_13 = arith.constant 0 : index
    %7 = vector.load %arg1[%c1, %c0_11, %c0_12, %c0_13] : memref<4x6x16x140xbf16, #tpu.memory_space<vmem>>, vector<1x6x16x140xbf16>
    %8 = vector.shape_cast %7 : vector<1x6x16x140xbf16> to vector<6x16x140xbf16>
    %9 = vector.shape_cast %8 : vector<6x16x140xbf16> to vector<96x140xbf16>
    %cst_14 = arith.constant dense<0.000000e+00> : vector<96x248xf32>
    %10 = tpu.matmul %9, %0, %cst_14 {dimension_numbers = #tpu.dot_dimension_numbers<[1], [0], [0], [1], [0, 0, 1, 1], [], []>} : vector<96x140xbf16>, vector<140x248xbf16>, vector<96x248xf32> -> vector<96x248xf32>
    %11 = arith.maximumf %6, %10 : vector<96x248xf32>
    %12 = vector.extract_strided_slice %11 {offsets = [0, 0], sizes = [96, 120], strides = [1, 1]} : vector<96x248xf32> to vector<96x120xf32>
    %13 = vector.extract_strided_slice %11 {offsets = [0, 128], sizes = [96, 120], strides = [1, 1]} : vector<96x248xf32> to vector<96x120xf32>
    %14 = arith.maximumf %12, %13 : vector<96x120xf32>
    %c0_15 = arith.constant 0 : index
    %c0_16 = arith.constant 0 : index
    %15 = vector.load %arg3[%c0_15, %c0_16] : memref<1x120xf32, #tpu.memory_space<vmem>>, vector<1x120xf32>
    %16 = vector.broadcast %15 : vector<1x120xf32> to vector<96x120xf32>
    %17 = arith.addf %14, %16 : vector<96x120xf32>
    %cst_17 = arith.constant 0.000000e+00 : f32
    %18 = vector.broadcast %cst_17 : f32 to vector<96x120xf32>
    %19 = arith.maximumf %17, %18 : vector<96x120xf32>
    %20 = arith.truncf %19 : vector<96x120xf32> to vector<96x120xbf16>
    %21 = vector.shape_cast %20 : vector<96x120xbf16> to vector<6x16x120xbf16>
    %c2 = arith.constant 2 : index
    %c0_18 = arith.constant 0 : index
    %c0_19 = arith.constant 0 : index
    %c0_20 = arith.constant 0 : index
    %22 = vector.load %arg1[%c2, %c0_18, %c0_19, %c0_20] : memref<4x6x16x140xbf16, #tpu.memory_space<vmem>>, vector<1x6x16x140xbf16>
    %23 = vector.shape_cast %22 : vector<1x6x16x140xbf16> to vector<6x16x140xbf16>
    %24 = vector.shape_cast %23 : vector<6x16x140xbf16> to vector<96x140xbf16>
    %cst_21 = arith.constant dense<0.000000e+00> : vector<96x248xf32>
    %25 = tpu.matmul %24, %0, %cst_21 {dimension_numbers = #tpu.dot_dimension_numbers<[1], [0], [0], [1], [0, 0, 1, 1], [], []>} : vector<96x140xbf16>, vector<140x248xbf16>, vector<96x248xf32> -> vector<96x248xf32>
    %c3 = arith.constant 3 : index
    %c0_22 = arith.constant 0 : index
    %c0_23 = arith.constant 0 : index
    %c0_24 = arith.constant 0 : index
    %26 = vector.load %arg1[%c3, %c0_22, %c0_23, %c0_24] : memref<4x6x16x140xbf16, #tpu.memory_space<vmem>>, vector<1x6x16x140xbf16>
    %27 = vector.shape_cast %26 : vector<1x6x16x140xbf16> to vector<6x16x140xbf16>
    %28 = vector.shape_cast %27 : vector<6x16x140xbf16> to vector<96x140xbf16>
    %cst_25 = arith.constant dense<0.000000e+00> : vector<96x248xf32>
    %29 = tpu.matmul %28, %0, %cst_25 {dimension_numbers = #tpu.dot_dimension_numbers<[1], [0], [0], [1], [0, 0, 1, 1], [], []>} : vector<96x140xbf16>, vector<140x248xbf16>, vector<96x248xf32> -> vector<96x248xf32>
    %30 = arith.maximumf %25, %29 : vector<96x248xf32>
    %31 = vector.extract_strided_slice %30 {offsets = [0, 0], sizes = [96, 120], strides = [1, 1]} : vector<96x248xf32> to vector<96x120xf32>
    %32 = vector.extract_strided_slice %30 {offsets = [0, 128], sizes = [96, 120], strides = [1, 1]} : vector<96x248xf32> to vector<96x120xf32>
    %33 = arith.maximumf %31, %32 : vector<96x120xf32>
    %c0_26 = arith.constant 0 : index
    %c0_27 = arith.constant 0 : index
    %34 = vector.load %arg3[%c0_26, %c0_27] : memref<1x120xf32, #tpu.memory_space<vmem>>, vector<1x120xf32>
    %35 = vector.broadcast %34 : vector<1x120xf32> to vector<96x120xf32>
    %36 = arith.addf %33, %35 : vector<96x120xf32>
    %cst_28 = arith.constant 0.000000e+00 : f32
    %37 = vector.broadcast %cst_28 : f32 to vector<96x120xf32>
    %38 = arith.maximumf %36, %37 : vector<96x120xf32>
    %39 = arith.truncf %38 : vector<96x120xf32> to vector<96x120xbf16>
    %40 = vector.shape_cast %39 : vector<96x120xbf16> to vector<6x16x120xbf16>
    %41 = vector.extract_strided_slice %21 {offsets = [0, 0, 0], sizes = [4, 16, 120], strides = [1, 1, 1]} : vector<6x16x120xbf16> to vector<4x16x120xbf16>
    %42 = vector.shape_cast %41 : vector<4x16x120xbf16> to vector<64x120xbf16>
    %43 = vector.extract_strided_slice %1 {offsets = [0, 0, 0], sizes = [1, 120, 208], strides = [1, 1, 1]} : vector<5x120x208xbf16> to vector<1x120x208xbf16>
    %44 = vector.shape_cast %43 : vector<1x120x208xbf16> to vector<120x208xbf16>
    %cst_29 = arith.constant dense<0.000000e+00> : vector<64x208xf32>
    %45 = tpu.matmul %42, %44, %cst_29 {dimension_numbers = #tpu.dot_dimension_numbers<[1], [0], [0], [1], [0, 0, 1, 1], [], []>} : vector<64x120xbf16>, vector<120x208xbf16>, vector<64x208xf32> -> vector<64x208xf32>
    %46 = vector.extract_strided_slice %40 {offsets = [0, 0, 0], sizes = [4, 16, 120], strides = [1, 1, 1]} : vector<6x16x120xbf16> to vector<4x16x120xbf16>
    %47 = vector.shape_cast %46 : vector<4x16x120xbf16> to vector<64x120xbf16>
    %48 = vector.extract_strided_slice %1 {offsets = [1, 0, 0], sizes = [1, 120, 208], strides = [1, 1, 1]} : vector<5x120x208xbf16> to vector<1x120x208xbf16>
    %49 = vector.shape_cast %48 : vector<1x120x208xbf16> to vector<120x208xbf16>
    %cst_30 = arith.constant dense<0.000000e+00> : vector<64x208xf32>
    %50 = tpu.matmul %47, %49, %cst_30 {dimension_numbers = #tpu.dot_dimension_numbers<[1], [0], [0], [1], [0, 0, 1, 1], [], []>} : vector<64x120xbf16>, vector<120x208xbf16>, vector<64x208xf32> -> vector<64x208xf32>
    %51 = arith.addf %45, %50 : vector<64x208xf32>
    %52 = vector.extract_strided_slice %21 {offsets = [1, 0, 0], sizes = [4, 16, 120], strides = [1, 1, 1]} : vector<6x16x120xbf16> to vector<4x16x120xbf16>
    %53 = vector.shape_cast %52 : vector<4x16x120xbf16> to vector<64x120xbf16>
    %54 = vector.extract_strided_slice %1 {offsets = [2, 0, 0], sizes = [1, 120, 208], strides = [1, 1, 1]} : vector<5x120x208xbf16> to vector<1x120x208xbf16>
    %55 = vector.shape_cast %54 : vector<1x120x208xbf16> to vector<120x208xbf16>
    %cst_31 = arith.constant dense<0.000000e+00> : vector<64x208xf32>
    %56 = tpu.matmul %53, %55, %cst_31 {dimension_numbers = #tpu.dot_dimension_numbers<[1], [0], [0], [1], [0, 0, 1, 1], [], []>} : vector<64x120xbf16>, vector<120x208xbf16>, vector<64x208xf32> -> vector<64x208xf32>
    %57 = arith.addf %51, %56 : vector<64x208xf32>
    %58 = vector.extract_strided_slice %40 {offsets = [1, 0, 0], sizes = [4, 16, 120], strides = [1, 1, 1]} : vector<6x16x120xbf16> to vector<4x16x120xbf16>
    %59 = vector.shape_cast %58 : vector<4x16x120xbf16> to vector<64x120xbf16>
    %60 = vector.extract_strided_slice %1 {offsets = [3, 0, 0], sizes = [1, 120, 208], strides = [1, 1, 1]} : vector<5x120x208xbf16> to vector<1x120x208xbf16>
    %61 = vector.shape_cast %60 : vector<1x120x208xbf16> to vector<120x208xbf16>
    %cst_32 = arith.constant dense<0.000000e+00> : vector<64x208xf32>
    %62 = tpu.matmul %59, %61, %cst_32 {dimension_numbers = #tpu.dot_dimension_numbers<[1], [0], [0], [1], [0, 0, 1, 1], [], []>} : vector<64x120xbf16>, vector<120x208xbf16>, vector<64x208xf32> -> vector<64x208xf32>
    %63 = arith.addf %57, %62 : vector<64x208xf32>
    %64 = vector.extract_strided_slice %21 {offsets = [2, 0, 0], sizes = [4, 16, 120], strides = [1, 1, 1]} : vector<6x16x120xbf16> to vector<4x16x120xbf16>
    %65 = vector.shape_cast %64 : vector<4x16x120xbf16> to vector<64x120xbf16>
    %66 = vector.extract_strided_slice %1 {offsets = [4, 0, 0], sizes = [1, 120, 208], strides = [1, 1, 1]} : vector<5x120x208xbf16> to vector<1x120x208xbf16>
    %67 = vector.shape_cast %66 : vector<1x120x208xbf16> to vector<120x208xbf16>
    %cst_33 = arith.constant dense<0.000000e+00> : vector<64x208xf32>
    %68 = tpu.matmul %65, %67, %cst_33 {dimension_numbers = #tpu.dot_dimension_numbers<[1], [0], [0], [1], [0, 0, 1, 1], [], []>} : vector<64x120xbf16>, vector<120x208xbf16>, vector<64x208xf32> -> vector<64x208xf32>
    %69 = arith.addf %63, %68 : vector<64x208xf32>
    %70 = vector.extract_strided_slice %40 {offsets = [0, 0, 0], sizes = [4, 16, 120], strides = [1, 1, 1]} : vector<6x16x120xbf16> to vector<4x16x120xbf16>
    %71 = vector.shape_cast %70 : vector<4x16x120xbf16> to vector<64x120xbf16>
    %72 = vector.extract_strided_slice %1 {offsets = [0, 0, 0], sizes = [1, 120, 208], strides = [1, 1, 1]} : vector<5x120x208xbf16> to vector<1x120x208xbf16>
    %73 = vector.shape_cast %72 : vector<1x120x208xbf16> to vector<120x208xbf16>
    %cst_34 = arith.constant dense<0.000000e+00> : vector<64x208xf32>
    %74 = tpu.matmul %71, %73, %cst_34 {dimension_numbers = #tpu.dot_dimension_numbers<[1], [0], [0], [1], [0, 0, 1, 1], [], []>} : vector<64x120xbf16>, vector<120x208xbf16>, vector<64x208xf32> -> vector<64x208xf32>
    %75 = vector.extract_strided_slice %21 {offsets = [1, 0, 0], sizes = [4, 16, 120], strides = [1, 1, 1]} : vector<6x16x120xbf16> to vector<4x16x120xbf16>
    %76 = vector.shape_cast %75 : vector<4x16x120xbf16> to vector<64x120xbf16>
    %77 = vector.extract_strided_slice %1 {offsets = [1, 0, 0], sizes = [1, 120, 208], strides = [1, 1, 1]} : vector<5x120x208xbf16> to vector<1x120x208xbf16>
    %78 = vector.shape_cast %77 : vector<1x120x208xbf16> to vector<120x208xbf16>
    %cst_35 = arith.constant dense<0.000000e+00> : vector<64x208xf32>
    %79 = tpu.matmul %76, %78, %cst_35 {dimension_numbers = #tpu.dot_dimension_numbers<[1], [0], [0], [1], [0, 0, 1, 1], [], []>} : vector<64x120xbf16>, vector<120x208xbf16>, vector<64x208xf32> -> vector<64x208xf32>
    %80 = arith.addf %74, %79 : vector<64x208xf32>
    %81 = vector.extract_strided_slice %40 {offsets = [1, 0, 0], sizes = [4, 16, 120], strides = [1, 1, 1]} : vector<6x16x120xbf16> to vector<4x16x120xbf16>
    %82 = vector.shape_cast %81 : vector<4x16x120xbf16> to vector<64x120xbf16>
    %83 = vector.extract_strided_slice %1 {offsets = [2, 0, 0], sizes = [1, 120, 208], strides = [1, 1, 1]} : vector<5x120x208xbf16> to vector<1x120x208xbf16>
    %84 = vector.shape_cast %83 : vector<1x120x208xbf16> to vector<120x208xbf16>
    %cst_36 = arith.constant dense<0.000000e+00> : vector<64x208xf32>
    %85 = tpu.matmul %82, %84, %cst_36 {dimension_numbers = #tpu.dot_dimension_numbers<[1], [0], [0], [1], [0, 0, 1, 1], [], []>} : vector<64x120xbf16>, vector<120x208xbf16>, vector<64x208xf32> -> vector<64x208xf32>
    %86 = arith.addf %80, %85 : vector<64x208xf32>
    %87 = vector.extract_strided_slice %21 {offsets = [2, 0, 0], sizes = [4, 16, 120], strides = [1, 1, 1]} : vector<6x16x120xbf16> to vector<4x16x120xbf16>
    %88 = vector.shape_cast %87 : vector<4x16x120xbf16> to vector<64x120xbf16>
    %89 = vector.extract_strided_slice %1 {offsets = [3, 0, 0], sizes = [1, 120, 208], strides = [1, 1, 1]} : vector<5x120x208xbf16> to vector<1x120x208xbf16>
    %90 = vector.shape_cast %89 : vector<1x120x208xbf16> to vector<120x208xbf16>
    %cst_37 = arith.constant dense<0.000000e+00> : vector<64x208xf32>
    %91 = tpu.matmul %88, %90, %cst_37 {dimension_numbers = #tpu.dot_dimension_numbers<[1], [0], [0], [1], [0, 0, 1, 1], [], []>} : vector<64x120xbf16>, vector<120x208xbf16>, vector<64x208xf32> -> vector<64x208xf32>
    %92 = arith.addf %86, %91 : vector<64x208xf32>
    %93 = vector.extract_strided_slice %40 {offsets = [2, 0, 0], sizes = [4, 16, 120], strides = [1, 1, 1]} : vector<6x16x120xbf16> to vector<4x16x120xbf16>
    %94 = vector.shape_cast %93 : vector<4x16x120xbf16> to vector<64x120xbf16>
    %95 = vector.extract_strided_slice %1 {offsets = [4, 0, 0], sizes = [1, 120, 208], strides = [1, 1, 1]} : vector<5x120x208xbf16> to vector<1x120x208xbf16>
    %96 = vector.shape_cast %95 : vector<1x120x208xbf16> to vector<120x208xbf16>
    %cst_38 = arith.constant dense<0.000000e+00> : vector<64x208xf32>
    %97 = tpu.matmul %94, %96, %cst_38 {dimension_numbers = #tpu.dot_dimension_numbers<[1], [0], [0], [1], [0, 0, 1, 1], [], []>} : vector<64x120xbf16>, vector<120x208xbf16>, vector<64x208xf32> -> vector<64x208xf32>
    %98 = arith.addf %92, %97 : vector<64x208xf32>
    %99 = arith.maximumf %69, %98 : vector<64x208xf32>
    %100 = vector.extract_strided_slice %99 {offsets = [0, 0], sizes = [64, 80], strides = [1, 1]} : vector<64x208xf32> to vector<64x80xf32>
    %101 = vector.extract_strided_slice %99 {offsets = [0, 128], sizes = [64, 80], strides = [1, 1]} : vector<64x208xf32> to vector<64x80xf32>
    %102 = arith.maximumf %100, %101 : vector<64x80xf32>
    %c0_39 = arith.constant 0 : index
    %c0_40 = arith.constant 0 : index
    %103 = vector.load %arg5[%c0_39, %c0_40] : memref<1x80xf32, #tpu.memory_space<vmem>>, vector<1x80xf32>
    %104 = vector.broadcast %103 : vector<1x80xf32> to vector<64x80xf32>
    %105 = arith.addf %102, %104 : vector<64x80xf32>
    %cst_41 = arith.constant 0.000000e+00 : f32
    %106 = vector.broadcast %cst_41 : f32 to vector<64x80xf32>
    %107 = arith.maximumf %105, %106 : vector<64x80xf32>
    %108 = arith.truncf %107 : vector<64x80xf32> to vector<64x80xbf16>
    %109 = vector.shape_cast %108 : vector<64x80xbf16> to vector<4x16x80xbf16>
    %110 = vector.extract_strided_slice %109 {offsets = [0, 0, 0], sizes = [1, 16, 80], strides = [1, 1, 1]} : vector<4x16x80xbf16> to vector<1x16x80xbf16>
    %111 = vector.shape_cast %110 : vector<1x16x80xbf16> to vector<16x80xbf16>
    %112 = vector.extract_strided_slice %2 {offsets = [0, 0, 0], sizes = [1, 80, 50], strides = [1, 1, 1]} : vector<4x80x50xbf16> to vector<1x80x50xbf16>
    %113 = vector.shape_cast %112 : vector<1x80x50xbf16> to vector<80x50xbf16>
    %cst_42 = arith.constant dense<0.000000e+00> : vector<16x50xf32>
    %114 = tpu.matmul %111, %113, %cst_42 {dimension_numbers = #tpu.dot_dimension_numbers<[1], [0], [0], [1], [0, 0, 1, 1], [], []>} : vector<16x80xbf16>, vector<80x50xbf16>, vector<16x50xf32> -> vector<16x50xf32>
    %115 = vector.extract_strided_slice %109 {offsets = [1, 0, 0], sizes = [1, 16, 80], strides = [1, 1, 1]} : vector<4x16x80xbf16> to vector<1x16x80xbf16>
    %116 = vector.shape_cast %115 : vector<1x16x80xbf16> to vector<16x80xbf16>
    %117 = vector.extract_strided_slice %2 {offsets = [1, 0, 0], sizes = [1, 80, 50], strides = [1, 1, 1]} : vector<4x80x50xbf16> to vector<1x80x50xbf16>
    %118 = vector.shape_cast %117 : vector<1x80x50xbf16> to vector<80x50xbf16>
    %cst_43 = arith.constant dense<0.000000e+00> : vector<16x50xf32>
    %119 = tpu.matmul %116, %118, %cst_43 {dimension_numbers = #tpu.dot_dimension_numbers<[1], [0], [0], [1], [0, 0, 1, 1], [], []>} : vector<16x80xbf16>, vector<80x50xbf16>, vector<16x50xf32> -> vector<16x50xf32>
    %120 = arith.addf %114, %119 : vector<16x50xf32>
    %121 = vector.extract_strided_slice %109 {offsets = [2, 0, 0], sizes = [1, 16, 80], strides = [1, 1, 1]} : vector<4x16x80xbf16> to vector<1x16x80xbf16>
    %122 = vector.shape_cast %121 : vector<1x16x80xbf16> to vector<16x80xbf16>
    %123 = vector.extract_strided_slice %2 {offsets = [2, 0, 0], sizes = [1, 80, 50], strides = [1, 1, 1]} : vector<4x80x50xbf16> to vector<1x80x50xbf16>
    %124 = vector.shape_cast %123 : vector<1x80x50xbf16> to vector<80x50xbf16>
    %cst_44 = arith.constant dense<0.000000e+00> : vector<16x50xf32>
    %125 = tpu.matmul %122, %124, %cst_44 {dimension_numbers = #tpu.dot_dimension_numbers<[1], [0], [0], [1], [0, 0, 1, 1], [], []>} : vector<16x80xbf16>, vector<80x50xbf16>, vector<16x50xf32> -> vector<16x50xf32>
    %126 = arith.addf %120, %125 : vector<16x50xf32>
    %127 = vector.extract_strided_slice %109 {offsets = [3, 0, 0], sizes = [1, 16, 80], strides = [1, 1, 1]} : vector<4x16x80xbf16> to vector<1x16x80xbf16>
    %128 = vector.shape_cast %127 : vector<1x16x80xbf16> to vector<16x80xbf16>
    %129 = vector.extract_strided_slice %2 {offsets = [3, 0, 0], sizes = [1, 80, 50], strides = [1, 1, 1]} : vector<4x80x50xbf16> to vector<1x80x50xbf16>
    %130 = vector.shape_cast %129 : vector<1x80x50xbf16> to vector<80x50xbf16>
    %cst_45 = arith.constant dense<0.000000e+00> : vector<16x50xf32>
    %131 = tpu.matmul %128, %130, %cst_45 {dimension_numbers = #tpu.dot_dimension_numbers<[1], [0], [0], [1], [0, 0, 1, 1], [], []>} : vector<16x80xbf16>, vector<80x50xbf16>, vector<16x50xf32> -> vector<16x50xf32>
    %132 = arith.addf %126, %131 : vector<16x50xf32>
    %c0_46 = arith.constant 0 : index
    %c0_47 = arith.constant 0 : index
    %133 = vector.load %arg7[%c0_46, %c0_47] : memref<1x50xf32, #tpu.memory_space<vmem>>, vector<1x50xf32>
    %134 = vector.broadcast %133 : vector<1x50xf32> to vector<16x50xf32>
    %135 = arith.addf %132, %134 : vector<16x50xf32>
    %cst_48 = arith.constant 0.000000e+00 : f32
    %136 = vector.broadcast %cst_48 : f32 to vector<16x50xf32>
    %137 = arith.maximumf %135, %136 : vector<16x50xf32>
    %138 = arith.truncf %137 : vector<16x50xf32> to vector<16x50xbf16>
    %c0_49 = arith.constant 0 : index
    %c0_50 = arith.constant 0 : index
    %139 = vector.load %arg8[%c0_49, %c0_50] : memref<50x10xbf16, #tpu.memory_space<vmem>>, vector<50x10xbf16>
    %cst_51 = arith.constant dense<0.000000e+00> : vector<16x10xf32>
    %140 = tpu.matmul %138, %139, %cst_51 {dimension_numbers = #tpu.dot_dimension_numbers<[1], [0], [0], [1], [0, 0, 1, 1], [], []>} : vector<16x50xbf16>, vector<50x10xbf16>, vector<16x10xf32> -> vector<16x10xf32>
    %c0_52 = arith.constant 0 : index
    %c0_53 = arith.constant 0 : index
    %141 = vector.load %arg9[%c0_52, %c0_53] : memref<1x10xf32, #tpu.memory_space<vmem>>, vector<1x10xf32>
    %142 = vector.broadcast %141 : vector<1x10xf32> to vector<16x10xf32>
    %143 = arith.addf %140, %142 : vector<16x10xf32>
    %cst_54 = arith.constant dense<0xFF800000> : vector<16xf32>
    %144 = vector.multi_reduction <maximumf>, %143, %cst_54 [1] : vector<16x10xf32> to vector<16xf32>
    %145 = vector.shape_cast %144 : vector<16xf32> to vector<16x1xf32>
    %146 = vector.broadcast %145 : vector<16x1xf32> to vector<16x10xf32>
    %147 = arith.subf %143, %146 : vector<16x10xf32>
    %148 = math.exp %147 : vector<16x10xf32>
    %cst_55 = arith.constant dense<0.000000e+00> : vector<16xf32>
    %149 = vector.multi_reduction <add>, %148, %cst_55 [1] : vector<16x10xf32> to vector<16xf32>
    %150 = vector.shape_cast %149 : vector<16xf32> to vector<16x1xf32>
    %151 = math.log %150 : vector<16x1xf32>
    %152 = vector.broadcast %151 : vector<16x1xf32> to vector<16x10xf32>
    %153 = arith.subf %147, %152 : vector<16x10xf32>
    %c0_56 = arith.constant 0 : index
    %c0_57 = arith.constant 0 : index
    %154 = vector.load %arg10[%c0_56, %c0_57] : memref<16x10xf32, #tpu.memory_space<vmem>>, vector<16x10xf32>
    tpu.vector_store %arg10[%c0_56, %c0_57], %153 {strides = array<i32>} : memref<16x10xf32, #tpu.memory_space<vmem>>, vector<16x10xf32>,
    return
  }
  func.func @transform_0(%arg0: i32) -> (i32, i32, i32, i32) {
    %c0_i32 = arith.constant 0 : i32
    %c0_i32_0 = arith.constant 0 : i32
    %c0_i32_1 = arith.constant 0 : i32
    %c0_i32_2 = arith.constant 0 : i32
    return %c0_i32, %c0_i32_0, %arg0, %c0_i32_1 : i32, i32, i32, i32
  }
  func.func @transform_1(%arg0: i32) -> (i32, i32) {
    %c0_i32 = arith.constant 0 : i32
    %c0_i32_0 = arith.constant 0 : i32
    %c0_i32_1 = arith.constant 0 : i32
    return %c0_i32, %c0_i32_0 : i32, i32
  }
  func.func @transform_2(%arg0: i32) -> (i32, i32) {
    %c0_i32 = arith.constant 0 : i32
    %c0_i32_0 = arith.constant 0 : i32
    %c0_i32_1 = arith.constant 0 : i32
    return %c0_i32, %c0_i32_0 : i32, i32
  }
  func.func @transform_3(%arg0: i32) -> (i32, i32, i32) {
    %c0_i32 = arith.constant 0 : i32
    %c0_i32_0 = arith.constant 0 : i32
    %c0_i32_1 = arith.constant 0 : i32
    %c0_i32_2 = arith.constant 0 : i32
    return %c0_i32, %c0_i32_0, %c0_i32_1 : i32, i32, i32
  }
  func.func @transform_4(%arg0: i32) -> (i32, i32) {
    %c0_i32 = arith.constant 0 : i32
    %c0_i32_0 = arith.constant 0 : i32
    %c0_i32_1 = arith.constant 0 : i32
    return %c0_i32, %c0_i32_0 : i32, i32
  }
  func.func @transform_5(%arg0: i32) -> (i32, i32, i32) {
    %c0_i32 = arith.constant 0 : i32
    %c0_i32_0 = arith.constant 0 : i32
    %c0_i32_1 = arith.constant 0 : i32
    %c0_i32_2 = arith.constant 0 : i32
    return %c0_i32, %c0_i32_0, %c0_i32_1 : i32, i32, i32
  }
  func.func @transform_6(%arg0: i32) -> (i32, i32) {
    %c0_i32 = arith.constant 0 : i32
    %c0_i32_0 = arith.constant 0 : i32
    %c0_i32_1 = arith.constant 0 : i32
    return %c0_i32, %c0_i32_0 : i32, i32
  }
  func.func @transform_7(%arg0: i32) -> (i32, i32) {
    %c0_i32 = arith.constant 0 : i32
    %c0_i32_0 = arith.constant 0 : i32
    %c0_i32_1 = arith.constant 0 : i32
    return %c0_i32, %c0_i32_0 : i32, i32
  }
  func.func @transform_8(%arg0: i32) -> (i32, i32) {
    %c0_i32 = arith.constant 0 : i32
    %c0_i32_0 = arith.constant 0 : i32
    %c0_i32_1 = arith.constant 0 : i32
    return %c0_i32, %c0_i32_0 : i32, i32
  }
  func.func @transform_9(%arg0: i32) -> (i32, i32) {
    %c0_i32 = arith.constant 0 : i32
    %c0_i32_0 = arith.constant 0 : i32
    return %arg0, %c0_i32 : i32, i32
  }
}

</mosaic_0001>

<llo_original>
// kernel: net_forward.1
$region0: #{net_forward.1}
  #allocation0 [shape = 'u32[]', space=smem, size = 0x4, offset = 0x4, fixed_abs, tag = 'smem constant byte address 0x4 - core index']
  #allocation1 [shape = 'u32[144,128]{1,0:T(1,128)}', space=vmem, size = 0x12000, scoped, tag = 'internal scratch']
  %s0 = inlined_call_operand.vmem [shape: bf16[4,6,32,140], index: 0, kind: input, shape index: {}]
  %s1 = inlined_call_operand.vmem [shape: bf16[140,248], index: 1, kind: input, shape index: {}]
  %s2 = inlined_call_operand.vmem [shape: f32[1,120], index: 2, kind: input, shape index: {}]
  %s3 = inlined_call_operand.vmem [shape: bf16[5,120,208], index: 3, kind: input, shape index: {}]
  %s4 = inlined_call_operand.vmem [shape: f32[1,80], index: 4, kind: input, shape index: {}]
  %s5 = inlined_call_operand.vmem [shape: bf16[4,80,50], index: 5, kind: input, shape index: {}]
  %s6 = inlined_call_operand.vmem [shape: f32[1,50], index: 6, kind: input, shape index: {}]
  %s7 = inlined_call_operand.vmem [shape: bf16[50,10], index: 7, kind: input, shape index: {}]
  %s8 = inlined_call_operand.vmem [shape: f32[1,10], index: 8, kind: input, shape index: {}]
  %s9 = inlined_call_operand.vmem [shape: f32[32,10], index: 9, kind: output, shape index: {}]
  %s10 = sld [smem:[#allocation0]]
  $region107: #{net_forward.1} parent=0
    _
  %s12 = ssub.s32 1, %s10
  %s13 = scalar_select 0, %s12, %s10
  $region1: #{net_forward.1} parent=0
    #allocation2 [shape = 'u8[393216]{0}', space=vmem, size = 0x60000, scoped, tag = 'input window, operand 0']
    loop: start=0, step=1, limit=4
    $region2: #{net_forward.1} parent=1 // loop_pre_header
      _
    $region3: #{net_forward.1} parent=1 // loop_header
      %s15 = sphi 0, %s19
      %p16 = scmp.ge.s32.totalorder %s15, 4
      %s25 = sphi 0, %s27
      %s28 = sphi 0, %s25
      %s29 = sphi 0, %s28
      %s45 = sphi 0, %s29
      %s49 = sphi 0, %s49
      %s51 = sphi 0, %s49
      %s52 = sphi 0, %s51
      %s66 = sphi 0, %s52
      %s70 = sphi 0, %s70
      %s72 = sphi 0, %s70
      %s73 = sphi 0, %s72
      %s87 = sphi 0, %s73
      %s91 = sphi 0, %s91
      %s93 = sphi 0, %s91
      %s94 = sphi 0, %s93
      %s108 = sphi 0, %s94
      %s112 = sphi 0, %s112
      %s114 = sphi 0, %s112
      %s115 = sphi 0, %s114
      %s129 = sphi 0, %s115
      %s133 = sphi 0, %s133
      %s135 = sphi 0, %s133
      %s136 = sphi 0, %s135
      %s150 = sphi 0, %s136
      %s154 = sphi 0, %s154
      %s156 = sphi 0, %s154
      %s157 = sphi 0, %s156
      %s171 = sphi 0, %s157
      %s175 = sphi 0, %s175
      %s177 = sphi 0, %s175
      %s178 = sphi 0, %s177
      %s192 = sphi 0, %s178
      %s196 = sphi 0, %s196
      %s198 = sphi 0, %s196
      %s199 = sphi 0, %s198
      %s213 = sphi 0, %s199
      %s219 = sphi 0, %s221
      %s222 = sphi 0, %s219
      %s223 = sphi 0, %s222
      %s239 = sphi 0, %s223
    $region4: #{net_forward.1} parent=1 // loop_header_branch
      %18 = sbr.rel (%p16) target = $region8
    $region5: #{net_forward.1} parent=1 // loop_body
      %s20 = ssub.s32 %s15, 1
      %s21 = ssub.s32 %s15, 2
      %s22 = sadd.s32 %s15, 1
      %s23 = ssub.s32 %s15, %s22
      %p24 = scmp.eq.s32.totalorder %s23, 0
      %s26 = sadd.s32 %s25, 1
      %s27 = scalar_select %p24, %s25, %s26
      %p30 = pneg %p24
      %p31 = scmp.eq.s32.totalorder %s15, 1
      %p32 = por %p30, %p31
      %p33 = scmp.ne.s32.totalorder %s25, %s28
      %p34 = scmp.eq.s32.totalorder %s15, 0
      %p35 = por %p33, %p34
      %p36 = scmp.ne.s32.totalorder %s25, %s28
      %p37 = scmp.eq.s32.totalorder %s20, 1
      %p38 = por %p36, %p37
      %p39 = scmp.ne.s32.totalorder %s28, %s29
      %p40 = scmp.eq.s32.totalorder %s20, 0
      %p41 = por %p39, %p40
      %p42 = scmp.ne.s32.totalorder %s28, %s29
      %p43 = scmp.eq.s32.totalorder %s21, 1
      %p44 = por %p42, %p43
      %p46 = scmp.ne.s32.totalorder %s29, %s45
      %p47 = scmp.eq.s32.totalorder %s21, 0
      %p48 = por %p46, %p47
      %s50 = sadd.s32 %s49, 1
      %p53 = scmp.eq.s32.totalorder %s15, 1
      %p54 = scmp.ne.s32.totalorder %s49, %s51
      %p55 = scmp.eq.s32.totalorder %s15, 0
      %p56 = por %p54, %p55
      %p57 = scmp.ne.s32.totalorder %s49, %s51
      %p58 = scmp.eq.s32.totalorder %s20, 1
      %p59 = por %p57, %p58
      %p60 = scmp.ne.s32.totalorder %s51, %s52
      %p61 = scmp.eq.s32.totalorder %s20, 0
      %p62 = por %p60, %p61
      %p63 = scmp.ne.s32.totalorder %s51, %s52
      %p64 = scmp.eq.s32.totalorder %s21, 1
      %p65 = por %p63, %p64
      %p67 = scmp.ne.s32.totalorder %s52, %s66
      %p68 = scmp.eq.s32.totalorder %s21, 0
      %p69 = por %p67, %p68
      %s71 = sadd.s32 %s70, 1
      %p74 = scmp.eq.s32.totalorder %s15, 1
      %p75 = scmp.ne.s32.totalorder %s70, %s72
      %p76 = scmp.eq.s32.totalorder %s15, 0
      %p77 = por %p75, %p76
      %p78 = scmp.ne.s32.totalorder %s70, %s72
      %p79 = scmp.eq.s32.totalorder %s20, 1
      %p80 = por %p78, %p79
      %p81 = scmp.ne.s32.totalorder %s72, %s73
      %p82 = scmp.eq.s32.totalorder %s20, 0
      %p83 = por %p81, %p82
      %p84 = scmp.ne.s32.totalorder %s72, %s73
      %p85 = scmp.eq.s32.totalorder %s21, 1
      %p86 = por %p84, %p85
      %p88 = scmp.ne.s32.totalorder %s73, %s87
      %p89 = scmp.eq.s32.totalorder %s21, 0
      %p90 = por %p88, %p89
      %s92 = sadd.s32 %s91, 1
      %p95 = scmp.eq.s32.totalorder %s15, 1
      %p96 = scmp.ne.s32.totalorder %s91, %s93
      %p97 = scmp.eq.s32.totalorder %s15, 0
      %p98 = por %p96, %p97
      %p99 = scmp.ne.s32.totalorder %s91, %s93
      %p100 = scmp.eq.s32.totalorder %s20, 1
      %p101 = por %p99, %p100
      %p102 = scmp.ne.s32.totalorder %s93, %s94
      %p103 = scmp.eq.s32.totalorder %s20, 0
      %p104 = por %p102, %p103
      %p105 = scmp.ne.s32.totalorder %s93, %s94
      %p106 = scmp.eq.s32.totalorder %s21, 1
      %p107 = por %p105, %p106
      %p109 = scmp.ne.s32.totalorder %s94, %s108
      %p110 = scmp.eq.s32.totalorder %s21, 0
      %p111 = por %p109, %p110
      %s113 = sadd.s32 %s112, 1
      %p116 = scmp.eq.s32.totalorder %s15, 1
      %p117 = scmp.ne.s32.totalorder %s112, %s114
      %p118 = scmp.eq.s32.totalorder %s15, 0
      %p119 = por %p117, %p118
      %p120 = scmp.ne.s32.totalorder %s112, %s114
      %p121 = scmp.eq.s32.totalorder %s20, 1
      %p122 = por %p120, %p121
      %p123 = scmp.ne.s32.totalorder %s114, %s115
      %p124 = scmp.eq.s32.totalorder %s20, 0
      %p125 = por %p123, %p124
      %p126 = scmp.ne.s32.totalorder %s114, %s115
      %p127 = scmp.eq.s32.totalorder %s21, 1
      %p128 = por %p126, %p127
      %p130 = scmp.ne.s32.totalorder %s115, %s129
      %p131 = scmp.eq.s32.totalorder %s21, 0
      %p132 = por %p130, %p131
      %s134 = sadd.s32 %s133, 1
      %p137 = scmp.eq.s32.totalorder %s15, 1
      %p138 = scmp.ne.s32.totalorder %s133, %s135
      %p139 = scmp.eq.s32.totalorder %s15, 0
      %p140 = por %p138, %p139
      %p141 = scmp.ne.s32.totalorder %s133, %s135
      %p142 = scmp.eq.s32.totalorder %s20, 1
      %p143 = por %p141, %p142
      %p144 = scmp.ne.s32.totalorder %s135, %s136
      %p145 = scmp.eq.s32.totalorder %s20, 0
      %p146 = por %p144, %p145
      %p147 = scmp.ne.s32.totalorder %s135, %s136
      %p148 = scmp.eq.s32.totalorder %s21, 1
      %p149 = por %p147, %p148
      %p151 = scmp.ne.s32.totalorder %s136, %s150
      %p152 = scmp.eq.s32.totalorder %s21, 0
      %p153 = por %p151, %p152
      %s155 = sadd.s32 %s154, 1
      %p158 = scmp.eq.s32.totalorder %s15, 1
      %p159 = scmp.ne.s32.totalorder %s154, %s156
      %p160 = scmp.eq.s32.totalorder %s15, 0
      %p161 = por %p159, %p160
      %p162 = scmp.ne.s32.totalorder %s154, %s156
      %p163 = scmp.eq.s32.totalorder %s20, 1
      %p164 = por %p162, %p163
      %p165 = scmp.ne.s32.totalorder %s156, %s157
      %p166 = scmp.eq.s32.totalorder %s20, 0
      %p167 = por %p165, %p166
      %p168 = scmp.ne.s32.totalorder %s156, %s157
      %p169 = scmp.eq.s32.totalorder %s21, 1
      %p170 = por %p168, %p169
      %p172 = scmp.ne.s32.totalorder %s157, %s171
      %p173 = scmp.eq.s32.totalorder %s21, 0
      %p174 = por %p172, %p173
      %s176 = sadd.s32 %s175, 1
      %p179 = scmp.eq.s32.totalorder %s15, 1
      %p180 = scmp.ne.s32.totalorder %s175, %s177
      %p181 = scmp.eq.s32.totalorder %s15, 0
      %p182 = por %p180, %p181
      %p183 = scmp.ne.s32.totalorder %s175, %s177
      %p184 = scmp.eq.s32.totalorder %s20, 1
      %p185 = por %p183, %p184
      %p186 = scmp.ne.s32.totalorder %s177, %s178
      %p187 = scmp.eq.s32.totalorder %s20, 0
      %p188 = por %p186, %p187
      %p189 = scmp.ne.s32.totalorder %s177, %s178
      %p190 = scmp.eq.s32.totalorder %s21, 1
      %p191 = por %p189, %p190
      %p193 = scmp.ne.s32.totalorder %s178, %s192
      %p194 = scmp.eq.s32.totalorder %s21, 0
      %p195 = por %p193, %p194
      %s197 = sadd.s32 %s196, 1
      %p200 = scmp.eq.s32.totalorder %s15, 1
      %p201 = scmp.ne.s32.totalorder %s196, %s198
      %p202 = scmp.eq.s32.totalorder %s15, 0
      %p203 = por %p201, %p202
      %p204 = scmp.ne.s32.totalorder %s196, %s198
      %p205 = scmp.eq.s32.totalorder %s20, 1
      %p206 = por %p204, %p205
      %p207 = scmp.ne.s32.totalorder %s198, %s199
      %p208 = scmp.eq.s32.totalorder %s20, 0
      %p209 = por %p207, %p208
      %p210 = scmp.ne.s32.totalorder %s198, %s199
      %p211 = scmp.eq.s32.totalorder %s21, 1
      %p212 = por %p210, %p211
      %p214 = scmp.ne.s32.totalorder %s199, %s213
      %p215 = scmp.eq.s32.totalorder %s21, 0
      %p216 = por %p214, %p215
      %s217 = ssub.s32 %s15, %s22
      %p218 = scmp.eq.s32.totalorder %s217, 0
      %s220 = sadd.s32 %s219, 1
      %s221 = scalar_select %p218, %s219, %s220
      %p224 = pneg %p218
      %p225 = scmp.eq.s32.totalorder %s15, 1
      %p226 = por %p224, %p225
      %p227 = scmp.ne.s32.totalorder %s219, %s222
      %p228 = scmp.eq.s32.totalorder %s15, 0
      %p229 = por %p227, %p228
      %p230 = scmp.ne.s32.totalorder %s219, %s222
      %p231 = scmp.eq.s32.totalorder %s20, 1
      %p232 = por %p230, %p231
      %p233 = scmp.ne.s32.totalorder %s222, %s223
      %p234 = scmp.eq.s32.totalorder %s20, 0
      %p235 = por %p233, %p234
      %p236 = scmp.ne.s32.totalorder %s222, %s223
      %p237 = scmp.eq.s32.totalorder %s21, 1
      %p238 = por %p236, %p237
      %p240 = scmp.ne.s32.totalorder %s223, %s239
      %p241 = scmp.eq.s32.totalorder %s21, 0
      %p242 = por %p240, %p241
      %p243 = scmp.le.s32.totalorder 1, %s15
      %p244 = scmp.lt.s32.totalorder %s15, 3
      %p245 = pnand %p243, %p244
      %p246 = pneg %p245
      // Predicated region
      $region9: #{net_forward.1} parent=5 // pred_check
        _
      $region10: #{net_forward.1} parent=5 // pred_check_branch
        %248 = sbr.rel (%p245) target = $region12
      $region11: #{net_forward.1} parent=5 // pred_region
        %s249 = ssub.s32 %s15, 1
        // Predicated region
        $region13: #{net_forward.1} parent=11 // pred_check
          %p250 = pneg %p62
        $region14: #{net_forward.1} parent=11 // pred_check_branch
          %252 = sbr.rel (%p250) target = $region16
        $region15: #{net_forward.1} parent=11 // pred_region
          _
        $region16: #{net_forward.1} parent=11 // pred_fallthru
          _
        // Predicated region
        $region17: #{net_forward.1} parent=11 // pred_check
          %p253 = pneg %p83
        $region18: #{net_forward.1} parent=11 // pred_check_branch
          %255 = sbr.rel (%p253) target = $region20
        $region19: #{net_forward.1} parent=11 // pred_region
          _
        $region20: #{net_forward.1} parent=11 // pred_fallthru
          _
        // Predicated region
        $region21: #{net_forward.1} parent=11 // pred_check
          %p256 = pneg %p104
        $region22: #{net_forward.1} parent=11 // pred_check_branch
          %258 = sbr.rel (%p256) target = $region24
        $region23: #{net_forward.1} parent=11 // pred_region
          _
        $region24: #{net_forward.1} parent=11 // pred_fallthru
          _
        // Predicated region
        $region25: #{net_forward.1} parent=11 // pred_check
          %p259 = pneg %p125
        $region26: #{net_forward.1} parent=11 // pred_check_branch
          %261 = sbr.rel (%p259) target = $region28
        $region27: #{net_forward.1} parent=11 // pred_region
          _
        $region28: #{net_forward.1} parent=11 // pred_fallthru
          _
        // Predicated region
        $region29: #{net_forward.1} parent=11 // pred_check
          %p262 = pneg %p146
        $region30: #{net_forward.1} parent=11 // pred_check_branch
          %264 = sbr.rel (%p262) target = $region32
        $region31: #{net_forward.1} parent=11 // pred_region
          _
        $region32: #{net_forward.1} parent=11 // pred_fallthru
          _
        // Predicated region
        $region33: #{net_forward.1} parent=11 // pred_check
          %p265 = pneg %p167
        $region34: #{net_forward.1} parent=11 // pred_check_branch
          %267 = sbr.rel (%p265) target = $region36
        $region35: #{net_forward.1} parent=11 // pred_region
          _
        $region36: #{net_forward.1} parent=11 // pred_fallthru
          _
        // Predicated region
        $region37: #{net_forward.1} parent=11 // pred_check
          %p268 = pneg %p188
        $region38: #{net_forward.1} parent=11 // pred_check_branch
          %270 = sbr.rel (%p268) target = $region40
        $region39: #{net_forward.1} parent=11 // pred_region
          _
        $region40: #{net_forward.1} parent=11 // pred_fallthru
          _
        // Predicated region
        $region41: #{net_forward.1} parent=11 // pred_check
          %p271 = pneg %p209
        $region42: #{net_forward.1} parent=11 // pred_check_branch
          %273 = sbr.rel (%p271) target = $region44
        $region43: #{net_forward.1} parent=11 // pred_region
          _
        $region44: #{net_forward.1} parent=11 // pred_fallthru
          _
      $region12: #{net_forward.1} parent=5 // pred_fallthru
        _
      %p274 = scmp.lt.s32.totalorder %s15, 2
      // Predicated region
      $region45: #{net_forward.1} parent=5 // pred_check
        %p275 = pneg %p274
      $region46: #{net_forward.1} parent=5 // pred_check_branch
        %277 = sbr.rel (%p275) target = $region48
      $region47: #{net_forward.1} parent=5 // pred_region
        // Predicated region
        $region49: #{net_forward.1} parent=47 // pred_check
          %p278 = pneg %p35
        $region50: #{net_forward.1} parent=47 // pred_check_branch
          %280 = sbr.rel (%p278) target = $region52
        $region51: #{net_forward.1} parent=47 // pred_region
          %s281 = sand.u32 %s25, 1
          %s282 = sand.u32 %s25, 1
          %s283 = smul.addr %s282, 384
          %s284 = scalar_lea.vmem [#allocation2], %s283
          %s285 = smul.u32 2, %s15
          %s286 = smul.addr %s285, 2
          %s287 = smul.addr %s286, 4
          %s288 = scalar_lea.vmem %s0, %s287
          // Predicated region
          $region53: #{net_forward.1} parent=51 // pred_check
            _
          $region54: #{net_forward.1} parent=51 // pred_check_branch
            %290 = sbr.rel (0) target = $region56
          $region55: #{net_forward.1} parent=51 // pred_region
            // Predicated region
            $region57: #{net_forward.1} parent=55 // pred_check
              _
            $region58: #{net_forward.1} parent=55 // pred_check_branch
              %292 = sbr.rel (0) target = $region60
            $region59: #{net_forward.1} parent=55 // pred_region
              // Predicated region
              $region72: #{net_forward.1} parent=59 // pred_check
                _
              $region73: #{net_forward.1} parent=59 // pred_check_branch
                %402 = sbr.rel (0) target = $region75
              $region74: #{net_forward.1} parent=59 // pred_region
                loop: start=0, step=1, limit=1
                $region76: #{net_forward.1} parent=74 // loop_pre_header
                  _
                $region77: #{net_forward.1} parent=74 // loop_header
                  %s404 = sphi 0, %s408
                  %p405 = scmp.ge.s32.totalorder %s404, 1
                  %s409 = sphi %s288, %s288
                  %s410 = sphi %s284, %s284
                $region78: #{net_forward.1} parent=74 // loop_header_branch
                  %407 = sbr.rel (%p405) target = $region82
                $region79: #{net_forward.1} parent=74 // loop_body
                  %v411 = vld [vmem:[%s409] sm:$0xff]
                  %412 = vst [vmem:[%s410] sm:$0xff] %v411
                  %v413 = vld [vmem:[%s409 + $0x8] sm:$0xff]
                  %414 = vst [vmem:[%s410 + $0x8] sm:$0xff] %v413
                  %v415 = vld [vmem:[%s409 + $0x20] sm:$0xff]
                  %416 = vst [vmem:[%s410 + $0x10] sm:$0xff] %v415
                  %v417 = vld [vmem:[%s409 + $0x28] sm:$0xff]
                  %418 = vst [vmem:[%s410 + $0x18] sm:$0xff] %v417
                  %v419 = vld [vmem:[%s409 + $0x40] sm:$0xff]
                  %420 = vst [vmem:[%s410 + $0x20] sm:$0xff] %v419
                  %v421 = vld [vmem:[%s409 + $0x48] sm:$0xff]
                  %422 = vst [vmem:[%s410 + $0x28] sm:$0xff] %v421
                  %v423 = vld [vmem:[%s409 + $0x60] sm:$0xff]
                  %424 = vst [vmem:[%s410 + $0x30] sm:$0xff] %v423
                  %v425 = vld [vmem:[%s409 + $0x68] sm:$0xff]
                  %426 = vst [vmem:[%s410 + $0x38] sm:$0xff] %v425
                  %v427 = vld [vmem:[%s409 + $0x80] sm:$0xff]
                  %428 = vst [vmem:[%s410 + $0x40] sm:$0xff] %v427
                  %v429 = vld [vmem:[%s409 + $0x88] sm:$0xff]
                  %430 = vst [vmem:[%s410 + $0x48] sm:$0xff] %v429
                  %v431 = vld [vmem:[%s409 + $0xa0] sm:$0xff]
                  %432 = vst [vmem:[%s410 + $0x50] sm:$0xff] %v431
                  %v433 = vld [vmem:[%s409 + $0xa8] sm:$0xff]
                  %434 = vst [vmem:[%s410 + $0x58] sm:$0xff] %v433
                  %v435 = vld [vmem:[%s409 + $0xc0] sm:$0xff]
                  %436 = vst [vmem:[%s410 + $0x60] sm:$0xff] %v435
                  %v437 = vld [vmem:[%s409 + $0xc8] sm:$0xff]
                  %438 = vst [vmem:[%s410 + $0x68] sm:$0xff] %v437
                  %v439 = vld [vmem:[%s409 + $0xe0] sm:$0xff]
                  %440 = vst [vmem:[%s410 + $0x70] sm:$0xff] %v439
                  %v441 = vld [vmem:[%s409 + $0xe8] sm:$0xff]
                  %442 = vst [vmem:[%s410 + $0x78] sm:$0xff] %v441
                  %v443 = vld [vmem:[%s409 + $0x100] sm:$0xff]
                  %444 = vst [vmem:[%s410 + $0x80] sm:$0xff] %v443
                  %v445 = vld [vmem:[%s409 + $0x108] sm:$0xff]
                  %446 = vst [vmem:[%s410 + $0x88] sm:$0xff] %v445
                  %v447 = vld [vmem:[%s409 + $0x120] sm:$0xff]
                  %448 = vst [vmem:[%s410 + $0x90] sm:$0xff] %v447
                  %v449 = vld [vmem:[%s409 + $0x128] sm:$0xff]
                  %450 = vst [vmem:[%s410 + $0x98] sm:$0xff] %v449
                  %v451 = vld [vmem:[%s409 + $0x140] sm:$0xff]
                  %452 = vst [vmem:[%s410 + $0xa0] sm:$0xff] %v451
                  %v453 = vld [vmem:[%s409 + $0x148] sm:$0xff]
                  %454 = vst [vmem:[%s410 + $0xa8] sm:$0xff] %v453
                  %v455 = vld [vmem:[%s409 + $0x160] sm:$0xff]
                  %456 = vst [vmem:[%s410 + $0xb0] sm:$0xff] %v455
                  %v457 = vld [vmem:[%s409 + $0x168] sm:$0xff]
                  %458 = vst [vmem:[%s410 + $0xb8] sm:$0xff] %v457
                  %v459 = vld [vmem:[%s409 + $0x180] sm:$0xff]
                  %460 = vst [vmem:[%s410 + $0xc0] sm:$0xff] %v459
                  %v461 = vld [vmem:[%s409 + $0x188] sm:$0xff]
                  %462 = vst [vmem:[%s410 + $0xc8] sm:$0xff] %v461
                  %v463 = vld [vmem:[%s409 + $0x1a0] sm:$0xff]
                  %464 = vst [vmem:[%s410 + $0xd0] sm:$0xff] %v463
                  %v465 = vld [vmem:[%s409 + $0x1a8] sm:$0xff]
                  %466 = vst [vmem:[%s410 + $0xd8] sm:$0xff] %v465
                  %v467 = vld [vmem:[%s409 + $0x1c0] sm:$0xff]
                  %468 = vst [vmem:[%s410 + $0xe0] sm:$0xff] %v467
                  %v469 = vld [vmem:[%s409 + $0x1c8] sm:$0xff]
                  %470 = vst [vmem:[%s410 + $0xe8] sm:$0xff] %v469
                  %v471 = vld [vmem:[%s409 + $0x1e0] sm:$0xff]
                  %472 = vst [vmem:[%s410 + $0xf0] sm:$0xff] %v471
                  %v473 = vld [vmem:[%s409 + $0x1e8] sm:$0xff]
                  %474 = vst [vmem:[%s410 + $0xf8] sm:$0xff] %v473
                  %v475 = vld [vmem:[%s409 + $0x200] sm:$0xff]
                  %476 = vst [vmem:[%s410 + $0x100] sm:$0xff] %v475
                  %v477 = vld [vmem:[%s409 + $0x208] sm:$0xff]
                  %478 = vst [vmem:[%s410 + $0x108] sm:$0xff] %v477
                  %v479 = vld [vmem:[%s409 + $0x220] sm:$0xff]
                  %480 = vst [vmem:[%s410 + $0x110] sm:$0xff] %v479
                  %v481 = vld [vmem:[%s409 + $0x228] sm:$0xff]
                  %482 = vst [vmem:[%s410 + $0x118] sm:$0xff] %v481
                  %v483 = vld [vmem:[%s409 + $0x240] sm:$0xff]
                  %484 = vst [vmem:[%s410 + $0x120] sm:$0xff] %v483
                  %v485 = vld [vmem:[%s409 + $0x248] sm:$0xff]
                  %486 = vst [vmem:[%s410 + $0x128] sm:$0xff] %v485
                  %v487 = vld [vmem:[%s409 + $0x260] sm:$0xff]
                  %488 = vst [vmem:[%s410 + $0x130] sm:$0xff] %v487
                  %v489 = vld [vmem:[%s409 + $0x268] sm:$0xff]
                  %490 = vst [vmem:[%s410 + $0x138] sm:$0xff] %v489
                  %v491 = vld [vmem:[%s409 + $0x280] sm:$0xff]
                  %492 = vst [vmem:[%s410 + $0x140] sm:$0xff] %v491
                  %v493 = vld [vmem:[%s409 + $0x288] sm:$0xff]
                  %494 = vst [vmem:[%s410 + $0x148] sm:$0xff] %v493
                  %v495 = vld [vmem:[%s409 + $0x2a0] sm:$0xff]
                  %496 = vst [vmem:[%s410 + $0x150] sm:$0xff] %v495
                  %v497 = vld [vmem:[%s409 + $0x2a8] sm:$0xff]
                  %498 = vst [vmem:[%s410 + $0x158] sm:$0xff] %v497
                  %v499 = vld [vmem:[%s409 + $0x2c0] sm:$0xff]
                  %500 = vst [vmem:[%s410 + $0x160] sm:$0xff] %v499
                  %v501 = vld [vmem:[%s409 + $0x2c8] sm:$0xff]
                  %502 = vst [vmem:[%s410 + $0x168] sm:$0xff] %v501
                  %v503 = vld [vmem:[%s409 + $0x2e0] sm:$0xff]
                  %504 = vst [vmem:[%s410 + $0x170] sm:$0xff] %v503
                  %v505 = vld [vmem:[%s409 + $0x2e8] sm:$0xff]
                  %506 = vst [vmem:[%s410 + $0x178] sm:$0xff] %v505
                $region80: #{net_forward.1} parent=74 // loop_footer
                  %s408 = sadd.s32 1, %s404
                $region81: #{net_forward.1} parent=74 // loop_footer_branch
                  %403 = sbr.rel target = $region77
                $region82: #{net_forward.1} parent=74 // loop_exit
                  _
              $region75: #{net_forward.1} parent=59 // pred_fallthru
                _
              // Predicated region
              $region83: #{net_forward.1} parent=59 // pred_check
                _
              $region84: #{net_forward.1} parent=59 // pred_check_branch
                %508 = sbr.rel target = $region86
              $region85: #{net_forward.1} parent=59 // pred_region
                _
              $region86: #{net_forward.1} parent=59 // pred_fallthru
                _
            $region60: #{net_forward.1} parent=55 // pred_fallthru
              _
            // Predicated region
            $region61: #{net_forward.1} parent=55 // pred_check
              _
            $region62: #{net_forward.1} parent=55 // pred_check_branch
              %294 = sbr.rel target = $region64
            $region63: #{net_forward.1} parent=55 // pred_region
              %s296 = ssub.s32 256, 1
              loop: start=0, step=1, limit=1
              $region65: #{net_forward.1} parent=63 // loop_pre_header
                _
              $region66: #{net_forward.1} parent=63 // loop_header
                %s298 = sphi 0, %s302
                %p299 = scmp.ge.s32.totalorder %s298, 1
                %s303 = sphi %s288, %s288
                %s304 = sphi %s284, %s284
              $region67: #{net_forward.1} parent=63 // loop_header_branch
                %301 = sbr.rel (%p299) target = $region71
              $region68: #{net_forward.1} parent=63 // loop_body
                %v305 = vld [vmem:[%s303] sm:%s296]
                %306 = vst [vmem:[%s304] sm:%s296] %v305
                %v307 = vld [vmem:[%s303 + $0x8] sm:%s296]
                %308 = vst [vmem:[%s304 + $0x8] sm:%s296] %v307
                %v309 = vld [vmem:[%s303 + $0x20] sm:%s296]
                %310 = vst [vmem:[%s304 + $0x10] sm:%s296] %v309
                %v311 = vld [vmem:[%s303 + $0x28] sm:%s296]
                %312 = vst [vmem:[%s304 + $0x18] sm:%s296] %v311
                %v313 = vld [vmem:[%s303 + $0x40] sm:%s296]
                %314 = vst [vmem:[%s304 + $0x20] sm:%s296] %v313
                %v315 = vld [vmem:[%s303 + $0x48] sm:%s296]
                %316 = vst [vmem:[%s304 + $0x28] sm:%s296] %v315
                %v317 = vld [vmem:[%s303 + $0x60] sm:%s296]
                %318 = vst [vmem:[%s304 + $0x30] sm:%s296] %v317
                %v319 = vld [vmem:[%s303 + $0x68] sm:%s296]
                %320 = vst [vmem:[%s304 + $0x38] sm:%s296] %v319
                %v321 = vld [vmem:[%s303 + $0x80] sm:%s296]
                %322 = vst [vmem:[%s304 + $0x40] sm:%s296] %v321
                %v323 = vld [vmem:[%s303 + $0x88] sm:%s296]
                %324 = vst [vmem:[%s304 + $0x48] sm:%s296] %v323
                %v325 = vld [vmem:[%s303 + $0xa0] sm:%s296]
                %326 = vst [vmem:[%s304 + $0x50] sm:%s296] %v325
                %v327 = vld [vmem:[%s303 + $0xa8] sm:%s296]
                %328 = vst [vmem:[%s304 + $0x58] sm:%s296] %v327
                %v329 = vld [vmem:[%s303 + $0xc0] sm:%s296]
                %330 = vst [vmem:[%s304 + $0x60] sm:%s296] %v329
                %v331 = vld [vmem:[%s303 + $0xc8] sm:%s296]
                %332 = vst [vmem:[%s304 + $0x68] sm:%s296] %v331
                %v333 = vld [vmem:[%s303 + $0xe0] sm:%s296]
                %334 = vst [vmem:[%s304 + $0x70] sm:%s296] %v333
                %v335 = vld [vmem:[%s303 + $0xe8] sm:%s296]
                %336 = vst [vmem:[%s304 + $0x78] sm:%s296] %v335
                %v337 = vld [vmem:[%s303 + $0x100] sm:%s296]
                %338 = vst [vmem:[%s304 + $0x80] sm:%s296] %v337
                %v339 = vld [vmem:[%s303 + $0x108] sm:%s296]
                %340 = vst [vmem:[%s304 + $0x88] sm:%s296] %v339
                %v341 = vld [vmem:[%s303 + $0x120] sm:%s296]
                %342 = vst [vmem:[%s304 + $0x90] sm:%s296] %v341
                %v343 = vld [vmem:[%s303 + $0x128] sm:%s296]
                %344 = vst [vmem:[%s304 + $0x98] sm:%s296] %v343
                %v345 = vld [vmem:[%s303 + $0x140] sm:%s296]
                %346 = vst [vmem:[%s304 + $0xa0] sm:%s296] %v345
                %v347 = vld [vmem:[%s303 + $0x148] sm:%s296]
                %348 = vst [vmem:[%s304 + $0xa8] sm:%s296] %v347
                %v349 = vld [vmem:[%s303 + $0x160] sm:%s296]
                %350 = vst [vmem:[%s304 + $0xb0] sm:%s296] %v349
                %v351 = vld [vmem:[%s303 + $0x168] sm:%s296]
                %352 = vst [vmem:[%s304 + $0xb8] sm:%s296] %v351
                %v353 = vld [vmem:[%s303 + $0x180] sm:%s296]
                %354 = vst [vmem:[%s304 + $0xc0] sm:%s296] %v353
                %v355 = vld [vmem:[%s303 + $0x188] sm:%s296]
                %356 = vst [vmem:[%s304 + $0xc8] sm:%s296] %v355
                %v357 = vld [vmem:[%s303 + $0x1a0] sm:%s296]
                %358 = vst [vmem:[%s304 + $0xd0] sm:%s296] %v357
                %v359 = vld [vmem:[%s303 + $0x1a8] sm:%s296]
                %360 = vst [vmem:[%s304 + $0xd8] sm:%s296] %v359
                %v361 = vld [vmem:[%s303 + $0x1c0] sm:%s296]
                %362 = vst [vmem:[%s304 + $0xe0] sm:%s296] %v361
                %v363 = vld [vmem:[%s303 + $0x1c8] sm:%s296]
                %364 = vst [vmem:[%s304 + $0xe8] sm:%s296] %v363
                %v365 = vld [vmem:[%s303 + $0x1e0] sm:%s296]
                %366 = vst [vmem:[%s304 + $0xf0] sm:%s296] %v365
                %v367 = vld [vmem:[%s303 + $0x1e8] sm:%s296]
                %368 = vst [vmem:[%s304 + $0xf8] sm:%s296] %v367
                %v369 = vld [vmem:[%s303 + $0x200] sm:%s296]
                %370 = vst [vmem:[%s304 + $0x100] sm:%s296] %v369
                %v371 = vld [vmem:[%s303 + $0x208] sm:%s296]
                %372 = vst [vmem:[%s304 + $0x108] sm:%s296] %v371
                %v373 = vld [vmem:[%s303 + $0x220] sm:%s296]
                %374 = vst [vmem:[%s304 + $0x110] sm:%s296] %v373
                %v375 = vld [vmem:[%s303 + $0x228] sm:%s296]
                %376 = vst [vmem:[%s304 + $0x118] sm:%s296] %v375
                %v377 = vld [vmem:[%s303 + $0x240] sm:%s296]
                %378 = vst [vmem:[%s304 + $0x120] sm:%s296] %v377
                %v379 = vld [vmem:[%s303 + $0x248] sm:%s296]
                %380 = vst [vmem:[%s304 + $0x128] sm:%s296] %v379
                %v381 = vld [vmem:[%s303 + $0x260] sm:%s296]
                %382 = vst [vmem:[%s304 + $0x130] sm:%s296] %v381
                %v383 = vld [vmem:[%s303 + $0x268] sm:%s296]
                %384 = vst [vmem:[%s304 + $0x138] sm:%s296] %v383
                %v385 = vld [vmem:[%s303 + $0x280] sm:%s296]
                %386 = vst [vmem:[%s304 + $0x140] sm:%s296] %v385
                %v387 = vld [vmem:[%s303 + $0x288] sm:%s296]
                %388 = vst [vmem:[%s304 + $0x148] sm:%s296] %v387
                %v389 = vld [vmem:[%s303 + $0x2a0] sm:%s296]
                %390 = vst [vmem:[%s304 + $0x150] sm:%s296] %v389
                %v391 = vld [vmem:[%s303 + $0x2a8] sm:%s296]
                %392 = vst [vmem:[%s304 + $0x158] sm:%s296] %v391
                %v393 = vld [vmem:[%s303 + $0x2c0] sm:%s296]
                %394 = vst [vmem:[%s304 + $0x160] sm:%s296] %v393
                %v395 = vld [vmem:[%s303 + $0x2c8] sm:%s296]
                %396 = vst [vmem:[%s304 + $0x168] sm:%s296] %v395
                %v397 = vld [vmem:[%s303 + $0x2e0] sm:%s296]
                %398 = vst [vmem:[%s304 + $0x170] sm:%s296] %v397
                %v399 = vld [vmem:[%s303 + $0x2e8] sm:%s296]
                %400 = vst [vmem:[%s304 + $0x178] sm:%s296] %v399
              $region69: #{net_forward.1} parent=63 // loop_footer
                %s302 = sadd.s32 1, %s298
              $region70: #{net_forward.1} parent=63 // loop_footer_branch
                %297 = sbr.rel target = $region66
              $region71: #{net_forward.1} parent=63 // loop_exit
                _
            $region64: #{net_forward.1} parent=55 // pred_fallthru
              _
          $region56: #{net_forward.1} parent=51 // pred_fallthru
            _
          %509 = vnop
        $region52: #{net_forward.1} parent=47 // pred_fallthru
          _
      $region48: #{net_forward.1} parent=5 // pred_fallthru
        _
      %p510 = scmp.le.s32.totalorder 1, %s15
      %p511 = scmp.lt.s32.totalorder %s15, 3
      %p512 = pnand %p510, %p511
      %p513 = pneg %p512
      // Predicated region
      $region87: #{net_forward.1} parent=5 // pred_check
        _
      $region88: #{net_forward.1} parent=5 // pred_check_branch
        %515 = sbr.rel (%p512) target = $region90
      $region89: #{net_forward.1} parent=5 // pred_region
        %s516 = ssub.s32 %s15, 1
        %s517 = sand.u32 %s28, 1
        %s518 = sand.u32 %s28, 1
        %s519 = smul.addr %s518, 384
        %s520 = scalar_lea.vmem [#allocation2], %s519
        // Predicated region
        $region91: #{net_forward.1} parent=89 // pred_check
          %p521 = pneg %p41
        $region92: #{net_forward.1} parent=89 // pred_check_branch
          %523 = sbr.rel (%p521) target = $region94
        $region93: #{net_forward.1} parent=89 // pred_region
          _
        $region94: #{net_forward.1} parent=89 // pred_fallthru
          _
        %s524 = sand.u32 %s28, 1
        %s525 = sand.u32 %s28, 1
        %s526 = smul.addr %s525, 384
        %s527 = scalar_lea.vmem [#allocation2], %s526
        %p528 = pneg %p41
        %p529 = pneg %p38
        %p530 = pneg %p62
        %p531 = pneg %p59
        %p532 = pneg %p83
        %p533 = pneg %p80
        %p534 = pneg %p104
        %p535 = pneg %p101
        %p536 = pneg %p125
        %p537 = pneg %p122
        %p538 = pneg %p146
        %p539 = pneg %p143
        %p540 = pneg %p167
        %p541 = pneg %p164
        %p542 = pneg %p188
        %p543 = pneg %p185
        %p544 = pneg %p209
        %p545 = pneg %p206
        %p546 = pneg %p235
        %p547 = pneg %p232
        %s548 = smul.u32 2, %s20
        %p549 = scmp.lt.s32.totalorder %s548, 3
        %s550 = scalar_select %p549, %s548, 3
        %s551 = smul.addr %s550, 8
        %s552 = scalar_lea.vmem %s9, %s551
        %s553 = smul.u32 2, %s20
        %s554 = smul.u32 2, %s20
        %p555 = scmp.lt.s32.totalorder %s554, 3
        %s556 = scalar_select %p555, %s554, 3
        %s557 = smul.addr %s556, 8
        %s558 = scalar_lea.vmem %s9, %s557
        %s559 = smul.u32 2, %s20
        %v561 = vld [vmem:[%s1] sm:$0xff]
        %v562 = vld [vmem:[%s1 + $0x8] sm:$0xff]
        %v563 = vld [vmem:[%s1 + $0x10] sm:$0xff]
        %v564 = vld [vmem:[%s1 + $0x18] sm:$0xff]
        %v565 = vld [vmem:[%s1 + $0x20] sm:$0xff]
        %v566 = vld [vmem:[%s1 + $0x28] sm:$0xff]
        %v567 = vld [vmem:[%s1 + $0x30] sm:$0xff]
        %v568 = vld [vmem:[%s1 + $0x38] sm:$0xff]
        %v569 = vld [vmem:[%s1 + $0x40] sm:$0xff]
        %v570 = vld [vmem:[%s1 + $0x48] sm:$0xff]
        %v571 = vld [vmem:[%s1 + $0x50] sm:$0xff]
        %v572 = vld [vmem:[%s1 + $0x58] sm:$0xff]
        %v573 = vld [vmem:[%s1 + $0x60] sm:$0xff]
        %v574 = vld [vmem:[%s1 + $0x68] sm:$0xff]
        %v575 = vld [vmem:[%s1 + $0x70] sm:$0xff]
        %v576 = vld [vmem:[%s1 + $0x78] sm:$0xff]
        %v577 = vld [vmem:[%s1 + $0x80] sm:$0xff]
        %v578 = vld [vmem:[%s1 + $0x88] sm:$0x33]
        %v579 = vld [vmem:[%s3] sm:$0xff]
        %v580 = vld [vmem:[%s3 + $0x8] sm:$0xff]
        %v581 = vld [vmem:[%s3 + $0x10] sm:$0xff]
        %v582 = vld [vmem:[%s3 + $0x18] sm:$0xff]
        %v583 = vld [vmem:[%s3 + $0x20] sm:$0xff]
        %v584 = vld [vmem:[%s3 + $0x28] sm:$0xff]
        %v585 = vld [vmem:[%s3 + $0x30] sm:$0xff]
        %v586 = vld [vmem:[%s3 + $0x38] sm:$0xff]
        %v587 = vld [vmem:[%s3 + $0x40] sm:$0xff]
        %v588 = vld [vmem:[%s3 + $0x48] sm:$0xff]
        %v589 = vld [vmem:[%s3 + $0x50] sm:$0xff]
        %v590 = vld [vmem:[%s3 + $0x58] sm:$0xff]
        %v591 = vld [vmem:[%s3 + $0x60] sm:$0xff]
        %v592 = vld [vmem:[%s3 + $0x68] sm:$0xff]
        %v593 = vld [vmem:[%s3 + $0x70] sm:$0xff]
        %v594 = vld [vmem:[%s3 + $0x78] sm:$0xff]
        %v595 = vld [vmem:[%s3 + $0x80] sm:$0xff]
        %v596 = vld [vmem:[%s3 + $0x88] sm:$0xff]
        %v597 = vld [vmem:[%s3 + $0x90] sm:$0xff]
        %v598 = vld [vmem:[%s3 + $0x98] sm:$0xff]
        %v599 = vld [vmem:[%s3 + $0xa0] sm:$0xff]
        %v600 = vld [vmem:[%s3 + $0xa8] sm:$0xff]
        %v601 = vld [vmem:[%s3 + $0xb0] sm:$0xff]
        %v602 = vld [vmem:[%s3 + $0xb8] sm:$0xff]
        %v603 = vld [vmem:[%s3 + $0xc0] sm:$0xff]
        %v604 = vld [vmem:[%s3 + $0xc8] sm:$0xff]
        %v605 = vld [vmem:[%s3 + $0xd0] sm:$0xff]
        %v606 = vld [vmem:[%s3 + $0xd8] sm:$0xff]
        %v607 = vld [vmem:[%s3 + $0xe0] sm:$0xff]
        %v608 = vld [vmem:[%s3 + $0xe8] sm:$0xff]
        %v609 = vld [vmem:[%s3 + $0xf0] sm:$0xff]
        %v610 = vld [vmem:[%s3 + $0xf8] sm:$0xff]
        %v611 = vld [vmem:[%s3 + $0x100] sm:$0xff]
        %v612 = vld [vmem:[%s3 + $0x108] sm:$0xff]
        %v613 = vld [vmem:[%s3 + $0x110] sm:$0xff]
        %v614 = vld [vmem:[%s3 + $0x118] sm:$0xff]
        %v615 = vld [vmem:[%s3 + $0x120] sm:$0xff]
        %v616 = vld [vmem:[%s3 + $0x128] sm:$0xff]
        %v617 = vld [vmem:[%s3 + $0x130] sm:$0xff]
        %v618 = vld [vmem:[%s3 + $0x138] sm:$0xff]
        %v619 = vld [vmem:[%s3 + $0x140] sm:$0xff]
        %v620 = vld [vmem:[%s3 + $0x148] sm:$0xff]
        %v621 = vld [vmem:[%s3 + $0x150] sm:$0xff]
        %v622 = vld [vmem:[%s3 + $0x158] sm:$0xff]
        %v623 = vld [vmem:[%s3 + $0x160] sm:$0xff]
        %v624 = vld [vmem:[%s3 + $0x168] sm:$0xff]
        %v625 = vld [vmem:[%s3 + $0x170] sm:$0xff]
        %v626 = vld [vmem:[%s3 + $0x178] sm:$0xff]
        %v627 = vld [vmem:[%s3 + $0x180] sm:$0xff]
        %v628 = vld [vmem:[%s3 + $0x188] sm:$0xff]
        %v629 = vld [vmem:[%s3 + $0x190] sm:$0xff]
        %v630 = vld [vmem:[%s3 + $0x198] sm:$0xff]
        %v631 = vld [vmem:[%s3 + $0x1a0] sm:$0xff]
        %v632 = vld [vmem:[%s3 + $0x1a8] sm:$0xff]
        %v633 = vld [vmem:[%s3 + $0x1b0] sm:$0xff]
        %v634 = vld [vmem:[%s3 + $0x1b8] sm:$0xff]
        %v635 = vld [vmem:[%s3 + $0x1c0] sm:$0xff]
        %v636 = vld [vmem:[%s3 + $0x1c8] sm:$0xff]
        %v637 = vld [vmem:[%s3 + $0x1d0] sm:$0xff]
        %v638 = vld [vmem:[%s3 + $0x1d8] sm:$0xff]
        %v639 = vld [vmem:[%s3 + $0x1e0] sm:$0xff]
        %v640 = vld [vmem:[%s3 + $0x1e8] sm:$0xff]
        %v641 = vld [vmem:[%s3 + $0x1f0] sm:$0xff]
        %v642 = vld [vmem:[%s3 + $0x1f8] sm:$0xff]
        %v643 = vld [vmem:[%s3 + $0x200] sm:$0xff]
        %v644 = vld [vmem:[%s3 + $0x208] sm:$0xff]
        %v645 = vld [vmem:[%s3 + $0x210] sm:$0xff]
        %v646 = vld [vmem:[%s3 + $0x218] sm:$0xff]
        %v647 = vld [vmem:[%s3 + $0x220] sm:$0xff]
        %v648 = vld [vmem:[%s3 + $0x228] sm:$0xff]
        %v649 = vld [vmem:[%s3 + $0x230] sm:$0xff]
        %v650 = vld [vmem:[%s3 + $0x238] sm:$0xff]
        %v651 = vld [vmem:[%s3 + $0x240] sm:$0xff]
        %v652 = vld [vmem:[%s3 + $0x248] sm:$0xff]
        %v653 = vld [vmem:[%s3 + $0x250] sm:$0xff]
        %v654 = vld [vmem:[%s5] sm:$0xf]
        %v655 = vld [vmem:[%s5 + $0x4] sm:$0xf]
        %v656 = vld [vmem:[%s5 + $0x8] sm:$0xf]
        %v657 = vld [vmem:[%s5 + $0xc] sm:$0xf]
        %v658 = vld [vmem:[%s5 + $0x10] sm:$0xf]
        %v659 = vld [vmem:[%s5 + $0x14] sm:$0xf]
        %v660 = vld [vmem:[%s5 + $0x18] sm:$0xf]
        %v661 = vld [vmem:[%s5 + $0x1c] sm:$0xf]
        %v662 = vld [vmem:[%s5 + $0x20] sm:$0xf]
        %v663 = vld [vmem:[%s5 + $0x24] sm:$0xf]
        %v664 = vld [vmem:[%s5 + $0x28] sm:$0xf]
        %v665 = vld [vmem:[%s5 + $0x2c] sm:$0xf]
        %v666 = vld [vmem:[%s5 + $0x30] sm:$0xf]
        %v667 = vld [vmem:[%s5 + $0x34] sm:$0xf]
        %v668 = vld [vmem:[%s5 + $0x38] sm:$0xf]
        %v669 = vld [vmem:[%s5 + $0x3c] sm:$0xf]
        %v670 = vld [vmem:[%s5 + $0x40] sm:$0xf]
        %v671 = vld [vmem:[%s5 + $0x44] sm:$0xf]
        %v672 = vld [vmem:[%s5 + $0x48] sm:$0xf]
        %v673 = vld [vmem:[%s5 + $0x4c] sm:$0xf]
        %v674 = vld [vmem:[%s5 + $0x50] sm:$0xf]
        %v675 = vld [vmem:[%s5 + $0x54] sm:$0xf]
        %v676 = vld [vmem:[%s5 + $0x58] sm:$0xf]
        %v677 = vld [vmem:[%s5 + $0x5c] sm:$0xf]
        %v678 = vld [vmem:[%s5 + $0x60] sm:$0xf]
        %v679 = vld [vmem:[%s5 + $0x64] sm:$0xf]
        %v680 = vld [vmem:[%s5 + $0x68] sm:$0xf]
        %v681 = vld [vmem:[%s5 + $0x6c] sm:$0xf]
        %v682 = vld [vmem:[%s5 + $0x70] sm:$0xf]
        %v683 = vld [vmem:[%s5 + $0x74] sm:$0xf]
        %v684 = vld [vmem:[%s5 + $0x78] sm:$0xf]
        %v685 = vld [vmem:[%s5 + $0x7c] sm:$0xf]
        %v686 = vld [vmem:[%s5 + $0x80] sm:$0xf]
        %v687 = vld [vmem:[%s5 + $0x84] sm:$0xf]
        %v688 = vld [vmem:[%s5 + $0x88] sm:$0xf]
        %v689 = vld [vmem:[%s5 + $0x8c] sm:$0xf]
        %v690 = vld [vmem:[%s5 + $0x90] sm:$0xf]
        %v691 = vld [vmem:[%s5 + $0x94] sm:$0xf]
        %v692 = vld [vmem:[%s5 + $0x98] sm:$0xf]
        %v693 = vld [vmem:[%s5 + $0x9c] sm:$0xf]
        %v694 = vld [vmem:[%s520] sm:$0xff]
        %v695 = vld [vmem:[%s520 + $0x8] sm:$0xff]
        %v696 = vld [vmem:[%s520 + $0x10] sm:$0xff]
        %v697 = vld [vmem:[%s520 + $0x18] sm:$0xff]
        %v698 = vld [vmem:[%s520 + $0x20] sm:$0xff]
        %v699 = vld [vmem:[%s520 + $0x28] sm:$0xff]
        %v700 = vld [vmem:[%s520 + $0x30] sm:$0xff]
        %v701 = vld [vmem:[%s520 + $0x38] sm:$0xff]
        %v702 = vld [vmem:[%s520 + $0x40] sm:$0xff]
        %v703 = vld [vmem:[%s520 + $0x48] sm:$0xff]
        %v704 = vld [vmem:[%s520 + $0x50] sm:$0xff]
        %v705 = vld [vmem:[%s520 + $0x58] sm:$0xff]
        %v718 = vunpack.c.l.b16 %v694
        %v719 = vunpack.c.h.b16 %v694
        %v720 = vunpack.c.l.b16 %v695
        %v721 = vunpack.c.h.b16 %v695
        %v722 = vunpack.c.l.b16 %v696
        %v723 = vunpack.c.h.b16 %v696
        %v724 = vunpack.c.l.b16 %v697
        %v725 = vunpack.c.h.b16 %v697
        %v726 = vunpack.c.l.b16 %v698
        %v727 = vunpack.c.h.b16 %v698
        %v728 = vunpack.c.l.b16 %v699
        %v729 = vunpack.c.h.b16 %v699
        %v730 = vunpack.c.l.b16 %v700
        %v731 = vunpack.c.h.b16 %v700
        %v732 = vunpack.c.l.b16 %v701
        %v733 = vunpack.c.h.b16 %v701
        %v734 = vunpack.c.l.b16 %v702
        %v735 = vunpack.c.h.b16 %v702
        %v736 = vunpack.c.l.b16 %v703
        %v737 = vunpack.c.h.b16 %v703
        %v738 = vunpack.c.l.b16 %v704
        %v739 = vunpack.c.h.b16 %v704
        %v740 = vunpack.c.l.b16 %v705
        %v741 = vunpack.c.h.b16 %v705
        %v742 = vpack.c.b16 %v720, %v718
        %v743 = vpack.c.b16 %v721, %v719
        %v744 = vpack.c.b16 %v724, %v722
        %v745 = vpack.c.b16 %v725, %v723
        %v746 = vpack.c.b16 %v728, %v726
        %v747 = vpack.c.b16 %v729, %v727
        %v748 = vpack.c.b16 %v732, %v730
        %v749 = vpack.c.b16 %v733, %v731
        %v750 = vpack.c.b16 %v736, %v734
        %v751 = vpack.c.b16 %v737, %v735
        %v752 = vpack.c.b16 %v740, %v738
        %v753 = vpack.c.b16 %v741, %v739
        %v778 = vunpack.c.l.b16 %v561
        %v779 = vunpack.c.h.b16 %v561
        %v780 = vunpack.c.l.b16 %v562
        %v781 = vunpack.c.h.b16 %v562
        %v782 = vunpack.c.l.b16 %v563
        %v783 = vunpack.c.h.b16 %v563
        %v784 = vunpack.c.l.b16 %v564
        %v785 = vunpack.c.h.b16 %v564
        %v786 = vunpack.c.l.b16 %v565
        %v787 = vunpack.c.h.b16 %v565
        %v788 = vunpack.c.l.b16 %v566
        %v789 = vunpack.c.h.b16 %v566
        %v790 = vunpack.c.l.b16 %v567
        %v791 = vunpack.c.h.b16 %v567
        %v792 = vunpack.c.l.b16 %v568
        %v793 = vunpack.c.h.b16 %v568
        %v794 = vunpack.c.l.b16 %v569
        %v795 = vunpack.c.h.b16 %v569
        %v796 = vunpack.c.l.b16 %v570
        %v797 = vunpack.c.h.b16 %v570
        %v798 = vunpack.c.l.b16 %v571
        %v799 = vunpack.c.h.b16 %v571
        %v800 = vunpack.c.l.b16 %v572
        %v801 = vunpack.c.h.b16 %v572
        %v802 = vunpack.c.l.b16 %v573
        %v803 = vunpack.c.h.b16 %v573
        %v804 = vunpack.c.l.b16 %v574
        %v805 = vunpack.c.h.b16 %v574
        %v806 = vunpack.c.l.b16 %v575
        %v807 = vunpack.c.h.b16 %v575
        %v808 = vunpack.c.l.b16 %v576
        %v809 = vunpack.c.h.b16 %v576
        %v810 = vunpack.c.l.b16 %v577
        %v811 = vunpack.c.h.b16 %v577
        %v812 = vunpack.c.l.b16 %v578
        %v813 = vunpack.c.h.b16 %v578
        %v814 = vpack.c.b16 %v780, %v778
        %v815 = vpack.c.b16 %v781, %v779
        %v816 = vpack.c.b16 %v784, %v782
        %v817 = vpack.c.b16 %v785, %v783
        %v818 = vpack.c.b16 %v788, %v786
        %v819 = vpack.c.b16 %v789, %v787
        %v820 = vpack.c.b16 %v792, %v790
        %v821 = vpack.c.b16 %v793, %v791
        %v822 = vpack.c.b16 %v796, %v794
        %v823 = vpack.c.b16 %v797, %v795
        %v824 = vpack.c.b16 %v800, %v798
        %v825 = vpack.c.b16 %v801, %v799
        %v826 = vpack.c.b16 %v804, %v802
        %v827 = vpack.c.b16 %v805, %v803
        %v828 = vpack.c.b16 %v808, %v806
        %v829 = vpack.c.b16 %v809, %v807
        %v830 = vpack.c.b16 %v812, %v810
        %v831 = vpack.c.b16 %v813, %v811
        %vm848 = vcmask 97280
        %v850 = vsel %vm848, %v743, 0
        %v853 = vsel %vm848, %v745, 0
        %v856 = vsel %vm848, %v747, 0
        %v859 = vsel %vm848, %v749, 0
        %v862 = vsel %vm848, %v751, 0
        %v865 = vsel %vm848, %v753, 0
        %vm867 = vcmask 1045504
        %v869 = vsel %vm867, %v830, 0
        %v872 = vsel %vm867, %v831, 0
        %874 = vmatprep.subr.bf16.mxu0 %v829
        %875 = vmatpush1.bf16.msra.mxu0 %v828
        %876 = vmatprep.subr.bf16.mxu0 %v827
        %877 = vmatpush1.bf16.msra.mxu0 %v826
        %878 = vmatprep.subr.bf16.mxu0 %v825
        %879 = vmatpush1.bf16.msra.mxu0 %v824
        %880 = vmatprep.subr.bf16.mxu0 %v823
        %881 = vmatpush1.bf16.msra.mxu0 %v822
        %882 = vmatprep.subr.bf16.mxu0 %v821
        %883 = vmatpush1.bf16.msra.mxu0 %v820
        %884 = vmatprep.subr.bf16.mxu0 %v819
        %885 = vmatpush1.bf16.msra.mxu0 %v818
        %886 = vmatprep.subr.bf16.mxu0 %v817
        %887 = vmatpush1.bf16.msra.mxu0 %v816
        %888 = vmatprep.subr.bf16.mxu0 %v815
        %889 = vmatpush1.bf16.msra.mxu0 %v814
        %890 = vmatprep.subr.bf16.mxu0 0
        %891 = vmatpush2.bf16.msra.mxu0 0
        %892 = vmatprep.subr.bf16.mxu0 0
        %893 = vmatpush2.bf16.msra.mxu0 0
        %894 = vmatprep.subr.bf16.mxu0 0
        %895 = vmatpush2.bf16.msra.mxu0 0
        %896 = vmatprep.subr.bf16.mxu0 0
        %897 = vmatpush2.bf16.msra.mxu0 0
        %898 = vmatprep.subr.bf16.mxu0 0
        %899 = vmatpush2.bf16.msra.mxu0 0
        %900 = vmatprep.subr.bf16.mxu0 0
        %901 = vmatpush2.bf16.msra.mxu0 0
        %902 = vmatprep.subr.bf16.mxu0 0
        %903 = vmatpush2.bf16.msra.mxu0 0
        %904 = vmatprep.subr.bf16.mxu0 %v872
        %905 = vmatpush2.bf16.msra.mxu0 %v869
        %906 = vmatprep.mubr.bf16.mxu0 %v850
        %907 = vmatmul.mubr.bf16.gmra.mxu0 %v742
        %v908 = vpop.f32.mrf.mxu0
        %v909 = vadd.f32 0.0, %v908
        %v910 = vpop.f32.mrf.mxu0
        %v911 = vadd.f32 0.0, %v910
        %v912 = vpop.f32.mrf.mxu0
        %v913 = vadd.f32 0.0, %v912
        %v914 = vpop.f32.mrf.mxu0
        %v915 = vadd.f32 0.0, %v914
        %916 = vmatprep.mubr.bf16.mxu0 %v853
        %917 = vmatmul.mubr.bf16.gmra.mxu0 %v744
        %v918 = vpop.f32.mrf.mxu0
        %v919 = vadd.f32 0.0, %v918
        %v920 = vpop.f32.mrf.mxu0
        %v921 = vadd.f32 0.0, %v920
        %v922 = vpop.f32.mrf.mxu0
        %v923 = vadd.f32 0.0, %v922
        %v924 = vpop.f32.mrf.mxu0
        %v925 = vadd.f32 0.0, %v924
        %926 = vmatprep.mubr.bf16.mxu0 %v856
        %927 = vmatmul.mubr.bf16.gmra.mxu0 %v746
        %v928 = vpop.f32.mrf.mxu0
        %v929 = vadd.f32 0.0, %v928
        %v930 = vpop.f32.mrf.mxu0
        %v931 = vadd.f32 0.0, %v930
        %v932 = vpop.f32.mrf.mxu0
        %v933 = vadd.f32 0.0, %v932
        %v934 = vpop.f32.mrf.mxu0
        %v935 = vadd.f32 0.0, %v934
        %936 = vmatprep.mubr.bf16.mxu0 %v859
        %937 = vmatmul.mubr.bf16.gmra.mxu0 %v748
        %v938 = vpop.f32.mrf.mxu0
        %v939 = vadd.f32 0.0, %v938
        %v940 = vpop.f32.mrf.mxu0
        %v941 = vadd.f32 0.0, %v940
        %v942 = vpop.f32.mrf.mxu0
        %v943 = vadd.f32 0.0, %v942
        %v944 = vpop.f32.mrf.mxu0
        %v945 = vadd.f32 0.0, %v944
        %946 = vmatprep.mubr.bf16.mxu0 %v862
        %947 = vmatmul.mubr.bf16.gmra.mxu0 %v750
        %v948 = vpop.f32.mrf.mxu0
        %v949 = vadd.f32 0.0, %v948
        %v950 = vpop.f32.mrf.mxu0
        %v951 = vadd.f32 0.0, %v950
        %v952 = vpop.f32.mrf.mxu0
        %v953 = vadd.f32 0.0, %v952
        %v954 = vpop.f32.mrf.mxu0
        %v955 = vadd.f32 0.0, %v954
        %956 = vmatprep.mubr.bf16.mxu0 %v865
        %957 = vmatmul.mubr.bf16.gmra.mxu0 %v752
        %v958 = vpop.f32.mrf.mxu0
        %v959 = vadd.f32 0.0, %v958
        %v960 = vpop.f32.mrf.mxu0
        %v961 = vadd.f32 0.0, %v960
        %v962 = vpop.f32.mrf.mxu0
        %v963 = vadd.f32 0.0, %v962
        %v964 = vpop.f32.mrf.mxu0
        %v965 = vadd.f32 0.0, %v964
        %966 = vdwg.mxu0
        %s967 = scalar_lea.vmem %s520, 96 [#allocation2]
        %v968 = vld [vmem:[%s967] sm:$0xff]
        %v969 = vld [vmem:[%s967 + $0x8] sm:$0xff]
        %v970 = vld [vmem:[%s967 + $0x10] sm:$0xff]
        %v971 = vld [vmem:[%s967 + $0x18] sm:$0xff]
        %v972 = vld [vmem:[%s967 + $0x20] sm:$0xff]
        %v973 = vld [vmem:[%s967 + $0x28] sm:$0xff]
        %v974 = vld [vmem:[%s967 + $0x30] sm:$0xff]
        %v975 = vld [vmem:[%s967 + $0x38] sm:$0xff]
        %v976 = vld [vmem:[%s967 + $0x40] sm:$0xff]
        %v977 = vld [vmem:[%s967 + $0x48] sm:$0xff]
        %v978 = vld [vmem:[%s967 + $0x50] sm:$0xff]
        %v979 = vld [vmem:[%s967 + $0x58] sm:$0xff]
        %v992 = vunpack.c.l.b16 %v968
        %v993 = vunpack.c.h.b16 %v968
        %v994 = vunpack.c.l.b16 %v969
        %v995 = vunpack.c.h.b16 %v969
        %v996 = vunpack.c.l.b16 %v970
        %v997 = vunpack.c.h.b16 %v970
        %v998 = vunpack.c.l.b16 %v971
        %v999 = vunpack.c.h.b16 %v971
        %v1000 = vunpack.c.l.b16 %v972
        %v1001 = vunpack.c.h.b16 %v972
        %v1002 = vunpack.c.l.b16 %v973
        %v1003 = vunpack.c.h.b16 %v973
        %v1004 = vunpack.c.l.b16 %v974
        %v1005 = vunpack.c.h.b16 %v974
        %v1006 = vunpack.c.l.b16 %v975
        %v1007 = vunpack.c.h.b16 %v975
        %v1008 = vunpack.c.l.b16 %v976
        %v1009 = vunpack.c.h.b16 %v976
        %v1010 = vunpack.c.l.b16 %v977
        %v1011 = vunpack.c.h.b16 %v977
        %v1012 = vunpack.c.l.b16 %v978
        %v1013 = vunpack.c.h.b16 %v978
        %v1014 = vunpack.c.l.b16 %v979
        %v1015 = vunpack.c.h.b16 %v979
        %v1016 = vpack.c.b16 %v994, %v992
        %v1017 = vpack.c.b16 %v995, %v993
        %v1018 = vpack.c.b16 %v998, %v996
        %v1019 = vpack.c.b16 %v999, %v997
        %v1020 = vpack.c.b16 %v1002, %v1000
        %v1021 = vpack.c.b16 %v1003, %v1001
        %v1022 = vpack.c.b16 %v1006, %v1004
        %v1023 = vpack.c.b16 %v1007, %v1005
        %v1024 = vpack.c.b16 %v1010, %v1008
        %v1025 = vpack.c.b16 %v1011, %v1009
        %v1026 = vpack.c.b16 %v1014, %v1012
        %v1027 = vpack.c.b16 %v1015, %v1013
        %v1035 = vsel %vm848, %v1017, 0
        %v1038 = vsel %vm848, %v1019, 0
        %v1041 = vsel %vm848, %v1021, 0
        %v1044 = vsel %vm848, %v1023, 0
        %v1047 = vsel %vm848, %v1025, 0
        %v1050 = vsel %vm848, %v1027, 0
        %1052 = vmatprep.subr.bf16.mxu0 %v829
        %1053 = vmatpush1.bf16.msra.mxu0 %v828
        %1054 = vmatprep.subr.bf16.mxu0 %v827
        %1055 = vmatpush1.bf16.msra.mxu0 %v826
        %1056 = vmatprep.subr.bf16.mxu0 %v825
        %1057 = vmatpush1.bf16.msra.mxu0 %v824
        %1058 = vmatprep.subr.bf16.mxu0 %v823
        %1059 = vmatpush1.bf16.msra.mxu0 %v822
        %1060 = vmatprep.subr.bf16.mxu0 %v821
        %1061 = vmatpush1.bf16.msra.mxu0 %v820
        %1062 = vmatprep.subr.bf16.mxu0 %v819
        %1063 = vmatpush1.bf16.msra.mxu0 %v818
        %1064 = vmatprep.subr.bf16.mxu0 %v817
        %1065 = vmatpush1.bf16.msra.mxu0 %v816
        %1066 = vmatprep.subr.bf16.mxu0 %v815
        %1067 = vmatpush1.bf16.msra.mxu0 %v814
        %1068 = vmatprep.subr.bf16.mxu0 0
        %1069 = vmatpush2.bf16.msra.mxu0 0
        %1070 = vmatprep.subr.bf16.mxu0 0
        %1071 = vmatpush2.bf16.msra.mxu0 0
        %1072 = vmatprep.subr.bf16.mxu0 0
        %1073 = vmatpush2.bf16.msra.mxu0 0
        %1074 = vmatprep.subr.bf16.mxu0 0
        %1075 = vmatpush2.bf16.msra.mxu0 0
        %1076 = vmatprep.subr.bf16.mxu0 0
        %1077 = vmatpush2.bf16.msra.mxu0 0
        %1078 = vmatprep.subr.bf16.mxu0 0
        %1079 = vmatpush2.bf16.msra.mxu0 0
        %1080 = vmatprep.subr.bf16.mxu0 0
        %1081 = vmatpush2.bf16.msra.mxu0 0
        %1082 = vmatprep.subr.bf16.mxu0 %v872
        %1083 = vmatpush2.bf16.msra.mxu0 %v869
        %1084 = vmatprep.mubr.bf16.mxu0 %v1035
        %1085 = vmatmul.mubr.bf16.gmra.mxu0 %v1016
        %v1086 = vpop.f32.mrf.mxu0
        %v1087 = vadd.f32 0.0, %v1086
        %v1088 = vpop.f32.mrf.mxu0
        %v1089 = vadd.f32 0.0, %v1088
        %v1090 = vpop.f32.mrf.mxu0
        %v1091 = vadd.f32 0.0, %v1090
        %v1092 = vpop.f32.mrf.mxu0
        %v1093 = vadd.f32 0.0, %v1092
        %1094 = vmatprep.mubr.bf16.mxu0 %v1038
        %1095 = vmatmul.mubr.bf16.gmra.mxu0 %v1018
        %v1096 = vpop.f32.mrf.mxu0
        %v1097 = vadd.f32 0.0, %v1096
        %v1098 = vpop.f32.mrf.mxu0
        %v1099 = vadd.f32 0.0, %v1098
        %v1100 = vpop.f32.mrf.mxu0
        %v1101 = vadd.f32 0.0, %v1100
        %v1102 = vpop.f32.mrf.mxu0
        %v1103 = vadd.f32 0.0, %v1102
        %1104 = vmatprep.mubr.bf16.mxu0 %v1041
        %1105 = vmatmul.mubr.bf16.gmra.mxu0 %v1020
        %v1106 = vpop.f32.mrf.mxu0
        %v1107 = vadd.f32 0.0, %v1106
        %v1108 = vpop.f32.mrf.mxu0
        %v1109 = vadd.f32 0.0, %v1108
        %v1110 = vpop.f32.mrf.mxu0
        %v1111 = vadd.f32 0.0, %v1110
        %v1112 = vpop.f32.mrf.mxu0
        %v1113 = vadd.f32 0.0, %v1112
        %1114 = vmatprep.mubr.bf16.mxu0 %v1044
        %1115 = vmatmul.mubr.bf16.gmra.mxu0 %v1022
        %v1116 = vpop.f32.mrf.mxu0
        %v1117 = vadd.f32 0.0, %v1116
        %v1118 = vpop.f32.mrf.mxu0
        %v1119 = vadd.f32 0.0, %v1118
        %v1120 = vpop.f32.mrf.mxu0
        %v1121 = vadd.f32 0.0, %v1120
        %v1122 = vpop.f32.mrf.mxu0
        %v1123 = vadd.f32 0.0, %v1122
        %1124 = vmatprep.mubr.bf16.mxu0 %v1047
        %1125 = vmatmul.mubr.bf16.gmra.mxu0 %v1024
        %v1126 = vpop.f32.mrf.mxu0
        %v1127 = vadd.f32 0.0, %v1126
        %v1128 = vpop.f32.mrf.mxu0
        %v1129 = vadd.f32 0.0, %v1128
        %v1130 = vpop.f32.mrf.mxu0
        %v1131 = vadd.f32 0.0, %v1130
        %v1132 = vpop.f32.mrf.mxu0
        %v1133 = vadd.f32 0.0, %v1132
        %1134 = vmatprep.mubr.bf16.mxu0 %v1050
        %1135 = vmatmul.mubr.bf16.gmra.mxu0 %v1026
        %v1136 = vpop.f32.mrf.mxu0
        %v1137 = vadd.f32 0.0, %v1136
        %v1138 = vpop.f32.mrf.mxu0
        %v1139 = vadd.f32 0.0, %v1138
        %v1140 = vpop.f32.mrf.mxu0
        %v1141 = vadd.f32 0.0, %v1140
        %v1142 = vpop.f32.mrf.mxu0
        %v1143 = vadd.f32 0.0, %v1142
        %1144 = vdwg.mxu0
        %v1145 = vmax.f32 %v909, %v1087
        %v1146 = vmax.f32 %v911, %v1089
        %v1147 = vmax.f32 %v913, %v1091
        %v1148 = vmax.f32 %v915, %v1093
        %v1149 = vmax.f32 %v919, %v1097
        %v1150 = vmax.f32 %v921, %v1099
        %v1151 = vmax.f32 %v923, %v1101
        %v1152 = vmax.f32 %v925, %v1103
        %v1153 = vmax.f32 %v929, %v1107
        %v1154 = vmax.f32 %v931, %v1109
        %v1155 = vmax.f32 %v933, %v1111
        %v1156 = vmax.f32 %v935, %v1113
        %v1157 = vmax.f32 %v939, %v1117
        %v1158 = vmax.f32 %v941, %v1119
        %v1159 = vmax.f32 %v943, %v1121
        %v1160 = vmax.f32 %v945, %v1123
        %v1161 = vmax.f32 %v949, %v1127
        %v1162 = vmax.f32 %v951, %v1129
        %v1163 = vmax.f32 %v953, %v1131
        %v1164 = vmax.f32 %v955, %v1133
        %v1165 = vmax.f32 %v959, %v1137
        %v1166 = vmax.f32 %v961, %v1139
        %v1167 = vmax.f32 %v963, %v1141
        %v1168 = vmax.f32 %v965, %v1143
        %v1169 = vmax.f32 %v1145, %v1146
        %v1170 = vmax.f32 %v1147, %v1148
        %v1171 = vmax.f32 %v1149, %v1150
        %v1172 = vmax.f32 %v1151, %v1152
        %v1173 = vmax.f32 %v1153, %v1154
        %v1174 = vmax.f32 %v1155, %v1156
        %v1175 = vmax.f32 %v1157, %v1158
        %v1176 = vmax.f32 %v1159, %v1160
        %v1177 = vmax.f32 %v1161, %v1162
        %v1178 = vmax.f32 %v1163, %v1164
        %v1179 = vmax.f32 %v1165, %v1166
        %v1180 = vmax.f32 %v1167, %v1168
        %v1181 = vld [vmem:[%s2] sm:$0x1]
        %v1183 = vlaneseq
        %v1184 = vshrl.u32 %v1183, 7
        %v1185 = vsub.s32 0, %v1184
        %v1186 = vrot.slane %v1181, %v1185
        %v1188 = vadd.f32 %v1169, %v1186
        %v1189 = vadd.f32 %v1170, %v1186
        %v1190 = vadd.f32 %v1171, %v1186
        %v1191 = vadd.f32 %v1172, %v1186
        %v1192 = vadd.f32 %v1173, %v1186
        %v1193 = vadd.f32 %v1174, %v1186
        %v1194 = vadd.f32 %v1175, %v1186
        %v1195 = vadd.f32 %v1176, %v1186
        %v1196 = vadd.f32 %v1177, %v1186
        %v1197 = vadd.f32 %v1178, %v1186
        %v1198 = vadd.f32 %v1179, %v1186
        %v1199 = vadd.f32 %v1180, %v1186
        %v1200 = vmax.f32 %v1188, 0.0
        %v1201 = vmax.f32 %v1189, 0.0
        %v1202 = vmax.f32 %v1190, 0.0
        %v1203 = vmax.f32 %v1191, 0.0
        %v1204 = vmax.f32 %v1192, 0.0
        %v1205 = vmax.f32 %v1193, 0.0
        %v1206 = vmax.f32 %v1194, 0.0
        %v1207 = vmax.f32 %v1195, 0.0
        %v1208 = vmax.f32 %v1196, 0.0
        %v1209 = vmax.f32 %v1197, 0.0
        %v1210 = vmax.f32 %v1198, 0.0
        %v1211 = vmax.f32 %v1199, 0.0
        %v1212 = vpack.c.bf16 %v1201, %v1200
        %v1213 = vpack.c.bf16 %v1203, %v1202
        %v1214 = vpack.c.bf16 %v1205, %v1204
        %v1215 = vpack.c.bf16 %v1207, %v1206
        %v1216 = vpack.c.bf16 %v1209, %v1208
        %v1217 = vpack.c.bf16 %v1211, %v1210
        %s1218 = scalar_lea.vmem %s520, 192 [#allocation2]
        %v1219 = vld [vmem:[%s1218] sm:$0xff]
        %v1220 = vld [vmem:[%s1218 + $0x8] sm:$0xff]
        %v1221 = vld [vmem:[%s1218 + $0x10] sm:$0xff]
        %v1222 = vld [vmem:[%s1218 + $0x18] sm:$0xff]
        %v1223 = vld [vmem:[%s1218 + $0x20] sm:$0xff]
        %v1224 = vld [vmem:[%s1218 + $0x28] sm:$0xff]
        %v1225 = vld [vmem:[%s1218 + $0x30] sm:$0xff]
        %v1226 = vld [vmem:[%s1218 + $0x38] sm:$0xff]
        %v1227 = vld [vmem:[%s1218 + $0x40] sm:$0xff]
        %v1228 = vld [vmem:[%s1218 + $0x48] sm:$0xff]
        %v1229 = vld [vmem:[%s1218 + $0x50] sm:$0xff]
        %v1230 = vld [vmem:[%s1218 + $0x58] sm:$0xff]
        %v1243 = vunpack.c.l.b16 %v1219
        %v1244 = vunpack.c.h.b16 %v1219
        %v1245 = vunpack.c.l.b16 %v1220
        %v1246 = vunpack.c.h.b16 %v1220
        %v1247 = vunpack.c.l.b16 %v1221
        %v1248 = vunpack.c.h.b16 %v1221
        %v1249 = vunpack.c.l.b16 %v1222
        %v1250 = vunpack.c.h.b16 %v1222
        %v1251 = vunpack.c.l.b16 %v1223
        %v1252 = vunpack.c.h.b16 %v1223
        %v1253 = vunpack.c.l.b16 %v1224
        %v1254 = vunpack.c.h.b16 %v1224
        %v1255 = vunpack.c.l.b16 %v1225
        %v1256 = vunpack.c.h.b16 %v1225
        %v1257 = vunpack.c.l.b16 %v1226
        %v1258 = vunpack.c.h.b16 %v1226
        %v1259 = vunpack.c.l.b16 %v1227
        %v1260 = vunpack.c.h.b16 %v1227
        %v1261 = vunpack.c.l.b16 %v1228
        %v1262 = vunpack.c.h.b16 %v1228
        %v1263 = vunpack.c.l.b16 %v1229
        %v1264 = vunpack.c.h.b16 %v1229
        %v1265 = vunpack.c.l.b16 %v1230
        %v1266 = vunpack.c.h.b16 %v1230
        %v1267 = vpack.c.b16 %v1245, %v1243
        %v1268 = vpack.c.b16 %v1246, %v1244
        %v1269 = vpack.c.b16 %v1249, %v1247
        %v1270 = vpack.c.b16 %v1250, %v1248
        %v1271 = vpack.c.b16 %v1253, %v1251
        %v1272 = vpack.c.b16 %v1254, %v1252
        %v1273 = vpack.c.b16 %v1257, %v1255
        %v1274 = vpack.c.b16 %v1258, %v1256
        %v1275 = vpack.c.b16 %v1261, %v1259
        %v1276 = vpack.c.b16 %v1262, %v1260
        %v1277 = vpack.c.b16 %v1265, %v1263
        %v1278 = vpack.c.b16 %v1266, %v1264
        %v1286 = vsel %vm848, %v1268, 0
        %v1289 = vsel %vm848, %v1270, 0
        %v1292 = vsel %vm848, %v1272, 0
        %v1295 = vsel %vm848, %v1274, 0
        %v1298 = vsel %vm848, %v1276, 0
        %v1301 = vsel %vm848, %v1278, 0
        %1303 = vmatprep.subr.bf16.mxu0 %v829
        %1304 = vmatpush1.bf16.msra.mxu0 %v828
        %1305 = vmatprep.subr.bf16.mxu0 %v827
        %1306 = vmatpush1.bf16.msra.mxu0 %v826
        %1307 = vmatprep.subr.bf16.mxu0 %v825
        %1308 = vmatpush1.bf16.msra.mxu0 %v824
        %1309 = vmatprep.subr.bf16.mxu0 %v823
        %1310 = vmatpush1.bf16.msra.mxu0 %v822
        %1311 = vmatprep.subr.bf16.mxu0 %v821
        %1312 = vmatpush1.bf16.msra.mxu0 %v820
        %1313 = vmatprep.subr.bf16.mxu0 %v819
        %1314 = vmatpush1.bf16.msra.mxu0 %v818
        %1315 = vmatprep.subr.bf16.mxu0 %v817
        %1316 = vmatpush1.bf16.msra.mxu0 %v816
        %1317 = vmatprep.subr.bf16.mxu0 %v815
        %1318 = vmatpush1.bf16.msra.mxu0 %v814
        %1319 = vmatprep.subr.bf16.mxu0 0
        %1320 = vmatpush2.bf16.msra.mxu0 0
        %1321 = vmatprep.subr.bf16.mxu0 0
        %1322 = vmatpush2.bf16.msra.mxu0 0
        %1323 = vmatprep.subr.bf16.mxu0 0
        %1324 = vmatpush2.bf16.msra.mxu0 0
        %1325 = vmatprep.subr.bf16.mxu0 0
        %1326 = vmatpush2.bf16.msra.mxu0 0
        %1327 = vmatprep.subr.bf16.mxu0 0
        %1328 = vmatpush2.bf16.msra.mxu0 0
        %1329 = vmatprep.subr.bf16.mxu0 0
        %1330 = vmatpush2.bf16.msra.mxu0 0
        %1331 = vmatprep.subr.bf16.mxu0 0
        %1332 = vmatpush2.bf16.msra.mxu0 0
        %1333 = vmatprep.subr.bf16.mxu0 %v872
        %1334 = vmatpush2.bf16.msra.mxu0 %v869
        %1335 = vmatprep.mubr.bf16.mxu0 %v1286
        %1336 = vmatmul.mubr.bf16.gmra.mxu0 %v1267
        %v1337 = vpop.f32.mrf.mxu0
        %v1338 = vadd.f32 0.0, %v1337
        %v1339 = vpop.f32.mrf.mxu0
        %v1340 = vadd.f32 0.0, %v1339
        %v1341 = vpop.f32.mrf.mxu0
        %v1342 = vadd.f32 0.0, %v1341
        %v1343 = vpop.f32.mrf.mxu0
        %v1344 = vadd.f32 0.0, %v1343
        %1345 = vmatprep.mubr.bf16.mxu0 %v1289
        %1346 = vmatmul.mubr.bf16.gmra.mxu0 %v1269
        %v1347 = vpop.f32.mrf.mxu0
        %v1348 = vadd.f32 0.0, %v1347
        %v1349 = vpop.f32.mrf.mxu0
        %v1350 = vadd.f32 0.0, %v1349
        %v1351 = vpop.f32.mrf.mxu0
        %v1352 = vadd.f32 0.0, %v1351
        %v1353 = vpop.f32.mrf.mxu0
        %v1354 = vadd.f32 0.0, %v1353
        %1355 = vmatprep.mubr.bf16.mxu0 %v1292
        %1356 = vmatmul.mubr.bf16.gmra.mxu0 %v1271
        %v1357 = vpop.f32.mrf.mxu0
        %v1358 = vadd.f32 0.0, %v1357
        %v1359 = vpop.f32.mrf.mxu0
        %v1360 = vadd.f32 0.0, %v1359
        %v1361 = vpop.f32.mrf.mxu0
        %v1362 = vadd.f32 0.0, %v1361
        %v1363 = vpop.f32.mrf.mxu0
        %v1364 = vadd.f32 0.0, %v1363
        %1365 = vmatprep.mubr.bf16.mxu0 %v1295
        %1366 = vmatmul.mubr.bf16.gmra.mxu0 %v1273
        %v1367 = vpop.f32.mrf.mxu0
        %v1368 = vadd.f32 0.0, %v1367
        %v1369 = vpop.f32.mrf.mxu0
        %v1370 = vadd.f32 0.0, %v1369
        %v1371 = vpop.f32.mrf.mxu0
        %v1372 = vadd.f32 0.0, %v1371
        %v1373 = vpop.f32.mrf.mxu0
        %v1374 = vadd.f32 0.0, %v1373
        %1375 = vmatprep.mubr.bf16.mxu0 %v1298
        %1376 = vmatmul.mubr.bf16.gmra.mxu0 %v1275
        %v1377 = vpop.f32.mrf.mxu0
        %v1378 = vadd.f32 0.0, %v1377
        %v1379 = vpop.f32.mrf.mxu0
        %v1380 = vadd.f32 0.0, %v1379
        %v1381 = vpop.f32.mrf.mxu0
        %v1382 = vadd.f32 0.0, %v1381
        %v1383 = vpop.f32.mrf.mxu0
        %v1384 = vadd.f32 0.0, %v1383
        %1385 = vmatprep.mubr.bf16.mxu0 %v1301
        %1386 = vmatmul.mubr.bf16.gmra.mxu0 %v1277
        %v1387 = vpop.f32.mrf.mxu0
        %v1388 = vadd.f32 0.0, %v1387
        %v1389 = vpop.f32.mrf.mxu0
        %v1390 = vadd.f32 0.0, %v1389
        %v1391 = vpop.f32.mrf.mxu0
        %v1392 = vadd.f32 0.0, %v1391
        %v1393 = vpop.f32.mrf.mxu0
        %v1394 = vadd.f32 0.0, %v1393
        %1395 = vdwg.mxu0
        %s1396 = scalar_lea.vmem %s520, 288 [#allocation2]
        %v1397 = vld [vmem:[%s1396] sm:$0xff]
        %v1398 = vld [vmem:[%s1396 + $0x8] sm:$0xff]
        %v1399 = vld [vmem:[%s1396 + $0x10] sm:$0xff]
        %v1400 = vld [vmem:[%s1396 + $0x18] sm:$0xff]
        %v1401 = vld [vmem:[%s1396 + $0x20] sm:$0xff]
        %v1402 = vld [vmem:[%s1396 + $0x28] sm:$0xff]
        %v1403 = vld [vmem:[%s1396 + $0x30] sm:$0xff]
        %v1404 = vld [vmem:[%s1396 + $0x38] sm:$0xff]
        %v1405 = vld [vmem:[%s1396 + $0x40] sm:$0xff]
        %v1406 = vld [vmem:[%s1396 + $0x48] sm:$0xff]
        %v1407 = vld [vmem:[%s1396 + $0x50] sm:$0xff]
        %v1408 = vld [vmem:[%s1396 + $0x58] sm:$0xff]
        %v1421 = vunpack.c.l.b16 %v1397
        %v1422 = vunpack.c.h.b16 %v1397
        %v1423 = vunpack.c.l.b16 %v1398
        %v1424 = vunpack.c.h.b16 %v1398
        %v1425 = vunpack.c.l.b16 %v1399
        %v1426 = vunpack.c.h.b16 %v1399
        %v1427 = vunpack.c.l.b16 %v1400
        %v1428 = vunpack.c.h.b16 %v1400
        %v1429 = vunpack.c.l.b16 %v1401
        %v1430 = vunpack.c.h.b16 %v1401
        %v1431 = vunpack.c.l.b16 %v1402
        %v1432 = vunpack.c.h.b16 %v1402
        %v1433 = vunpack.c.l.b16 %v1403
        %v1434 = vunpack.c.h.b16 %v1403
        %v1435 = vunpack.c.l.b16 %v1404
        %v1436 = vunpack.c.h.b16 %v1404
        %v1437 = vunpack.c.l.b16 %v1405
        %v1438 = vunpack.c.h.b16 %v1405
        %v1439 = vunpack.c.l.b16 %v1406
        %v1440 = vunpack.c.h.b16 %v1406
        %v1441 = vunpack.c.l.b16 %v1407
        %v1442 = vunpack.c.h.b16 %v1407
        %v1443 = vunpack.c.l.b16 %v1408
        %v1444 = vunpack.c.h.b16 %v1408
        %v1445 = vpack.c.b16 %v1423, %v1421
        %v1446 = vpack.c.b16 %v1424, %v1422
        %v1447 = vpack.c.b16 %v1427, %v1425
        %v1448 = vpack.c.b16 %v1428, %v1426
        %v1449 = vpack.c.b16 %v1431, %v1429
        %v1450 = vpack.c.b16 %v1432, %v1430
        %v1451 = vpack.c.b16 %v1435, %v1433
        %v1452 = vpack.c.b16 %v1436, %v1434
        %v1453 = vpack.c.b16 %v1439, %v1437
        %v1454 = vpack.c.b16 %v1440, %v1438
        %v1455 = vpack.c.b16 %v1443, %v1441
        %v1456 = vpack.c.b16 %v1444, %v1442
        %v1464 = vsel %vm848, %v1446, 0
        %v1467 = vsel %vm848, %v1448, 0
        %v1470 = vsel %vm848, %v1450, 0
        %v1473 = vsel %vm848, %v1452, 0
        %v1476 = vsel %vm848, %v1454, 0
        %v1479 = vsel %vm848, %v1456, 0
        %1481 = vmatprep.subr.bf16.mxu0 %v829
        %1482 = vmatpush1.bf16.msra.mxu0 %v828
        %1483 = vmatprep.subr.bf16.mxu0 %v827
        %1484 = vmatpush1.bf16.msra.mxu0 %v826
        %1485 = vmatprep.subr.bf16.mxu0 %v825
        %1486 = vmatpush1.bf16.msra.mxu0 %v824
        %1487 = vmatprep.subr.bf16.mxu0 %v823
        %1488 = vmatpush1.bf16.msra.mxu0 %v822
        %1489 = vmatprep.subr.bf16.mxu0 %v821
        %1490 = vmatpush1.bf16.msra.mxu0 %v820
        %1491 = vmatprep.subr.bf16.mxu0 %v819
        %1492 = vmatpush1.bf16.msra.mxu0 %v818
        %1493 = vmatprep.subr.bf16.mxu0 %v817
        %1494 = vmatpush1.bf16.msra.mxu0 %v816
        %1495 = vmatprep.subr.bf16.mxu0 %v815
        %1496 = vmatpush1.bf16.msra.mxu0 %v814
        %1497 = vmatprep.subr.bf16.mxu0 0
        %1498 = vmatpush2.bf16.msra.mxu0 0
        %1499 = vmatprep.subr.bf16.mxu0 0
        %1500 = vmatpush2.bf16.msra.mxu0 0
        %1501 = vmatprep.subr.bf16.mxu0 0
        %1502 = vmatpush2.bf16.msra.mxu0 0
        %1503 = vmatprep.subr.bf16.mxu0 0
        %1504 = vmatpush2.bf16.msra.mxu0 0
        %1505 = vmatprep.subr.bf16.mxu0 0
        %1506 = vmatpush2.bf16.msra.mxu0 0
        %1507 = vmatprep.subr.bf16.mxu0 0
        %1508 = vmatpush2.bf16.msra.mxu0 0
        %1509 = vmatprep.subr.bf16.mxu0 0
        %1510 = vmatpush2.bf16.msra.mxu0 0
        %1511 = vmatprep.subr.bf16.mxu0 %v872
        %1512 = vmatpush2.bf16.msra.mxu0 %v869
        %1513 = vmatprep.mubr.bf16.mxu0 %v1464
        %1514 = vmatmul.mubr.bf16.gmra.mxu0 %v1445
        %v1515 = vpop.f32.mrf.mxu0
        %v1516 = vadd.f32 0.0, %v1515
        %v1517 = vpop.f32.mrf.mxu0
        %v1518 = vadd.f32 0.0, %v1517
        %v1519 = vpop.f32.mrf.mxu0
        %v1520 = vadd.f32 0.0, %v1519
        %v1521 = vpop.f32.mrf.mxu0
        %v1522 = vadd.f32 0.0, %v1521
        %1523 = vmatprep.mubr.bf16.mxu0 %v1467
        %1524 = vmatmul.mubr.bf16.gmra.mxu0 %v1447
        %v1525 = vpop.f32.mrf.mxu0
        %v1526 = vadd.f32 0.0, %v1525
        %v1527 = vpop.f32.mrf.mxu0
        %v1528 = vadd.f32 0.0, %v1527
        %v1529 = vpop.f32.mrf.mxu0
        %v1530 = vadd.f32 0.0, %v1529
        %v1531 = vpop.f32.mrf.mxu0
        %v1532 = vadd.f32 0.0, %v1531
        %1533 = vmatprep.mubr.bf16.mxu0 %v1470
        %1534 = vmatmul.mubr.bf16.gmra.mxu0 %v1449
        %v1535 = vpop.f32.mrf.mxu0
        %v1536 = vadd.f32 0.0, %v1535
        %v1537 = vpop.f32.mrf.mxu0
        %v1538 = vadd.f32 0.0, %v1537
        %v1539 = vpop.f32.mrf.mxu0
        %v1540 = vadd.f32 0.0, %v1539
        %v1541 = vpop.f32.mrf.mxu0
        %v1542 = vadd.f32 0.0, %v1541
        %1543 = vmatprep.mubr.bf16.mxu0 %v1473
        %1544 = vmatmul.mubr.bf16.gmra.mxu0 %v1451
        %v1545 = vpop.f32.mrf.mxu0
        %v1546 = vadd.f32 0.0, %v1545
        %v1547 = vpop.f32.mrf.mxu0
        %v1548 = vadd.f32 0.0, %v1547
        %v1549 = vpop.f32.mrf.mxu0
        %v1550 = vadd.f32 0.0, %v1549
        %v1551 = vpop.f32.mrf.mxu0
        %v1552 = vadd.f32 0.0, %v1551
        %1553 = vmatprep.mubr.bf16.mxu0 %v1476
        %1554 = vmatmul.mubr.bf16.gmra.mxu0 %v1453
        %v1555 = vpop.f32.mrf.mxu0
        %v1556 = vadd.f32 0.0, %v1555
        %v1557 = vpop.f32.mrf.mxu0
        %v1558 = vadd.f32 0.0, %v1557
        %v1559 = vpop.f32.mrf.mxu0
        %v1560 = vadd.f32 0.0, %v1559
        %v1561 = vpop.f32.mrf.mxu0
        %v1562 = vadd.f32 0.0, %v1561
        %1563 = vmatprep.mubr.bf16.mxu0 %v1479
        %1564 = vmatmul.mubr.bf16.gmra.mxu0 %v1455
        %v1565 = vpop.f32.mrf.mxu0
        %v1566 = vadd.f32 0.0, %v1565
        %v1567 = vpop.f32.mrf.mxu0
        %v1568 = vadd.f32 0.0, %v1567
        %v1569 = vpop.f32.mrf.mxu0
        %v1570 = vadd.f32 0.0, %v1569
        %v1571 = vpop.f32.mrf.mxu0
        %v1572 = vadd.f32 0.0, %v1571
        %1573 = vdwg.mxu0
        %v1574 = vmax.f32 %v1338, %v1516
        %v1575 = vmax.f32 %v1340, %v1518
        %v1576 = vmax.f32 %v1342, %v1520
        %v1577 = vmax.f32 %v1344, %v1522
        %v1578 = vmax.f32 %v1348, %v1526
        %v1579 = vmax.f32 %v1350, %v1528
        %v1580 = vmax.f32 %v1352, %v1530
        %v1581 = vmax.f32 %v1354, %v1532
        %v1582 = vmax.f32 %v1358, %v1536
        %v1583 = vmax.f32 %v1360, %v1538
        %v1584 = vmax.f32 %v1362, %v1540
        %v1585 = vmax.f32 %v1364, %v1542
        %v1586 = vmax.f32 %v1368, %v1546
        %v1587 = vmax.f32 %v1370, %v1548
        %v1588 = vmax.f32 %v1372, %v1550
        %v1589 = vmax.f32 %v1374, %v1552
        %v1590 = vmax.f32 %v1378, %v1556
        %v1591 = vmax.f32 %v1380, %v1558
        %v1592 = vmax.f32 %v1382, %v1560
        %v1593 = vmax.f32 %v1384, %v1562
        %v1594 = vmax.f32 %v1388, %v1566
        %v1595 = vmax.f32 %v1390, %v1568
        %v1596 = vmax.f32 %v1392, %v1570
        %v1597 = vmax.f32 %v1394, %v1572
        %v1598 = vmax.f32 %v1574, %v1575
        %v1599 = vmax.f32 %v1576, %v1577
        %v1600 = vmax.f32 %v1578, %v1579
        %v1601 = vmax.f32 %v1580, %v1581
        %v1602 = vmax.f32 %v1582, %v1583
        %v1603 = vmax.f32 %v1584, %v1585
        %v1604 = vmax.f32 %v1586, %v1587
        %v1605 = vmax.f32 %v1588, %v1589
        %v1606 = vmax.f32 %v1590, %v1591
        %v1607 = vmax.f32 %v1592, %v1593
        %v1608 = vmax.f32 %v1594, %v1595
        %v1609 = vmax.f32 %v1596, %v1597
        %v1610 = vadd.f32 %v1598, %v1186
        %v1611 = vadd.f32 %v1599, %v1186
        %v1612 = vadd.f32 %v1600, %v1186
        %v1613 = vadd.f32 %v1601, %v1186
        %v1614 = vadd.f32 %v1602, %v1186
        %v1615 = vadd.f32 %v1603, %v1186
        %v1616 = vadd.f32 %v1604, %v1186
        %v1617 = vadd.f32 %v1605, %v1186
        %v1618 = vadd.f32 %v1606, %v1186
        %v1619 = vadd.f32 %v1607, %v1186
        %v1620 = vadd.f32 %v1608, %v1186
        %v1621 = vadd.f32 %v1609, %v1186
        %v1622 = vmax.f32 %v1610, 0.0
        %v1623 = vmax.f32 %v1611, 0.0
        %v1624 = vmax.f32 %v1612, 0.0
        %v1625 = vmax.f32 %v1613, 0.0
        %v1626 = vmax.f32 %v1614, 0.0
        %v1627 = vmax.f32 %v1615, 0.0
        %v1628 = vmax.f32 %v1616, 0.0
        %v1629 = vmax.f32 %v1617, 0.0
        %v1630 = vmax.f32 %v1618, 0.0
        %v1631 = vmax.f32 %v1619, 0.0
        %v1632 = vmax.f32 %v1620, 0.0
        %v1633 = vmax.f32 %v1621, 0.0
        %v1634 = vpack.c.bf16 %v1623, %v1622
        %v1635 = vpack.c.bf16 %v1625, %v1624
        %v1636 = vpack.c.bf16 %v1627, %v1626
        %v1637 = vpack.c.bf16 %v1629, %v1628
        %v1638 = vpack.c.bf16 %v1631, %v1630
        %v1639 = vpack.c.bf16 %v1633, %v1632
        %v1655 = vunpack.c.l.b16 %v594
        %v1656 = vunpack.c.h.b16 %v594
        %v1657 = vunpack.c.l.b16 %v595
        %v1658 = vunpack.c.h.b16 %v595
        %v1659 = vunpack.c.l.b16 %v596
        %v1660 = vunpack.c.h.b16 %v596
        %v1661 = vunpack.c.l.b16 %v597
        %v1662 = vunpack.c.h.b16 %v597
        %v1663 = vunpack.c.l.b16 %v598
        %v1664 = vunpack.c.h.b16 %v598
        %v1665 = vunpack.c.l.b16 %v599
        %v1666 = vunpack.c.h.b16 %v599
        %v1667 = vunpack.c.l.b16 %v600
        %v1668 = vunpack.c.h.b16 %v600
        %v1669 = vunpack.c.l.b16 %v601
        %v1670 = vunpack.c.h.b16 %v601
        %v1671 = vunpack.c.l.b16 %v602
        %v1672 = vunpack.c.h.b16 %v602
        %v1673 = vunpack.c.l.b16 %v603
        %v1674 = vunpack.c.h.b16 %v603
        %v1675 = vunpack.c.l.b16 %v604
        %v1676 = vunpack.c.h.b16 %v604
        %v1677 = vunpack.c.l.b16 %v605
        %v1678 = vunpack.c.h.b16 %v605
        %v1679 = vunpack.c.l.b16 %v606
        %v1680 = vunpack.c.h.b16 %v606
        %v1681 = vunpack.c.l.b16 %v607
        %v1682 = vunpack.c.h.b16 %v607
        %v1683 = vunpack.c.l.b16 %v608
        %v1684 = vunpack.c.h.b16 %v608
        %v1685 = vpack.c.b16 %v1657, %v1655
        %v1686 = vpack.c.b16 %v1658, %v1656
        %v1687 = vpack.c.b16 %v1661, %v1659
        %v1688 = vpack.c.b16 %v1662, %v1660
        %v1689 = vpack.c.b16 %v1665, %v1663
        %v1690 = vpack.c.b16 %v1666, %v1664
        %v1691 = vpack.c.b16 %v1669, %v1667
        %v1692 = vpack.c.b16 %v1670, %v1668
        %v1693 = vpack.c.b16 %v1673, %v1671
        %v1694 = vpack.c.b16 %v1674, %v1672
        %v1695 = vpack.c.b16 %v1677, %v1675
        %v1696 = vpack.c.b16 %v1678, %v1676
        %v1697 = vpack.c.b16 %v1681, %v1679
        %v1698 = vpack.c.b16 %v1682, %v1680
        %v1699 = vpack.c.b16 %v1683, %v1683
        %v1700 = vpack.c.b16 %v1684, %v1684
        %vm1715 = vcmask 982016
        %v1717 = vsel %vm1715, %v1634, 0
        %v1720 = vsel %vm1715, %v1635, 0
        %v1723 = vsel %vm1715, %v1636, 0
        %v1726 = vsel %vm1715, %v1637, 0
        %vm1728 = vcmask 1043456
        %v1730 = vsel %vm1728, %v1699, 0
        %v1733 = vsel %vm1728, %v1700, 0
        %1735 = vmatprep.subr.bf16.mxu0 %v1733
        %1736 = vmatpush1.bf16.msra.mxu0 %v1730
        %1737 = vmatprep.subr.bf16.mxu0 %v1698
        %1738 = vmatpush1.bf16.msra.mxu0 %v1697
        %1739 = vmatprep.subr.bf16.mxu0 %v1696
        %1740 = vmatpush1.bf16.msra.mxu0 %v1695
        %1741 = vmatprep.subr.bf16.mxu0 %v1694
        %1742 = vmatpush1.bf16.msra.mxu0 %v1693
        %1743 = vmatprep.subr.bf16.mxu0 %v1692
        %1744 = vmatpush1.bf16.msra.mxu0 %v1691
        %1745 = vmatprep.subr.bf16.mxu0 %v1690
        %1746 = vmatpush1.bf16.msra.mxu0 %v1689
        %1747 = vmatprep.subr.bf16.mxu0 %v1688
        %1748 = vmatpush1.bf16.msra.mxu0 %v1687
        %1749 = vmatprep.subr.bf16.mxu0 %v1686
        %1750 = vmatpush1.bf16.msra.mxu0 %v1685
        %1751 = vmatprep.subr.bf16.mxu0 0
        %1752 = vmatpush2.bf16.msra.mxu0 0
        %1753 = vmatprep.subr.bf16.mxu0 0
        %1754 = vmatpush2.bf16.msra.mxu0 0
        %1755 = vmatprep.subr.bf16.mxu0 0
        %1756 = vmatpush2.bf16.msra.mxu0 0
        %1757 = vmatprep.subr.bf16.mxu0 0
        %1758 = vmatpush2.bf16.msra.mxu0 0
        %1759 = vmatprep.subr.bf16.mxu0 0
        %1760 = vmatpush2.bf16.msra.mxu0 0
        %1761 = vmatprep.subr.bf16.mxu0 0
        %1762 = vmatpush2.bf16.msra.mxu0 0
        %1763 = vmatprep.subr.bf16.mxu0 0
        %1764 = vmatpush2.bf16.msra.mxu0 0
        %1765 = vmatprep.subr.bf16.mxu0 0
        %1766 = vmatpush2.bf16.msra.mxu0 0
        %1767 = vmatprep.mubr.bf16.mxu0 0
        %1768 = vmatmul.mubr.bf16.gmra.mxu0 %v1717
        %v1769 = vpop.f32.mrf.mxu0
        %v1770 = vadd.f32 0.0, %v1769
        %v1771 = vpop.f32.mrf.mxu0
        %v1772 = vadd.f32 0.0, %v1771
        %v1773 = vpop.f32.mrf.mxu0
        %v1774 = vadd.f32 0.0, %v1773
        %v1775 = vpop.f32.mrf.mxu0
        %v1776 = vadd.f32 0.0, %v1775
        %1777 = vmatprep.mubr.bf16.mxu0 0
        %1778 = vmatmul.mubr.bf16.gmra.mxu0 %v1720
        %v1779 = vpop.f32.mrf.mxu0
        %v1780 = vadd.f32 0.0, %v1779
        %v1781 = vpop.f32.mrf.mxu0
        %v1782 = vadd.f32 0.0, %v1781
        %v1783 = vpop.f32.mrf.mxu0
        %v1784 = vadd.f32 0.0, %v1783
        %v1785 = vpop.f32.mrf.mxu0
        %v1786 = vadd.f32 0.0, %v1785
        %1787 = vmatprep.mubr.bf16.mxu0 0
        %1788 = vmatmul.mubr.bf16.gmra.mxu0 %v1723
        %v1789 = vpop.f32.mrf.mxu0
        %v1790 = vadd.f32 0.0, %v1789
        %v1791 = vpop.f32.mrf.mxu0
        %v1792 = vadd.f32 0.0, %v1791
        %v1793 = vpop.f32.mrf.mxu0
        %v1794 = vadd.f32 0.0, %v1793
        %v1795 = vpop.f32.mrf.mxu0
        %v1796 = vadd.f32 0.0, %v1795
        %1797 = vmatprep.mubr.bf16.mxu0 0
        %1798 = vmatmul.mubr.bf16.gmra.mxu0 %v1726
        %v1799 = vpop.f32.mrf.mxu0
        %v1800 = vadd.f32 0.0, %v1799
        %v1801 = vpop.f32.mrf.mxu0
        %v1802 = vadd.f32 0.0, %v1801
        %v1803 = vpop.f32.mrf.mxu0
        %v1804 = vadd.f32 0.0, %v1803
        %v1805 = vpop.f32.mrf.mxu0
        %v1806 = vadd.f32 0.0, %v1805
        %1807 = vdwg.mxu0
        %v1823 = vunpack.c.l.b16 %v579
        %v1824 = vunpack.c.h.b16 %v579
        %v1825 = vunpack.c.l.b16 %v580
        %v1826 = vunpack.c.h.b16 %v580
        %v1827 = vunpack.c.l.b16 %v581
        %v1828 = vunpack.c.h.b16 %v581
        %v1829 = vunpack.c.l.b16 %v582
        %v1830 = vunpack.c.h.b16 %v582
        %v1831 = vunpack.c.l.b16 %v583
        %v1832 = vunpack.c.h.b16 %v583
        %v1833 = vunpack.c.l.b16 %v584
        %v1834 = vunpack.c.h.b16 %v584
        %v1835 = vunpack.c.l.b16 %v585
        %v1836 = vunpack.c.h.b16 %v585
        %v1837 = vunpack.c.l.b16 %v586
        %v1838 = vunpack.c.h.b16 %v586
        %v1839 = vunpack.c.l.b16 %v587
        %v1840 = vunpack.c.h.b16 %v587
        %v1841 = vunpack.c.l.b16 %v588
        %v1842 = vunpack.c.h.b16 %v588
        %v1843 = vunpack.c.l.b16 %v589
        %v1844 = vunpack.c.h.b16 %v589
        %v1845 = vunpack.c.l.b16 %v590
        %v1846 = vunpack.c.h.b16 %v590
        %v1847 = vunpack.c.l.b16 %v591
        %v1848 = vunpack.c.h.b16 %v591
        %v1849 = vunpack.c.l.b16 %v592
        %v1850 = vunpack.c.h.b16 %v592
        %v1851 = vunpack.c.l.b16 %v593
        %v1852 = vunpack.c.h.b16 %v593
        %v1853 = vpack.c.b16 %v1825, %v1823
        %v1854 = vpack.c.b16 %v1826, %v1824
        %v1855 = vpack.c.b16 %v1829, %v1827
        %v1856 = vpack.c.b16 %v1830, %v1828
        %v1857 = vpack.c.b16 %v1833, %v1831
        %v1858 = vpack.c.b16 %v1834, %v1832
        %v1859 = vpack.c.b16 %v1837, %v1835
        %v1860 = vpack.c.b16 %v1838, %v1836
        %v1861 = vpack.c.b16 %v1841, %v1839
        %v1862 = vpack.c.b16 %v1842, %v1840
        %v1863 = vpack.c.b16 %v1845, %v1843
        %v1864 = vpack.c.b16 %v1846, %v1844
        %v1865 = vpack.c.b16 %v1849, %v1847
        %v1866 = vpack.c.b16 %v1850, %v1848
        %v1867 = vpack.c.b16 %v1851, %v1851
        %v1868 = vpack.c.b16 %v1852, %v1852
        %v1884 = vsel %vm1715, %v1212, 0
        %v1887 = vsel %vm1715, %v1213, 0
        %v1890 = vsel %vm1715, %v1214, 0
        %v1893 = vsel %vm1715, %v1215, 0
        %v1896 = vsel %vm1728, %v1867, 0
        %v1899 = vsel %vm1728, %v1868, 0
        %1901 = vmatprep.subr.bf16.mxu0 %v1899
        %1902 = vmatpush1.bf16.msra.mxu0 %v1896
        %1903 = vmatprep.subr.bf16.mxu0 %v1866
        %1904 = vmatpush1.bf16.msra.mxu0 %v1865
        %1905 = vmatprep.subr.bf16.mxu0 %v1864
        %1906 = vmatpush1.bf16.msra.mxu0 %v1863
        %1907 = vmatprep.subr.bf16.mxu0 %v1862
        %1908 = vmatpush1.bf16.msra.mxu0 %v1861
        %1909 = vmatprep.subr.bf16.mxu0 %v1860
        %1910 = vmatpush1.bf16.msra.mxu0 %v1859
        %1911 = vmatprep.subr.bf16.mxu0 %v1858
        %1912 = vmatpush1.bf16.msra.mxu0 %v1857
        %1913 = vmatprep.subr.bf16.mxu0 %v1856
        %1914 = vmatpush1.bf16.msra.mxu0 %v1855
        %1915 = vmatprep.subr.bf16.mxu0 %v1854
        %1916 = vmatpush1.bf16.msra.mxu0 %v1853
        %1917 = vmatprep.subr.bf16.mxu0 0
        %1918 = vmatpush2.bf16.msra.mxu0 0
        %1919 = vmatprep.subr.bf16.mxu0 0
        %1920 = vmatpush2.bf16.msra.mxu0 0
        %1921 = vmatprep.subr.bf16.mxu0 0
        %1922 = vmatpush2.bf16.msra.mxu0 0
        %1923 = vmatprep.subr.bf16.mxu0 0
        %1924 = vmatpush2.bf16.msra.mxu0 0
        %1925 = vmatprep.subr.bf16.mxu0 0
        %1926 = vmatpush2.bf16.msra.mxu0 0
        %1927 = vmatprep.subr.bf16.mxu0 0
        %1928 = vmatpush2.bf16.msra.mxu0 0
        %1929 = vmatprep.subr.bf16.mxu0 0
        %1930 = vmatpush2.bf16.msra.mxu0 0
        %1931 = vmatprep.subr.bf16.mxu0 0
        %1932 = vmatpush2.bf16.msra.mxu0 0
        %1933 = vmatprep.mubr.bf16.mxu0 0
        %1934 = vmatmul.mubr.bf16.gmra.mxu0 %v1884
        %v1935 = vpop.f32.mrf.mxu0
        %v1936 = vadd.f32 %v1770, %v1935
        %v1937 = vpop.f32.mrf.mxu0
        %v1938 = vadd.f32 %v1772, %v1937
        %v1939 = vpop.f32.mrf.mxu0
        %v1940 = vadd.f32 %v1774, %v1939
        %v1941 = vpop.f32.mrf.mxu0
        %v1942 = vadd.f32 %v1776, %v1941
        %1943 = vmatprep.mubr.bf16.mxu0 0
        %1944 = vmatmul.mubr.bf16.gmra.mxu0 %v1887
        %v1945 = vpop.f32.mrf.mxu0
        %v1946 = vadd.f32 %v1780, %v1945
        %v1947 = vpop.f32.mrf.mxu0
        %v1948 = vadd.f32 %v1782, %v1947
        %v1949 = vpop.f32.mrf.mxu0
        %v1950 = vadd.f32 %v1784, %v1949
        %v1951 = vpop.f32.mrf.mxu0
        %v1952 = vadd.f32 %v1786, %v1951
        %1953 = vmatprep.mubr.bf16.mxu0 0
        %1954 = vmatmul.mubr.bf16.gmra.mxu0 %v1890
        %v1955 = vpop.f32.mrf.mxu0
        %v1956 = vadd.f32 %v1790, %v1955
        %v1957 = vpop.f32.mrf.mxu0
        %v1958 = vadd.f32 %v1792, %v1957
        %v1959 = vpop.f32.mrf.mxu0
        %v1960 = vadd.f32 %v1794, %v1959
        %v1961 = vpop.f32.mrf.mxu0
        %v1962 = vadd.f32 %v1796, %v1961
        %1963 = vmatprep.mubr.bf16.mxu0 0
        %1964 = vmatmul.mubr.bf16.gmra.mxu0 %v1893
        %v1965 = vpop.f32.mrf.mxu0
        %v1966 = vadd.f32 %v1800, %v1965
        %v1967 = vpop.f32.mrf.mxu0
        %v1968 = vadd.f32 %v1802, %v1967
        %v1969 = vpop.f32.mrf.mxu0
        %v1970 = vadd.f32 %v1804, %v1969
        %v1971 = vpop.f32.mrf.mxu0
        %v1972 = vadd.f32 %v1806, %v1971
        %1973 = vdwg.mxu0
        %v1989 = vunpack.c.l.b16 %v609
        %v1990 = vunpack.c.h.b16 %v609
        %v1991 = vunpack.c.l.b16 %v610
        %v1992 = vunpack.c.h.b16 %v610
        %v1993 = vunpack.c.l.b16 %v611
        %v1994 = vunpack.c.h.b16 %v611
        %v1995 = vunpack.c.l.b16 %v612
        %v1996 = vunpack.c.h.b16 %v612
        %v1997 = vunpack.c.l.b16 %v613
        %v1998 = vunpack.c.h.b16 %v613
        %v1999 = vunpack.c.l.b16 %v614
        %v2000 = vunpack.c.h.b16 %v614
        %v2001 = vunpack.c.l.b16 %v615
        %v2002 = vunpack.c.h.b16 %v615
        %v2003 = vunpack.c.l.b16 %v616
        %v2004 = vunpack.c.h.b16 %v616
        %v2005 = vunpack.c.l.b16 %v617
        %v2006 = vunpack.c.h.b16 %v617
        %v2007 = vunpack.c.l.b16 %v618
        %v2008 = vunpack.c.h.b16 %v618
        %v2009 = vunpack.c.l.b16 %v619
        %v2010 = vunpack.c.h.b16 %v619
        %v2011 = vunpack.c.l.b16 %v620
        %v2012 = vunpack.c.h.b16 %v620
        %v2013 = vunpack.c.l.b16 %v621
        %v2014 = vunpack.c.h.b16 %v621
        %v2015 = vunpack.c.l.b16 %v622
        %v2016 = vunpack.c.h.b16 %v622
        %v2017 = vunpack.c.l.b16 %v623
        %v2018 = vunpack.c.h.b16 %v623
        %v2019 = vpack.c.b16 %v1991, %v1989
        %v2020 = vpack.c.b16 %v1992, %v1990
        %v2021 = vpack.c.b16 %v1995, %v1993
        %v2022 = vpack.c.b16 %v1996, %v1994
        %v2023 = vpack.c.b16 %v1999, %v1997
        %v2024 = vpack.c.b16 %v2000, %v1998
        %v2025 = vpack.c.b16 %v2003, %v2001
        %v2026 = vpack.c.b16 %v2004, %v2002
        %v2027 = vpack.c.b16 %v2007, %v2005
        %v2028 = vpack.c.b16 %v2008, %v2006
        %v2029 = vpack.c.b16 %v2011, %v2009
        %v2030 = vpack.c.b16 %v2012, %v2010
        %v2031 = vpack.c.b16 %v2015, %v2013
        %v2032 = vpack.c.b16 %v2016, %v2014
        %v2033 = vpack.c.b16 %v2017, %v2017
        %v2034 = vpack.c.b16 %v2018, %v2018
        %v2050 = vsel %vm1715, %v1216, 0
        %v2053 = vsel %vm1728, %v2033, 0
        %v2056 = vsel %vm1728, %v2034, 0
        %2058 = vmatprep.subr.bf16.mxu0 %v2056
        %2059 = vmatpush1.bf16.msra.mxu0 %v2053
        %2060 = vmatprep.subr.bf16.mxu0 %v2032
        %2061 = vmatpush1.bf16.msra.mxu0 %v2031
        %2062 = vmatprep.subr.bf16.mxu0 %v2030
        %2063 = vmatpush1.bf16.msra.mxu0 %v2029
        %2064 = vmatprep.subr.bf16.mxu0 %v2028
        %2065 = vmatpush1.bf16.msra.mxu0 %v2027
        %2066 = vmatprep.subr.bf16.mxu0 %v2026
        %2067 = vmatpush1.bf16.msra.mxu0 %v2025
        %2068 = vmatprep.subr.bf16.mxu0 %v2024
        %2069 = vmatpush1.bf16.msra.mxu0 %v2023
        %2070 = vmatprep.subr.bf16.mxu0 %v2022
        %2071 = vmatpush1.bf16.msra.mxu0 %v2021
        %2072 = vmatprep.subr.bf16.mxu0 %v2020
        %2073 = vmatpush1.bf16.msra.mxu0 %v2019
        %2074 = vmatprep.subr.bf16.mxu0 0
        %2075 = vmatpush2.bf16.msra.mxu0 0
        %2076 = vmatprep.subr.bf16.mxu0 0
        %2077 = vmatpush2.bf16.msra.mxu0 0
        %2078 = vmatprep.subr.bf16.mxu0 0
        %2079 = vmatpush2.bf16.msra.mxu0 0
        %2080 = vmatprep.subr.bf16.mxu0 0
        %2081 = vmatpush2.bf16.msra.mxu0 0
        %2082 = vmatprep.subr.bf16.mxu0 0
        %2083 = vmatpush2.bf16.msra.mxu0 0
        %2084 = vmatprep.subr.bf16.mxu0 0
        %2085 = vmatpush2.bf16.msra.mxu0 0
        %2086 = vmatprep.subr.bf16.mxu0 0
        %2087 = vmatpush2.bf16.msra.mxu0 0
        %2088 = vmatprep.subr.bf16.mxu0 0
        %2089 = vmatpush2.bf16.msra.mxu0 0
        %2090 = vmatprep.mubr.bf16.mxu0 0
        %2091 = vmatmul.mubr.bf16.gmra.mxu0 %v1887
        %v2092 = vpop.f32.mrf.mxu0
        %v2093 = vadd.f32 0.0, %v2092
        %v2094 = vpop.f32.mrf.mxu0
        %v2095 = vadd.f32 0.0, %v2094
        %v2096 = vpop.f32.mrf.mxu0
        %v2097 = vadd.f32 0.0, %v2096
        %v2098 = vpop.f32.mrf.mxu0
        %v2099 = vadd.f32 0.0, %v2098
        %2100 = vmatprep.mubr.bf16.mxu0 0
        %2101 = vmatmul.mubr.bf16.gmra.mxu0 %v1890
        %v2102 = vpop.f32.mrf.mxu0
        %v2103 = vadd.f32 0.0, %v2102
        %v2104 = vpop.f32.mrf.mxu0
        %v2105 = vadd.f32 0.0, %v2104
        %v2106 = vpop.f32.mrf.mxu0
        %v2107 = vadd.f32 0.0, %v2106
        %v2108 = vpop.f32.mrf.mxu0
        %v2109 = vadd.f32 0.0, %v2108
        %2110 = vmatprep.mubr.bf16.mxu0 0
        %2111 = vmatmul.mubr.bf16.gmra.mxu0 %v1893
        %v2112 = vpop.f32.mrf.mxu0
        %v2113 = vadd.f32 0.0, %v2112
        %v2114 = vpop.f32.mrf.mxu0
        %v2115 = vadd.f32 0.0, %v2114
        %v2116 = vpop.f32.mrf.mxu0
        %v2117 = vadd.f32 0.0, %v2116
        %v2118 = vpop.f32.mrf.mxu0
        %v2119 = vadd.f32 0.0, %v2118
        %2120 = vmatprep.mubr.bf16.mxu0 0
        %2121 = vmatmul.mubr.bf16.gmra.mxu0 %v2050
        %v2122 = vpop.f32.mrf.mxu0
        %v2123 = vadd.f32 0.0, %v2122
        %v2124 = vpop.f32.mrf.mxu0
        %v2125 = vadd.f32 0.0, %v2124
        %v2126 = vpop.f32.mrf.mxu0
        %v2127 = vadd.f32 0.0, %v2126
        %v2128 = vpop.f32.mrf.mxu0
        %v2129 = vadd.f32 0.0, %v2128
        %2130 = vdwg.mxu0
        %v2131 = vadd.f32 %v1936, %v2093
        %v2132 = vadd.f32 %v1938, %v2095
        %v2133 = vadd.f32 %v1940, %v2097
        %v2134 = vadd.f32 %v1942, %v2099
        %v2135 = vadd.f32 %v1946, %v2103
        %v2136 = vadd.f32 %v1948, %v2105
        %v2137 = vadd.f32 %v1950, %v2107
        %v2138 = vadd.f32 %v1952, %v2109
        %v2139 = vadd.f32 %v1956, %v2113
        %v2140 = vadd.f32 %v1958, %v2115
        %v2141 = vadd.f32 %v1960, %v2117
        %v2142 = vadd.f32 %v1962, %v2119
        %v2143 = vadd.f32 %v1966, %v2123
        %v2144 = vadd.f32 %v1968, %v2125
        %v2145 = vadd.f32 %v1970, %v2127
        %v2146 = vadd.f32 %v1972, %v2129
        %v2162 = vunpack.c.l.b16 %v624
        %v2163 = vunpack.c.h.b16 %v624
        %v2164 = vunpack.c.l.b16 %v625
        %v2165 = vunpack.c.h.b16 %v625
        %v2166 = vunpack.c.l.b16 %v626
        %v2167 = vunpack.c.h.b16 %v626
        %v2168 = vunpack.c.l.b16 %v627
        %v2169 = vunpack.c.h.b16 %v627
        %v2170 = vunpack.c.l.b16 %v628
        %v2171 = vunpack.c.h.b16 %v628
        %v2172 = vunpack.c.l.b16 %v629
        %v2173 = vunpack.c.h.b16 %v629
        %v2174 = vunpack.c.l.b16 %v630
        %v2175 = vunpack.c.h.b16 %v630
        %v2176 = vunpack.c.l.b16 %v631
        %v2177 = vunpack.c.h.b16 %v631
        %v2178 = vunpack.c.l.b16 %v632
        %v2179 = vunpack.c.h.b16 %v632
        %v2180 = vunpack.c.l.b16 %v633
        %v2181 = vunpack.c.h.b16 %v633
        %v2182 = vunpack.c.l.b16 %v634
        %v2183 = vunpack.c.h.b16 %v634
        %v2184 = vunpack.c.l.b16 %v635
        %v2185 = vunpack.c.h.b16 %v635
        %v2186 = vunpack.c.l.b16 %v636
        %v2187 = vunpack.c.h.b16 %v636
        %v2188 = vunpack.c.l.b16 %v637
        %v2189 = vunpack.c.h.b16 %v637
        %v2190 = vunpack.c.l.b16 %v638
        %v2191 = vunpack.c.h.b16 %v638
        %v2192 = vpack.c.b16 %v2164, %v2162
        %v2193 = vpack.c.b16 %v2165, %v2163
        %v2194 = vpack.c.b16 %v2168, %v2166
        %v2195 = vpack.c.b16 %v2169, %v2167
        %v2196 = vpack.c.b16 %v2172, %v2170
        %v2197 = vpack.c.b16 %v2173, %v2171
        %v2198 = vpack.c.b16 %v2176, %v2174
        %v2199 = vpack.c.b16 %v2177, %v2175
        %v2200 = vpack.c.b16 %v2180, %v2178
        %v2201 = vpack.c.b16 %v2181, %v2179
        %v2202 = vpack.c.b16 %v2184, %v2182
        %v2203 = vpack.c.b16 %v2185, %v2183
        %v2204 = vpack.c.b16 %v2188, %v2186
        %v2205 = vpack.c.b16 %v2189, %v2187
        %v2206 = vpack.c.b16 %v2190, %v2190
        %v2207 = vpack.c.b16 %v2191, %v2191
        %v2223 = vsel %vm1715, %v1638, 0
        %v2226 = vsel %vm1728, %v2206, 0
        %v2229 = vsel %vm1728, %v2207, 0
        %2231 = vmatprep.subr.bf16.mxu0 %v2229
        %2232 = vmatpush1.bf16.msra.mxu0 %v2226
        %2233 = vmatprep.subr.bf16.mxu0 %v2205
        %2234 = vmatpush1.bf16.msra.mxu0 %v2204
        %2235 = vmatprep.subr.bf16.mxu0 %v2203
        %2236 = vmatpush1.bf16.msra.mxu0 %v2202
        %2237 = vmatprep.subr.bf16.mxu0 %v2201
        %2238 = vmatpush1.bf16.msra.mxu0 %v2200
        %2239 = vmatprep.subr.bf16.mxu0 %v2199
        %2240 = vmatpush1.bf16.msra.mxu0 %v2198
        %2241 = vmatprep.subr.bf16.mxu0 %v2197
        %2242 = vmatpush1.bf16.msra.mxu0 %v2196
        %2243 = vmatprep.subr.bf16.mxu0 %v2195
        %2244 = vmatpush1.bf16.msra.mxu0 %v2194
        %2245 = vmatprep.subr.bf16.mxu0 %v2193
        %2246 = vmatpush1.bf16.msra.mxu0 %v2192
        %2247 = vmatprep.subr.bf16.mxu0 0
        %2248 = vmatpush2.bf16.msra.mxu0 0
        %2249 = vmatprep.subr.bf16.mxu0 0
        %2250 = vmatpush2.bf16.msra.mxu0 0
        %2251 = vmatprep.subr.bf16.mxu0 0
        %2252 = vmatpush2.bf16.msra.mxu0 0
        %2253 = vmatprep.subr.bf16.mxu0 0
        %2254 = vmatpush2.bf16.msra.mxu0 0
        %2255 = vmatprep.subr.bf16.mxu0 0
        %2256 = vmatpush2.bf16.msra.mxu0 0
        %2257 = vmatprep.subr.bf16.mxu0 0
        %2258 = vmatpush2.bf16.msra.mxu0 0
        %2259 = vmatprep.subr.bf16.mxu0 0
        %2260 = vmatpush2.bf16.msra.mxu0 0
        %2261 = vmatprep.subr.bf16.mxu0 0
        %2262 = vmatpush2.bf16.msra.mxu0 0
        %2263 = vmatprep.mubr.bf16.mxu0 0
        %2264 = vmatmul.mubr.bf16.gmra.mxu0 %v1720
        %v2265 = vpop.f32.mrf.mxu0
        %v2266 = vadd.f32 0.0, %v2265
        %v2267 = vpop.f32.mrf.mxu0
        %v2268 = vadd.f32 0.0, %v2267
        %v2269 = vpop.f32.mrf.mxu0
        %v2270 = vadd.f32 0.0, %v2269
        %v2271 = vpop.f32.mrf.mxu0
        %v2272 = vadd.f32 0.0, %v2271
        %2273 = vmatprep.mubr.bf16.mxu0 0
        %2274 = vmatmul.mubr.bf16.gmra.mxu0 %v1723
        %v2275 = vpop.f32.mrf.mxu0
        %v2276 = vadd.f32 0.0, %v2275
        %v2277 = vpop.f32.mrf.mxu0
        %v2278 = vadd.f32 0.0, %v2277
        %v2279 = vpop.f32.mrf.mxu0
        %v2280 = vadd.f32 0.0, %v2279
        %v2281 = vpop.f32.mrf.mxu0
        %v2282 = vadd.f32 0.0, %v2281
        %2283 = vmatprep.mubr.bf16.mxu0 0
        %2284 = vmatmul.mubr.bf16.gmra.mxu0 %v1726
        %v2285 = vpop.f32.mrf.mxu0
        %v2286 = vadd.f32 0.0, %v2285
        %v2287 = vpop.f32.mrf.mxu0
        %v2288 = vadd.f32 0.0, %v2287
        %v2289 = vpop.f32.mrf.mxu0
        %v2290 = vadd.f32 0.0, %v2289
        %v2291 = vpop.f32.mrf.mxu0
        %v2292 = vadd.f32 0.0, %v2291
        %2293 = vmatprep.mubr.bf16.mxu0 0
        %2294 = vmatmul.mubr.bf16.gmra.mxu0 %v2223
        %v2295 = vpop.f32.mrf.mxu0
        %v2296 = vadd.f32 0.0, %v2295
        %v2297 = vpop.f32.mrf.mxu0
        %v2298 = vadd.f32 0.0, %v2297
        %v2299 = vpop.f32.mrf.mxu0
        %v2300 = vadd.f32 0.0, %v2299
        %v2301 = vpop.f32.mrf.mxu0
        %v2302 = vadd.f32 0.0, %v2301
        %2303 = vdwg.mxu0
        %v2304 = vadd.f32 %v2131, %v2266
        %v2305 = vadd.f32 %v2132, %v2268
        %v2306 = vadd.f32 %v2133, %v2270
        %v2307 = vadd.f32 %v2134, %v2272
        %v2308 = vadd.f32 %v2135, %v2276
        %v2309 = vadd.f32 %v2136, %v2278
        %v2310 = vadd.f32 %v2137, %v2280
        %v2311 = vadd.f32 %v2138, %v2282
        %v2312 = vadd.f32 %v2139, %v2286
        %v2313 = vadd.f32 %v2140, %v2288
        %v2314 = vadd.f32 %v2141, %v2290
        %v2315 = vadd.f32 %v2142, %v2292
        %v2316 = vadd.f32 %v2143, %v2296
        %v2317 = vadd.f32 %v2144, %v2298
        %v2318 = vadd.f32 %v2145, %v2300
        %v2319 = vadd.f32 %v2146, %v2302
        %v2335 = vunpack.c.l.b16 %v639
        %v2336 = vunpack.c.h.b16 %v639
        %v2337 = vunpack.c.l.b16 %v640
        %v2338 = vunpack.c.h.b16 %v640
        %v2339 = vunpack.c.l.b16 %v641
        %v2340 = vunpack.c.h.b16 %v641
        %v2341 = vunpack.c.l.b16 %v642
        %v2342 = vunpack.c.h.b16 %v642
        %v2343 = vunpack.c.l.b16 %v643
        %v2344 = vunpack.c.h.b16 %v643
        %v2345 = vunpack.c.l.b16 %v644
        %v2346 = vunpack.c.h.b16 %v644
        %v2347 = vunpack.c.l.b16 %v645
        %v2348 = vunpack.c.h.b16 %v645
        %v2349 = vunpack.c.l.b16 %v646
        %v2350 = vunpack.c.h.b16 %v646
        %v2351 = vunpack.c.l.b16 %v647
        %v2352 = vunpack.c.h.b16 %v647
        %v2353 = vunpack.c.l.b16 %v648
        %v2354 = vunpack.c.h.b16 %v648
        %v2355 = vunpack.c.l.b16 %v649
        %v2356 = vunpack.c.h.b16 %v649
        %v2357 = vunpack.c.l.b16 %v650
        %v2358 = vunpack.c.h.b16 %v650
        %v2359 = vunpack.c.l.b16 %v651
        %v2360 = vunpack.c.h.b16 %v651
        %v2361 = vunpack.c.l.b16 %v652
        %v2362 = vunpack.c.h.b16 %v652
        %v2363 = vunpack.c.l.b16 %v653
        %v2364 = vunpack.c.h.b16 %v653
        %v2365 = vpack.c.b16 %v2337, %v2335
        %v2366 = vpack.c.b16 %v2338, %v2336
        %v2367 = vpack.c.b16 %v2341, %v2339
        %v2368 = vpack.c.b16 %v2342, %v2340
        %v2369 = vpack.c.b16 %v2345, %v2343
        %v2370 = vpack.c.b16 %v2346, %v2344
        %v2371 = vpack.c.b16 %v2349, %v2347
        %v2372 = vpack.c.b16 %v2350, %v2348
        %v2373 = vpack.c.b16 %v2353, %v2351
        %v2374 = vpack.c.b16 %v2354, %v2352
        %v2375 = vpack.c.b16 %v2357, %v2355
        %v2376 = vpack.c.b16 %v2358, %v2356
        %v2377 = vpack.c.b16 %v2361, %v2359
        %v2378 = vpack.c.b16 %v2362, %v2360
        %v2379 = vpack.c.b16 %v2363, %v2363
        %v2380 = vpack.c.b16 %v2364, %v2364
        %v2396 = vsel %vm1715, %v1217, 0
        %v2399 = vsel %vm1728, %v2379, 0
        %v2402 = vsel %vm1728, %v2380, 0
        %2404 = vmatprep.subr.bf16.mxu0 %v2402
        %2405 = vmatpush1.bf16.msra.mxu0 %v2399
        %2406 = vmatprep.subr.bf16.mxu0 %v2378
        %2407 = vmatpush1.bf16.msra.mxu0 %v2377
        %2408 = vmatprep.subr.bf16.mxu0 %v2376
        %2409 = vmatpush1.bf16.msra.mxu0 %v2375
        %2410 = vmatprep.subr.bf16.mxu0 %v2374
        %2411 = vmatpush1.bf16.msra.mxu0 %v2373
        %2412 = vmatprep.subr.bf16.mxu0 %v2372
        %2413 = vmatpush1.bf16.msra.mxu0 %v2371
        %2414 = vmatprep.subr.bf16.mxu0 %v2370
        %2415 = vmatpush1.bf16.msra.mxu0 %v2369
        %2416 = vmatprep.subr.bf16.mxu0 %v2368
        %2417 = vmatpush1.bf16.msra.mxu0 %v2367
        %2418 = vmatprep.subr.bf16.mxu0 %v2366
        %2419 = vmatpush1.bf16.msra.mxu0 %v2365
        %2420 = vmatprep.subr.bf16.mxu0 0
        %2421 = vmatpush2.bf16.msra.mxu0 0
        %2422 = vmatprep.subr.bf16.mxu0 0
        %2423 = vmatpush2.bf16.msra.mxu0 0
        %2424 = vmatprep.subr.bf16.mxu0 0
        %2425 = vmatpush2.bf16.msra.mxu0 0
        %2426 = vmatprep.subr.bf16.mxu0 0
        %2427 = vmatpush2.bf16.msra.mxu0 0
        %2428 = vmatprep.subr.bf16.mxu0 0
        %2429 = vmatpush2.bf16.msra.mxu0 0
        %2430 = vmatprep.subr.bf16.mxu0 0
        %2431 = vmatpush2.bf16.msra.mxu0 0
        %2432 = vmatprep.subr.bf16.mxu0 0
        %2433 = vmatpush2.bf16.msra.mxu0 0
        %2434 = vmatprep.subr.bf16.mxu0 0
        %2435 = vmatpush2.bf16.msra.mxu0 0
        %2436 = vmatprep.mubr.bf16.mxu0 0
        %2437 = vmatmul.mubr.bf16.gmra.mxu0 %v1890
        %v2438 = vpop.f32.mrf.mxu0
        %v2439 = vadd.f32 0.0, %v2438
        %v2440 = vpop.f32.mrf.mxu0
        %v2441 = vadd.f32 0.0, %v2440
        %v2442 = vpop.f32.mrf.mxu0
        %v2443 = vadd.f32 0.0, %v2442
        %v2444 = vpop.f32.mrf.mxu0
        %v2445 = vadd.f32 0.0, %v2444
        %2446 = vmatprep.mubr.bf16.mxu0 0
        %2447 = vmatmul.mubr.bf16.gmra.mxu0 %v1893
        %v2448 = vpop.f32.mrf.mxu0
        %v2449 = vadd.f32 0.0, %v2448
        %v2450 = vpop.f32.mrf.mxu0
        %v2451 = vadd.f32 0.0, %v2450
        %v2452 = vpop.f32.mrf.mxu0
        %v2453 = vadd.f32 0.0, %v2452
        %v2454 = vpop.f32.mrf.mxu0
        %v2455 = vadd.f32 0.0, %v2454
        %2456 = vmatprep.mubr.bf16.mxu0 0
        %2457 = vmatmul.mubr.bf16.gmra.mxu0 %v2050
        %v2458 = vpop.f32.mrf.mxu0
        %v2459 = vadd.f32 0.0, %v2458
        %v2460 = vpop.f32.mrf.mxu0
        %v2461 = vadd.f32 0.0, %v2460
        %v2462 = vpop.f32.mrf.mxu0
        %v2463 = vadd.f32 0.0, %v2462
        %v2464 = vpop.f32.mrf.mxu0
        %v2465 = vadd.f32 0.0, %v2464
        %2466 = vmatprep.mubr.bf16.mxu0 0
        %2467 = vmatmul.mubr.bf16.gmra.mxu0 %v2396
        %v2468 = vpop.f32.mrf.mxu0
        %v2469 = vadd.f32 0.0, %v2468
        %v2470 = vpop.f32.mrf.mxu0
        %v2471 = vadd.f32 0.0, %v2470
        %v2472 = vpop.f32.mrf.mxu0
        %v2473 = vadd.f32 0.0, %v2472
        %v2474 = vpop.f32.mrf.mxu0
        %v2475 = vadd.f32 0.0, %v2474
        %2476 = vdwg.mxu0
        %v2477 = vadd.f32 %v2304, %v2439
        %v2478 = vadd.f32 %v2305, %v2441
        %v2479 = vadd.f32 %v2306, %v2443
        %v2480 = vadd.f32 %v2307, %v2445
        %v2481 = vadd.f32 %v2308, %v2449
        %v2482 = vadd.f32 %v2309, %v2451
        %v2483 = vadd.f32 %v2310, %v2453
        %v2484 = vadd.f32 %v2311, %v2455
        %v2485 = vadd.f32 %v2312, %v2459
        %v2486 = vadd.f32 %v2313, %v2461
        %v2487 = vadd.f32 %v2314, %v2463
        %v2488 = vadd.f32 %v2315, %v2465
        %v2489 = vadd.f32 %v2316, %v2469
        %v2490 = vadd.f32 %v2317, %v2471
        %v2491 = vadd.f32 %v2318, %v2473
        %v2492 = vadd.f32 %v2319, %v2475
        %2493 = vmatprep.subr.bf16.mxu0 %v1733
        %2494 = vmatpush1.bf16.msra.mxu0 %v1730
        %2495 = vmatprep.subr.bf16.mxu0 %v1698
        %2496 = vmatpush1.bf16.msra.mxu0 %v1697
        %2497 = vmatprep.subr.bf16.mxu0 %v1696
        %2498 = vmatpush1.bf16.msra.mxu0 %v1695
        %2499 = vmatprep.subr.bf16.mxu0 %v1694
        %2500 = vmatpush1.bf16.msra.mxu0 %v1693
        %2501 = vmatprep.subr.bf16.mxu0 %v1692
        %2502 = vmatpush1.bf16.msra.mxu0 %v1691
        %2503 = vmatprep.subr.bf16.mxu0 %v1690
        %2504 = vmatpush1.bf16.msra.mxu0 %v1689
        %2505 = vmatprep.subr.bf16.mxu0 %v1688
        %2506 = vmatpush1.bf16.msra.mxu0 %v1687
        %2507 = vmatprep.subr.bf16.mxu0 %v1686
        %2508 = vmatpush1.bf16.msra.mxu0 %v1685
        %2509 = vmatprep.subr.bf16.mxu0 0
        %2510 = vmatpush2.bf16.msra.mxu0 0
        %2511 = vmatprep.subr.bf16.mxu0 0
        %2512 = vmatpush2.bf16.msra.mxu0 0
        %2513 = vmatprep.subr.bf16.mxu0 0
        %2514 = vmatpush2.bf16.msra.mxu0 0
        %2515 = vmatprep.subr.bf16.mxu0 0
        %2516 = vmatpush2.bf16.msra.mxu0 0
        %2517 = vmatprep.subr.bf16.mxu0 0
        %2518 = vmatpush2.bf16.msra.mxu0 0
        %2519 = vmatprep.subr.bf16.mxu0 0
        %2520 = vmatpush2.bf16.msra.mxu0 0
        %2521 = vmatprep.subr.bf16.mxu0 0
        %2522 = vmatpush2.bf16.msra.mxu0 0
        %2523 = vmatprep.subr.bf16.mxu0 0
        %2524 = vmatpush2.bf16.msra.mxu0 0
        %2525 = vmatprep.mubr.bf16.mxu0 0
        %2526 = vmatmul.mubr.bf16.gmra.mxu0 %v1887
        %v2527 = vpop.f32.mrf.mxu0
        %v2528 = vadd.f32 0.0, %v2527
        %v2529 = vpop.f32.mrf.mxu0
        %v2530 = vadd.f32 0.0, %v2529
        %v2531 = vpop.f32.mrf.mxu0
        %v2532 = vadd.f32 0.0, %v2531
        %v2533 = vpop.f32.mrf.mxu0
        %v2534 = vadd.f32 0.0, %v2533
        %2535 = vmatprep.mubr.bf16.mxu0 0
        %2536 = vmatmul.mubr.bf16.gmra.mxu0 %v1890
        %v2537 = vpop.f32.mrf.mxu0
        %v2538 = vadd.f32 0.0, %v2537
        %v2539 = vpop.f32.mrf.mxu0
        %v2540 = vadd.f32 0.0, %v2539
        %v2541 = vpop.f32.mrf.mxu0
        %v2542 = vadd.f32 0.0, %v2541
        %v2543 = vpop.f32.mrf.mxu0
        %v2544 = vadd.f32 0.0, %v2543
        %2545 = vmatprep.mubr.bf16.mxu0 0
        %2546 = vmatmul.mubr.bf16.gmra.mxu0 %v1893
        %v2547 = vpop.f32.mrf.mxu0
        %v2548 = vadd.f32 0.0, %v2547
        %v2549 = vpop.f32.mrf.mxu0
        %v2550 = vadd.f32 0.0, %v2549
        %v2551 = vpop.f32.mrf.mxu0
        %v2552 = vadd.f32 0.0, %v2551
        %v2553 = vpop.f32.mrf.mxu0
        %v2554 = vadd.f32 0.0, %v2553
        %2555 = vmatprep.mubr.bf16.mxu0 0
        %2556 = vmatmul.mubr.bf16.gmra.mxu0 %v2050
        %v2557 = vpop.f32.mrf.mxu0
        %v2558 = vadd.f32 0.0, %v2557
        %v2559 = vpop.f32.mrf.mxu0
        %v2560 = vadd.f32 0.0, %v2559
        %v2561 = vpop.f32.mrf.mxu0
        %v2562 = vadd.f32 0.0, %v2561
        %v2563 = vpop.f32.mrf.mxu0
        %v2564 = vadd.f32 0.0, %v2563
        %2565 = vdwg.mxu0
        %2566 = vmatprep.subr.bf16.mxu0 %v1899
        %2567 = vmatpush1.bf16.msra.mxu0 %v1896
        %2568 = vmatprep.subr.bf16.mxu0 %v1866
        %2569 = vmatpush1.bf16.msra.mxu0 %v1865
        %2570 = vmatprep.subr.bf16.mxu0 %v1864
        %2571 = vmatpush1.bf16.msra.mxu0 %v1863
        %2572 = vmatprep.subr.bf16.mxu0 %v1862
        %2573 = vmatpush1.bf16.msra.mxu0 %v1861
        %2574 = vmatprep.subr.bf16.mxu0 %v1860
        %2575 = vmatpush1.bf16.msra.mxu0 %v1859
        %2576 = vmatprep.subr.bf16.mxu0 %v1858
        %2577 = vmatpush1.bf16.msra.mxu0 %v1857
        %2578 = vmatprep.subr.bf16.mxu0 %v1856
        %2579 = vmatpush1.bf16.msra.mxu0 %v1855
        %2580 = vmatprep.subr.bf16.mxu0 %v1854
        %2581 = vmatpush1.bf16.msra.mxu0 %v1853
        %2582 = vmatprep.subr.bf16.mxu0 0
        %2583 = vmatpush2.bf16.msra.mxu0 0
        %2584 = vmatprep.subr.bf16.mxu0 0
        %2585 = vmatpush2.bf16.msra.mxu0 0
        %2586 = vmatprep.subr.bf16.mxu0 0
        %2587 = vmatpush2.bf16.msra.mxu0 0
        %2588 = vmatprep.subr.bf16.mxu0 0
        %2589 = vmatpush2.bf16.msra.mxu0 0
        %2590 = vmatprep.subr.bf16.mxu0 0
        %2591 = vmatpush2.bf16.msra.mxu0 0
        %2592 = vmatprep.subr.bf16.mxu0 0
        %2593 = vmatpush2.bf16.msra.mxu0 0
        %2594 = vmatprep.subr.bf16.mxu0 0
        %2595 = vmatpush2.bf16.msra.mxu0 0
        %2596 = vmatprep.subr.bf16.mxu0 0
        %2597 = vmatpush2.bf16.msra.mxu0 0
        %2598 = vmatprep.mubr.bf16.mxu0 0
        %2599 = vmatmul.mubr.bf16.gmra.mxu0 %v1717
        %v2600 = vpop.f32.mrf.mxu0
        %v2601 = vadd.f32 %v2528, %v2600
        %v2602 = vpop.f32.mrf.mxu0
        %v2603 = vadd.f32 %v2530, %v2602
        %v2604 = vpop.f32.mrf.mxu0
        %v2605 = vadd.f32 %v2532, %v2604
        %v2606 = vpop.f32.mrf.mxu0
        %v2607 = vadd.f32 %v2534, %v2606
        %2608 = vmatprep.mubr.bf16.mxu0 0
        %2609 = vmatmul.mubr.bf16.gmra.mxu0 %v1720
        %v2610 = vpop.f32.mrf.mxu0
        %v2611 = vadd.f32 %v2538, %v2610
        %v2612 = vpop.f32.mrf.mxu0
        %v2613 = vadd.f32 %v2540, %v2612
        %v2614 = vpop.f32.mrf.mxu0
        %v2615 = vadd.f32 %v2542, %v2614
        %v2616 = vpop.f32.mrf.mxu0
        %v2617 = vadd.f32 %v2544, %v2616
        %2618 = vmatprep.mubr.bf16.mxu0 0
        %2619 = vmatmul.mubr.bf16.gmra.mxu0 %v1723
        %v2620 = vpop.f32.mrf.mxu0
        %v2621 = vadd.f32 %v2548, %v2620
        %v2622 = vpop.f32.mrf.mxu0
        %v2623 = vadd.f32 %v2550, %v2622
        %v2624 = vpop.f32.mrf.mxu0
        %v2625 = vadd.f32 %v2552, %v2624
        %v2626 = vpop.f32.mrf.mxu0
        %v2627 = vadd.f32 %v2554, %v2626
        %2628 = vmatprep.mubr.bf16.mxu0 0
        %2629 = vmatmul.mubr.bf16.gmra.mxu0 %v1726
        %v2630 = vpop.f32.mrf.mxu0
        %v2631 = vadd.f32 %v2558, %v2630
        %v2632 = vpop.f32.mrf.mxu0
        %v2633 = vadd.f32 %v2560, %v2632
        %v2634 = vpop.f32.mrf.mxu0
        %v2635 = vadd.f32 %v2562, %v2634
        %v2636 = vpop.f32.mrf.mxu0
        %v2637 = vadd.f32 %v2564, %v2636
        %2638 = vdwg.mxu0
        %2639 = vmatprep.subr.bf16.mxu0 %v2056
        %2640 = vmatpush1.bf16.msra.mxu0 %v2053
        %2641 = vmatprep.subr.bf16.mxu0 %v2032
        %2642 = vmatpush1.bf16.msra.mxu0 %v2031
        %2643 = vmatprep.subr.bf16.mxu0 %v2030
        %2644 = vmatpush1.bf16.msra.mxu0 %v2029
        %2645 = vmatprep.subr.bf16.mxu0 %v2028
        %2646 = vmatpush1.bf16.msra.mxu0 %v2027
        %2647 = vmatprep.subr.bf16.mxu0 %v2026
        %2648 = vmatpush1.bf16.msra.mxu0 %v2025
        %2649 = vmatprep.subr.bf16.mxu0 %v2024
        %2650 = vmatpush1.bf16.msra.mxu0 %v2023
        %2651 = vmatprep.subr.bf16.mxu0 %v2022
        %2652 = vmatpush1.bf16.msra.mxu0 %v2021
        %2653 = vmatprep.subr.bf16.mxu0 %v2020
        %2654 = vmatpush1.bf16.msra.mxu0 %v2019
        %2655 = vmatprep.subr.bf16.mxu0 0
        %2656 = vmatpush2.bf16.msra.mxu0 0
        %2657 = vmatprep.subr.bf16.mxu0 0
        %2658 = vmatpush2.bf16.msra.mxu0 0
        %2659 = vmatprep.subr.bf16.mxu0 0
        %2660 = vmatpush2.bf16.msra.mxu0 0
        %2661 = vmatprep.subr.bf16.mxu0 0
        %2662 = vmatpush2.bf16.msra.mxu0 0
        %2663 = vmatprep.subr.bf16.mxu0 0
        %2664 = vmatpush2.bf16.msra.mxu0 0
        %2665 = vmatprep.subr.bf16.mxu0 0
        %2666 = vmatpush2.bf16.msra.mxu0 0
        %2667 = vmatprep.subr.bf16.mxu0 0
        %2668 = vmatpush2.bf16.msra.mxu0 0
        %2669 = vmatprep.subr.bf16.mxu0 0
        %2670 = vmatpush2.bf16.msra.mxu0 0
        %2671 = vmatprep.mubr.bf16.mxu0 0
        %2672 = vmatmul.mubr.bf16.gmra.mxu0 %v1720
        %v2673 = vpop.f32.mrf.mxu0
        %v2674 = vadd.f32 0.0, %v2673
        %v2675 = vpop.f32.mrf.mxu0
        %v2676 = vadd.f32 0.0, %v2675
        %v2677 = vpop.f32.mrf.mxu0
        %v2678 = vadd.f32 0.0, %v2677
        %v2679 = vpop.f32.mrf.mxu0
        %v2680 = vadd.f32 0.0, %v2679
        %2681 = vmatprep.mubr.bf16.mxu0 0
        %2682 = vmatmul.mubr.bf16.gmra.mxu0 %v1723
        %v2683 = vpop.f32.mrf.mxu0
        %v2684 = vadd.f32 0.0, %v2683
        %v2685 = vpop.f32.mrf.mxu0
        %v2686 = vadd.f32 0.0, %v2685
        %v2687 = vpop.f32.mrf.mxu0
        %v2688 = vadd.f32 0.0, %v2687
        %v2689 = vpop.f32.mrf.mxu0
        %v2690 = vadd.f32 0.0, %v2689
        %2691 = vmatprep.mubr.bf16.mxu0 0
        %2692 = vmatmul.mubr.bf16.gmra.mxu0 %v1726
        %v2693 = vpop.f32.mrf.mxu0
        %v2694 = vadd.f32 0.0, %v2693
        %v2695 = vpop.f32.mrf.mxu0
        %v2696 = vadd.f32 0.0, %v2695
        %v2697 = vpop.f32.mrf.mxu0
        %v2698 = vadd.f32 0.0, %v2697
        %v2699 = vpop.f32.mrf.mxu0
        %v2700 = vadd.f32 0.0, %v2699
        %2701 = vmatprep.mubr.bf16.mxu0 0
        %2702 = vmatmul.mubr.bf16.gmra.mxu0 %v2223
        %v2703 = vpop.f32.mrf.mxu0
        %v2704 = vadd.f32 0.0, %v2703
        %v2705 = vpop.f32.mrf.mxu0
        %v2706 = vadd.f32 0.0, %v2705
        %v2707 = vpop.f32.mrf.mxu0
        %v2708 = vadd.f32 0.0, %v2707
        %v2709 = vpop.f32.mrf.mxu0
        %v2710 = vadd.f32 0.0, %v2709
        %2711 = vdwg.mxu0
        %v2712 = vadd.f32 %v2601, %v2674
        %v2713 = vadd.f32 %v2603, %v2676
        %v2714 = vadd.f32 %v2605, %v2678
        %v2715 = vadd.f32 %v2607, %v2680
        %v2716 = vadd.f32 %v2611, %v2684
        %v2717 = vadd.f32 %v2613, %v2686
        %v2718 = vadd.f32 %v2615, %v2688
        %v2719 = vadd.f32 %v2617, %v2690
        %v2720 = vadd.f32 %v2621, %v2694
        %v2721 = vadd.f32 %v2623, %v2696
        %v2722 = vadd.f32 %v2625, %v2698
        %v2723 = vadd.f32 %v2627, %v2700
        %v2724 = vadd.f32 %v2631, %v2704
        %v2725 = vadd.f32 %v2633, %v2706
        %v2726 = vadd.f32 %v2635, %v2708
        %v2727 = vadd.f32 %v2637, %v2710
        %2728 = vmatprep.subr.bf16.mxu0 %v2229
        %2729 = vmatpush1.bf16.msra.mxu0 %v2226
        %2730 = vmatprep.subr.bf16.mxu0 %v2205
        %2731 = vmatpush1.bf16.msra.mxu0 %v2204
        %2732 = vmatprep.subr.bf16.mxu0 %v2203
        %2733 = vmatpush1.bf16.msra.mxu0 %v2202
        %2734 = vmatprep.subr.bf16.mxu0 %v2201
        %2735 = vmatpush1.bf16.msra.mxu0 %v2200
        %2736 = vmatprep.subr.bf16.mxu0 %v2199
        %2737 = vmatpush1.bf16.msra.mxu0 %v2198
        %2738 = vmatprep.subr.bf16.mxu0 %v2197
        %2739 = vmatpush1.bf16.msra.mxu0 %v2196
        %2740 = vmatprep.subr.bf16.mxu0 %v2195
        %2741 = vmatpush1.bf16.msra.mxu0 %v2194
        %2742 = vmatprep.subr.bf16.mxu0 %v2193
        %2743 = vmatpush1.bf16.msra.mxu0 %v2192
        %2744 = vmatprep.subr.bf16.mxu0 0
        %2745 = vmatpush2.bf16.msra.mxu0 0
        %2746 = vmatprep.subr.bf16.mxu0 0
        %2747 = vmatpush2.bf16.msra.mxu0 0
        %2748 = vmatprep.subr.bf16.mxu0 0
        %2749 = vmatpush2.bf16.msra.mxu0 0
        %2750 = vmatprep.subr.bf16.mxu0 0
        %2751 = vmatpush2.bf16.msra.mxu0 0
        %2752 = vmatprep.subr.bf16.mxu0 0
        %2753 = vmatpush2.bf16.msra.mxu0 0
        %2754 = vmatprep.subr.bf16.mxu0 0
        %2755 = vmatpush2.bf16.msra.mxu0 0
        %2756 = vmatprep.subr.bf16.mxu0 0
        %2757 = vmatpush2.bf16.msra.mxu0 0
        %2758 = vmatprep.subr.bf16.mxu0 0
        %2759 = vmatpush2.bf16.msra.mxu0 0
        %2760 = vmatprep.mubr.bf16.mxu0 0
        %2761 = vmatmul.mubr.bf16.gmra.mxu0 %v1890
        %v2762 = vpop.f32.mrf.mxu0
        %v2763 = vadd.f32 0.0, %v2762
        %v2764 = vpop.f32.mrf.mxu0
        %v2765 = vadd.f32 0.0, %v2764
        %v2766 = vpop.f32.mrf.mxu0
        %v2767 = vadd.f32 0.0, %v2766
        %v2768 = vpop.f32.mrf.mxu0
        %v2769 = vadd.f32 0.0, %v2768
        %2770 = vmatprep.mubr.bf16.mxu0 0
        %2771 = vmatmul.mubr.bf16.gmra.mxu0 %v1893
        %v2772 = vpop.f32.mrf.mxu0
        %v2773 = vadd.f32 0.0, %v2772
        %v2774 = vpop.f32.mrf.mxu0
        %v2775 = vadd.f32 0.0, %v2774
        %v2776 = vpop.f32.mrf.mxu0
        %v2777 = vadd.f32 0.0, %v2776
        %v2778 = vpop.f32.mrf.mxu0
        %v2779 = vadd.f32 0.0, %v2778
        %2780 = vmatprep.mubr.bf16.mxu0 0
        %2781 = vmatmul.mubr.bf16.gmra.mxu0 %v2050
        %v2782 = vpop.f32.mrf.mxu0
        %v2783 = vadd.f32 0.0, %v2782
        %v2784 = vpop.f32.mrf.mxu0
        %v2785 = vadd.f32 0.0, %v2784
        %v2786 = vpop.f32.mrf.mxu0
        %v2787 = vadd.f32 0.0, %v2786
        %v2788 = vpop.f32.mrf.mxu0
        %v2789 = vadd.f32 0.0, %v2788
        %2790 = vmatprep.mubr.bf16.mxu0 0
        %2791 = vmatmul.mubr.bf16.gmra.mxu0 %v2396
        %v2792 = vpop.f32.mrf.mxu0
        %v2793 = vadd.f32 0.0, %v2792
        %v2794 = vpop.f32.mrf.mxu0
        %v2795 = vadd.f32 0.0, %v2794
        %v2796 = vpop.f32.mrf.mxu0
        %v2797 = vadd.f32 0.0, %v2796
        %v2798 = vpop.f32.mrf.mxu0
        %v2799 = vadd.f32 0.0, %v2798
        %2800 = vdwg.mxu0
        %v2801 = vadd.f32 %v2712, %v2763
        %v2802 = vadd.f32 %v2713, %v2765
        %v2803 = vadd.f32 %v2714, %v2767
        %v2804 = vadd.f32 %v2715, %v2769
        %v2805 = vadd.f32 %v2716, %v2773
        %v2806 = vadd.f32 %v2717, %v2775
        %v2807 = vadd.f32 %v2718, %v2777
        %v2808 = vadd.f32 %v2719, %v2779
        %v2809 = vadd.f32 %v2720, %v2783
        %v2810 = vadd.f32 %v2721, %v2785
        %v2811 = vadd.f32 %v2722, %v2787
        %v2812 = vadd.f32 %v2723, %v2789
        %v2813 = vadd.f32 %v2724, %v2793
        %v2814 = vadd.f32 %v2725, %v2795
        %v2815 = vadd.f32 %v2726, %v2797
        %v2816 = vadd.f32 %v2727, %v2799
        %v2818 = vsel %vm1715, %v1639, 0
        %2820 = vmatprep.subr.bf16.mxu0 %v2402
        %2821 = vmatpush1.bf16.msra.mxu0 %v2399
        %2822 = vmatprep.subr.bf16.mxu0 %v2378
        %2823 = vmatpush1.bf16.msra.mxu0 %v2377
        %2824 = vmatprep.subr.bf16.mxu0 %v2376
        %2825 = vmatpush1.bf16.msra.mxu0 %v2375
        %2826 = vmatprep.subr.bf16.mxu0 %v2374
        %2827 = vmatpush1.bf16.msra.mxu0 %v2373
        %2828 = vmatprep.subr.bf16.mxu0 %v2372
        %2829 = vmatpush1.bf16.msra.mxu0 %v2371
        %2830 = vmatprep.subr.bf16.mxu0 %v2370
        %2831 = vmatpush1.bf16.msra.mxu0 %v2369
        %2832 = vmatprep.subr.bf16.mxu0 %v2368
        %2833 = vmatpush1.bf16.msra.mxu0 %v2367
        %2834 = vmatprep.subr.bf16.mxu0 %v2366
        %2835 = vmatpush1.bf16.msra.mxu0 %v2365
        %2836 = vmatprep.subr.bf16.mxu0 0
        %2837 = vmatpush2.bf16.msra.mxu0 0
        %2838 = vmatprep.subr.bf16.mxu0 0
        %2839 = vmatpush2.bf16.msra.mxu0 0
        %2840 = vmatprep.subr.bf16.mxu0 0
        %2841 = vmatpush2.bf16.msra.mxu0 0
        %2842 = vmatprep.subr.bf16.mxu0 0
        %2843 = vmatpush2.bf16.msra.mxu0 0
        %2844 = vmatprep.subr.bf16.mxu0 0
        %2845 = vmatpush2.bf16.msra.mxu0 0
        %2846 = vmatprep.subr.bf16.mxu0 0
        %2847 = vmatpush2.bf16.msra.mxu0 0
        %2848 = vmatprep.subr.bf16.mxu0 0
        %2849 = vmatpush2.bf16.msra.mxu0 0
        %2850 = vmatprep.subr.bf16.mxu0 0
        %2851 = vmatpush2.bf16.msra.mxu0 0
        %2852 = vmatprep.mubr.bf16.mxu0 0
        %2853 = vmatmul.mubr.bf16.gmra.mxu0 %v1723
        %v2854 = vpop.f32.mrf.mxu0
        %v2855 = vadd.f32 0.0, %v2854
        %v2856 = vpop.f32.mrf.mxu0
        %v2857 = vadd.f32 0.0, %v2856
        %v2858 = vpop.f32.mrf.mxu0
        %v2859 = vadd.f32 0.0, %v2858
        %v2860 = vpop.f32.mrf.mxu0
        %v2861 = vadd.f32 0.0, %v2860
        %2862 = vmatprep.mubr.bf16.mxu0 0
        %2863 = vmatmul.mubr.bf16.gmra.mxu0 %v1726
        %v2864 = vpop.f32.mrf.mxu0
        %v2865 = vadd.f32 0.0, %v2864
        %v2866 = vpop.f32.mrf.mxu0
        %v2867 = vadd.f32 0.0, %v2866
        %v2868 = vpop.f32.mrf.mxu0
        %v2869 = vadd.f32 0.0, %v2868
        %v2870 = vpop.f32.mrf.mxu0
        %v2871 = vadd.f32 0.0, %v2870
        %2872 = vmatprep.mubr.bf16.mxu0 0
        %2873 = vmatmul.mubr.bf16.gmra.mxu0 %v2223
        %v2874 = vpop.f32.mrf.mxu0
        %v2875 = vadd.f32 0.0, %v2874
        %v2876 = vpop.f32.mrf.mxu0
        %v2877 = vadd.f32 0.0, %v2876
        %v2878 = vpop.f32.mrf.mxu0
        %v2879 = vadd.f32 0.0, %v2878
        %v2880 = vpop.f32.mrf.mxu0
        %v2881 = vadd.f32 0.0, %v2880
        %2882 = vmatprep.mubr.bf16.mxu0 0
        %2883 = vmatmul.mubr.bf16.gmra.mxu0 %v2818
        %v2884 = vpop.f32.mrf.mxu0
        %v2885 = vadd.f32 0.0, %v2884
        %v2886 = vpop.f32.mrf.mxu0
        %v2887 = vadd.f32 0.0, %v2886
        %v2888 = vpop.f32.mrf.mxu0
        %v2889 = vadd.f32 0.0, %v2888
        %v2890 = vpop.f32.mrf.mxu0
        %v2891 = vadd.f32 0.0, %v2890
        %2892 = vdwg.mxu0
        %v2893 = vadd.f32 %v2801, %v2855
        %v2894 = vadd.f32 %v2802, %v2857
        %v2895 = vadd.f32 %v2803, %v2859
        %v2896 = vadd.f32 %v2804, %v2861
        %v2897 = vadd.f32 %v2805, %v2865
        %v2898 = vadd.f32 %v2806, %v2867
        %v2899 = vadd.f32 %v2807, %v2869
        %v2900 = vadd.f32 %v2808, %v2871
        %v2901 = vadd.f32 %v2809, %v2875
        %v2902 = vadd.f32 %v2810, %v2877
        %v2903 = vadd.f32 %v2811, %v2879
        %v2904 = vadd.f32 %v2812, %v2881
        %v2905 = vadd.f32 %v2813, %v2885
        %v2906 = vadd.f32 %v2814, %v2887
        %v2907 = vadd.f32 %v2815, %v2889
        %v2908 = vadd.f32 %v2816, %v2891
        %v2909 = vmax.f32 %v2477, %v2893
        %v2910 = vmax.f32 %v2478, %v2894
        %v2911 = vmax.f32 %v2479, %v2895
        %v2912 = vmax.f32 %v2480, %v2896
        %v2913 = vmax.f32 %v2481, %v2897
        %v2914 = vmax.f32 %v2482, %v2898
        %v2915 = vmax.f32 %v2483, %v2899
        %v2916 = vmax.f32 %v2484, %v2900
        %v2917 = vmax.f32 %v2485, %v2901
        %v2918 = vmax.f32 %v2486, %v2902
        %v2919 = vmax.f32 %v2487, %v2903
        %v2920 = vmax.f32 %v2488, %v2904
        %v2921 = vmax.f32 %v2489, %v2905
        %v2922 = vmax.f32 %v2490, %v2906
        %v2923 = vmax.f32 %v2491, %v2907
        %v2924 = vmax.f32 %v2492, %v2908
        %v2925 = vmax.f32 %v2909, %v2910
        %v2926 = vmax.f32 %v2911, %v2912
        %v2927 = vmax.f32 %v2913, %v2914
        %v2928 = vmax.f32 %v2915, %v2916
        %v2929 = vmax.f32 %v2917, %v2918
        %v2930 = vmax.f32 %v2919, %v2920
        %v2931 = vmax.f32 %v2921, %v2922
        %v2932 = vmax.f32 %v2923, %v2924
        %v2933 = vld [vmem:[%s4] sm:$0x1]
        %v2935 = vlaneseq
        %v2936 = vshrl.u32 %v2935, 7
        %v2937 = vsub.s32 0, %v2936
        %v2938 = vrot.slane %v2933, %v2937
        %v2940 = vadd.f32 %v2925, %v2938
        %v2941 = vadd.f32 %v2926, %v2938
        %v2942 = vadd.f32 %v2927, %v2938
        %v2943 = vadd.f32 %v2928, %v2938
        %v2944 = vadd.f32 %v2929, %v2938
        %v2945 = vadd.f32 %v2930, %v2938
        %v2946 = vadd.f32 %v2931, %v2938
        %v2947 = vadd.f32 %v2932, %v2938
        %v2948 = vmax.f32 %v2940, 0.0
        %v2949 = vmax.f32 %v2941, 0.0
        %v2950 = vmax.f32 %v2942, 0.0
        %v2951 = vmax.f32 %v2943, 0.0
        %v2952 = vmax.f32 %v2944, 0.0
        %v2953 = vmax.f32 %v2945, 0.0
        %v2954 = vmax.f32 %v2946, 0.0
        %v2955 = vmax.f32 %v2947, 0.0
        %v2956 = vpack.c.bf16 %v2949, %v2948
        %v2957 = vpack.c.bf16 %v2951, %v2950
        %v2958 = vpack.c.bf16 %v2953, %v2952
        %v2959 = vpack.c.bf16 %v2955, %v2954
        %v2970 = vunpack.c.l.b16 %v664
        %v2971 = vunpack.c.l.b16 %v665
        %v2972 = vunpack.c.l.b16 %v666
        %v2973 = vunpack.c.l.b16 %v667
        %v2974 = vunpack.c.l.b16 %v668
        %v2975 = vunpack.c.l.b16 %v669
        %v2976 = vunpack.c.l.b16 %v670
        %v2977 = vunpack.c.l.b16 %v671
        %v2978 = vunpack.c.l.b16 %v672
        %v2979 = vunpack.c.l.b16 %v673
        %v2980 = vpack.c.b16 %v2971, %v2970
        %v2981 = vpack.c.b16 %v2973, %v2972
        %v2982 = vpack.c.b16 %v2975, %v2974
        %v2983 = vpack.c.b16 %v2977, %v2976
        %v2984 = vpack.c.b16 %v2979, %v2978
        %vm2990 = vcmask 654336
        %v2992 = vsel %vm2990, %v2957, 0
        %2994 = vmatprep.subr.bf16.mxu0 0
        %2995 = vmatpush1.bf16.msra.mxu0 0
        %2996 = vmatprep.subr.bf16.mxu0 0
        %2997 = vmatpush1.bf16.msra.mxu0 0
        %2998 = vmatprep.subr.bf16.mxu0 0
        %2999 = vmatpush1.bf16.msra.mxu0 0
        %3000 = vmatprep.subr.bf16.mxu0 0
        %3001 = vmatpush1.bf16.msra.mxu0 %v2984
        %3002 = vmatprep.subr.bf16.mxu0 0
        %3003 = vmatpush1.bf16.msra.mxu0 %v2983
        %3004 = vmatprep.subr.bf16.mxu0 0
        %3005 = vmatpush1.bf16.msra.mxu0 %v2982
        %3006 = vmatprep.subr.bf16.mxu0 0
        %3007 = vmatpush1.bf16.msra.mxu0 %v2981
        %3008 = vmatprep.subr.bf16.mxu0 0
        %3009 = vmatpush1.bf16.msra.mxu0 %v2980
        %3010 = vmatprep.subr.bf16.mxu0 0
        %3011 = vmatpush2.bf16.msra.mxu0 0
        %3012 = vmatprep.subr.bf16.mxu0 0
        %3013 = vmatpush2.bf16.msra.mxu0 0
        %3014 = vmatprep.subr.bf16.mxu0 0
        %3015 = vmatpush2.bf16.msra.mxu0 0
        %3016 = vmatprep.subr.bf16.mxu0 0
        %3017 = vmatpush2.bf16.msra.mxu0 0
        %3018 = vmatprep.subr.bf16.mxu0 0
        %3019 = vmatpush2.bf16.msra.mxu0 0
        %3020 = vmatprep.subr.bf16.mxu0 0
        %3021 = vmatpush2.bf16.msra.mxu0 0
        %3022 = vmatprep.subr.bf16.mxu0 0
        %3023 = vmatpush2.bf16.msra.mxu0 0
        %3024 = vmatprep.subr.bf16.mxu0 0
        %3025 = vmatpush2.bf16.msra.mxu0 0
        %3026 = vmatprep.mubr.bf16.mxu0 0
        %3027 = vmatmul.mubr.bf16.gmra.mxu0 %v2992
        %v3028 = vpop.f32.mrf.mxu0
        %v3029 = vadd.f32 0.0, %v3028
        %v3030 = vpop.f32.mrf.mxu0
        %v3031 = vpop.f32.mrf.mxu0
        %v3032 = vadd.f32 0.0, %v3031
        %v3033 = vpop.f32.mrf.mxu0
        %3034 = vdwg.mxu0
        %v3045 = vunpack.c.l.b16 %v654
        %v3046 = vunpack.c.l.b16 %v655
        %v3047 = vunpack.c.l.b16 %v656
        %v3048 = vunpack.c.l.b16 %v657
        %v3049 = vunpack.c.l.b16 %v658
        %v3050 = vunpack.c.l.b16 %v659
        %v3051 = vunpack.c.l.b16 %v660
        %v3052 = vunpack.c.l.b16 %v661
        %v3053 = vunpack.c.l.b16 %v662
        %v3054 = vunpack.c.l.b16 %v663
        %v3055 = vpack.c.b16 %v3046, %v3045
        %v3056 = vpack.c.b16 %v3048, %v3047
        %v3057 = vpack.c.b16 %v3050, %v3049
        %v3058 = vpack.c.b16 %v3052, %v3051
        %v3059 = vpack.c.b16 %v3054, %v3053
        %v3066 = vsel %vm2990, %v2956, 0
        %3068 = vmatprep.subr.bf16.mxu0 0
        %3069 = vmatpush1.bf16.msra.mxu0 0
        %3070 = vmatprep.subr.bf16.mxu0 0
        %3071 = vmatpush1.bf16.msra.mxu0 0
        %3072 = vmatprep.subr.bf16.mxu0 0
        %3073 = vmatpush1.bf16.msra.mxu0 0
        %3074 = vmatprep.subr.bf16.mxu0 0
        %3075 = vmatpush1.bf16.msra.mxu0 %v3059
        %3076 = vmatprep.subr.bf16.mxu0 0
        %3077 = vmatpush1.bf16.msra.mxu0 %v3058
        %3078 = vmatprep.subr.bf16.mxu0 0
        %3079 = vmatpush1.bf16.msra.mxu0 %v3057
        %3080 = vmatprep.subr.bf16.mxu0 0
        %3081 = vmatpush1.bf16.msra.mxu0 %v3056
        %3082 = vmatprep.subr.bf16.mxu0 0
        %3083 = vmatpush1.bf16.msra.mxu0 %v3055
        %3084 = vmatprep.subr.bf16.mxu0 0
        %3085 = vmatpush2.bf16.msra.mxu0 0
        %3086 = vmatprep.subr.bf16.mxu0 0
        %3087 = vmatpush2.bf16.msra.mxu0 0
        %3088 = vmatprep.subr.bf16.mxu0 0
        %3089 = vmatpush2.bf16.msra.mxu0 0
        %3090 = vmatprep.subr.bf16.mxu0 0
        %3091 = vmatpush2.bf16.msra.mxu0 0
        %3092 = vmatprep.subr.bf16.mxu0 0
        %3093 = vmatpush2.bf16.msra.mxu0 0
        %3094 = vmatprep.subr.bf16.mxu0 0
        %3095 = vmatpush2.bf16.msra.mxu0 0
        %3096 = vmatprep.subr.bf16.mxu0 0
        %3097 = vmatpush2.bf16.msra.mxu0 0
        %3098 = vmatprep.subr.bf16.mxu0 0
        %3099 = vmatpush2.bf16.msra.mxu0 0
        %3100 = vmatprep.mubr.bf16.mxu0 0
        %3101 = vmatmul.mubr.bf16.gmra.mxu0 %v3066
        %v3102 = vpop.f32.mrf.mxu0
        %v3103 = vadd.f32 %v3029, %v3102
        %v3104 = vpop.f32.mrf.mxu0
        %v3105 = vpop.f32.mrf.mxu0
        %v3106 = vadd.f32 %v3032, %v3105
        %v3107 = vpop.f32.mrf.mxu0
        %3108 = vdwg.mxu0
        %v3119 = vunpack.c.l.b16 %v674
        %v3120 = vunpack.c.l.b16 %v675
        %v3121 = vunpack.c.l.b16 %v676
        %v3122 = vunpack.c.l.b16 %v677
        %v3123 = vunpack.c.l.b16 %v678
        %v3124 = vunpack.c.l.b16 %v679
        %v3125 = vunpack.c.l.b16 %v680
        %v3126 = vunpack.c.l.b16 %v681
        %v3127 = vunpack.c.l.b16 %v682
        %v3128 = vunpack.c.l.b16 %v683
        %v3129 = vpack.c.b16 %v3120, %v3119
        %v3130 = vpack.c.b16 %v3122, %v3121
        %v3131 = vpack.c.b16 %v3124, %v3123
        %v3132 = vpack.c.b16 %v3126, %v3125
        %v3133 = vpack.c.b16 %v3128, %v3127
        %v3140 = vsel %vm2990, %v2958, 0
        %3142 = vmatprep.subr.bf16.mxu0 0
        %3143 = vmatpush1.bf16.msra.mxu0 0
        %3144 = vmatprep.subr.bf16.mxu0 0
        %3145 = vmatpush1.bf16.msra.mxu0 0
        %3146 = vmatprep.subr.bf16.mxu0 0
        %3147 = vmatpush1.bf16.msra.mxu0 0
        %3148 = vmatprep.subr.bf16.mxu0 0
        %3149 = vmatpush1.bf16.msra.mxu0 %v3133
        %3150 = vmatprep.subr.bf16.mxu0 0
        %3151 = vmatpush1.bf16.msra.mxu0 %v3132
        %3152 = vmatprep.subr.bf16.mxu0 0
        %3153 = vmatpush1.bf16.msra.mxu0 %v3131
        %3154 = vmatprep.subr.bf16.mxu0 0
        %3155 = vmatpush1.bf16.msra.mxu0 %v3130
        %3156 = vmatprep.subr.bf16.mxu0 0
        %3157 = vmatpush1.bf16.msra.mxu0 %v3129
        %3158 = vmatprep.subr.bf16.mxu0 0
        %3159 = vmatpush2.bf16.msra.mxu0 0
        %3160 = vmatprep.subr.bf16.mxu0 0
        %3161 = vmatpush2.bf16.msra.mxu0 0
        %3162 = vmatprep.subr.bf16.mxu0 0
        %3163 = vmatpush2.bf16.msra.mxu0 0
        %3164 = vmatprep.subr.bf16.mxu0 0
        %3165 = vmatpush2.bf16.msra.mxu0 0
        %3166 = vmatprep.subr.bf16.mxu0 0
        %3167 = vmatpush2.bf16.msra.mxu0 0
        %3168 = vmatprep.subr.bf16.mxu0 0
        %3169 = vmatpush2.bf16.msra.mxu0 0
        %3170 = vmatprep.subr.bf16.mxu0 0
        %3171 = vmatpush2.bf16.msra.mxu0 0
        %3172 = vmatprep.subr.bf16.mxu0 0
        %3173 = vmatpush2.bf16.msra.mxu0 0
        %3174 = vmatprep.mubr.bf16.mxu0 0
        %3175 = vmatmul.mubr.bf16.gmra.mxu0 %v3140
        %v3176 = vpop.f32.mrf.mxu0
        %v3177 = vadd.f32 0.0, %v3176
        %v3178 = vpop.f32.mrf.mxu0
        %v3179 = vpop.f32.mrf.mxu0
        %v3180 = vadd.f32 0.0, %v3179
        %v3181 = vpop.f32.mrf.mxu0
        %3182 = vdwg.mxu0
        %v3183 = vadd.f32 %v3103, %v3177
        %v3184 = vadd.f32 %v3106, %v3180
        %v3195 = vunpack.c.l.b16 %v684
        %v3196 = vunpack.c.l.b16 %v685
        %v3197 = vunpack.c.l.b16 %v686
        %v3198 = vunpack.c.l.b16 %v687
        %v3199 = vunpack.c.l.b16 %v688
        %v3200 = vunpack.c.l.b16 %v689
        %v3201 = vunpack.c.l.b16 %v690
        %v3202 = vunpack.c.l.b16 %v691
        %v3203 = vunpack.c.l.b16 %v692
        %v3204 = vunpack.c.l.b16 %v693
        %v3205 = vpack.c.b16 %v3196, %v3195
        %v3206 = vpack.c.b16 %v3198, %v3197
        %v3207 = vpack.c.b16 %v3200, %v3199
        %v3208 = vpack.c.b16 %v3202, %v3201
        %v3209 = vpack.c.b16 %v3204, %v3203
        %v3216 = vsel %vm2990, %v2959, 0
        %3218 = vmatprep.subr.bf16.mxu0 0
        %3219 = vmatpush1.bf16.msra.mxu0 0
        %3220 = vmatprep.subr.bf16.mxu0 0
        %3221 = vmatpush1.bf16.msra.mxu0 0
        %3222 = vmatprep.subr.bf16.mxu0 0
        %3223 = vmatpush1.bf16.msra.mxu0 0
        %3224 = vmatprep.subr.bf16.mxu0 0
        %3225 = vmatpush1.bf16.msra.mxu0 %v3209
        %3226 = vmatprep.subr.bf16.mxu0 0
        %3227 = vmatpush1.bf16.msra.mxu0 %v3208
        %3228 = vmatprep.subr.bf16.mxu0 0
        %3229 = vmatpush1.bf16.msra.mxu0 %v3207
        %3230 = vmatprep.subr.bf16.mxu0 0
        %3231 = vmatpush1.bf16.msra.mxu0 %v3206
        %3232 = vmatprep.subr.bf16.mxu0 0
        %3233 = vmatpush1.bf16.msra.mxu0 %v3205
        %3234 = vmatprep.subr.bf16.mxu0 0
        %3235 = vmatpush2.bf16.msra.mxu0 0
        %3236 = vmatprep.subr.bf16.mxu0 0
        %3237 = vmatpush2.bf16.msra.mxu0 0
        %3238 = vmatprep.subr.bf16.mxu0 0
        %3239 = vmatpush2.bf16.msra.mxu0 0
        %3240 = vmatprep.subr.bf16.mxu0 0
        %3241 = vmatpush2.bf16.msra.mxu0 0
        %3242 = vmatprep.subr.bf16.mxu0 0
        %3243 = vmatpush2.bf16.msra.mxu0 0
        %3244 = vmatprep.subr.bf16.mxu0 0
        %3245 = vmatpush2.bf16.msra.mxu0 0
        %3246 = vmatprep.subr.bf16.mxu0 0
        %3247 = vmatpush2.bf16.msra.mxu0 0
        %3248 = vmatprep.subr.bf16.mxu0 0
        %3249 = vmatpush2.bf16.msra.mxu0 0
        %3250 = vmatprep.mubr.bf16.mxu0 0
        %3251 = vmatmul.mubr.bf16.gmra.mxu0 %v3216
        %v3252 = vpop.f32.mrf.mxu0
        %v3253 = vadd.f32 0.0, %v3252
        %v3254 = vpop.f32.mrf.mxu0
        %v3255 = vpop.f32.mrf.mxu0
        %v3256 = vadd.f32 0.0, %v3255
        %v3257 = vpop.f32.mrf.mxu0
        %3258 = vdwg.mxu0
        %v3259 = vadd.f32 %v3183, %v3253
        %v3260 = vadd.f32 %v3184, %v3256
        %v3261 = vld [vmem:[%s6] sm:$0x1]
        %v3263 = vlaneseq
        %v3264 = vshrl.u32 %v3263, 7
        %v3265 = vsub.s32 0, %v3264
        %v3266 = vrot.slane %v3261, %v3265
        %v3268 = vadd.f32 %v3259, %v3266
        %v3269 = vadd.f32 %v3260, %v3266
        %v3270 = vmax.f32 %v3268, 0.0
        %v3271 = vmax.f32 %v3269, 0.0
        %v3272 = vpack.c.bf16 %v3271, %v3270
        %v3273 = vld [vmem:[%s7] sm:$0xf]
        %v3274 = vld [vmem:[%s7 + $0x4] sm:$0xf]
        %v3275 = vld [vmem:[%s7 + $0x8] sm:$0xf]
        %v3276 = vld [vmem:[%s7 + $0xc] sm:$0xf]
        %v3277 = vld [vmem:[%s7 + $0x10] sm:$0xf]
        %v3278 = vld [vmem:[%s7 + $0x14] sm:$0xf]
        %v3279 = vld [vmem:[%s7 + $0x18] sm:$0x1]
        %v3280 = vld [vmem:[%s8] sm:$0x1]
        %v3282 = vlaneseq
        %v3283 = vshrl.u32 %v3282, 7
        %v3284 = vsub.s32 0, %v3283
        %v3285 = vrot.slane %v3280, %v3284
        %v3294 = vunpack.c.l.b16 %v3273
        %v3295 = vunpack.c.l.b16 %v3274
        %v3296 = vunpack.c.l.b16 %v3275
        %v3297 = vunpack.c.l.b16 %v3276
        %v3298 = vunpack.c.l.b16 %v3277
        %v3299 = vunpack.c.l.b16 %v3278
        %v3300 = vunpack.c.l.b16 %v3279
        %v3301 = vpack.c.b16 %v3295, %v3294
        %v3302 = vpack.c.b16 %v3297, %v3296
        %v3303 = vpack.c.b16 %v3299, %v3298
        %v3304 = vpack.c.b16 %v3300, %v3300
        %vm3308 = vcmask 408576
        %v3310 = vsel %vm3308, %v3272, 0
        %vm3312 = vcmask 1040384
        %v3314 = vsel %vm3312, %v3304, 0
        %3316 = vmatprep.subr.bf16.mxu0 0
        %3317 = vmatpush1.bf16.msra.mxu0 0
        %3318 = vmatprep.subr.bf16.mxu0 0
        %3319 = vmatpush1.bf16.msra.mxu0 0
        %3320 = vmatprep.subr.bf16.mxu0 0
        %3321 = vmatpush1.bf16.msra.mxu0 0
        %3322 = vmatprep.subr.bf16.mxu0 0
        %3323 = vmatpush1.bf16.msra.mxu0 0
        %3324 = vmatprep.subr.bf16.mxu0 0
        %3325 = vmatpush1.bf16.msra.mxu0 %v3314
        %3326 = vmatprep.subr.bf16.mxu0 0
        %3327 = vmatpush1.bf16.msra.mxu0 %v3303
        %3328 = vmatprep.subr.bf16.mxu0 0
        %3329 = vmatpush1.bf16.msra.mxu0 %v3302
        %3330 = vmatprep.subr.bf16.mxu0 0
        %3331 = vmatpush1.bf16.msra.mxu0 %v3301
        %3332 = vmatprep.subr.bf16.mxu0 0
        %3333 = vmatpush2.bf16.msra.mxu0 0
        %3334 = vmatprep.subr.bf16.mxu0 0
        %3335 = vmatpush2.bf16.msra.mxu0 0
        %3336 = vmatprep.subr.bf16.mxu0 0
        %3337 = vmatpush2.bf16.msra.mxu0 0
        %3338 = vmatprep.subr.bf16.mxu0 0
        %3339 = vmatpush2.bf16.msra.mxu0 0
        %3340 = vmatprep.subr.bf16.mxu0 0
        %3341 = vmatpush2.bf16.msra.mxu0 0
        %3342 = vmatprep.subr.bf16.mxu0 0
        %3343 = vmatpush2.bf16.msra.mxu0 0
        %3344 = vmatprep.subr.bf16.mxu0 0
        %3345 = vmatpush2.bf16.msra.mxu0 0
        %3346 = vmatprep.subr.bf16.mxu0 0
        %3347 = vmatpush2.bf16.msra.mxu0 0
        %3348 = vmatprep.mubr.bf16.mxu0 0
        %3349 = vmatmul.mubr.bf16.gmra.mxu0 %v3310
        %v3350 = vpop.f32.mrf.mxu0
        %v3351 = vadd.f32 %v3285, %v3350
        %v3352 = vpop.f32.mrf.mxu0
        %v3353 = vpop.f32.mrf.mxu0
        %v3354 = vadd.f32 %v3285, %v3353
        %v3355 = vpop.f32.mrf.mxu0
        %3356 = vdwg.mxu0
        %vm3357 = vcmask 80896
        %v3358 = vsel %vm3357, %v3351, -inf
        %3359 = vmax.xlane.f32.xlu0 %v3358
        %v3360 = vpop.xlane.xlu0 %3359
        %v3361 = vsel %vm3357, %v3354, -inf
        %3362 = vmax.xlane.f32.xlu0 %v3361
        %v3363 = vpop.xlane.xlu0 %3362
        %v3364 = vsub.f32 %v3351, %v3360
        %v3365 = vsub.f32 %v3354, %v3363
        %v3366 = vmul.f32 %v3364, 1.442695
        %v3367 = vpow.pop %v3366
        %v3368 = vmul.f32 %v3365, 1.442695
        %v3369 = vpow.pop %v3368
        %v3370 = vsel %vm3357, %v3367, 0.0
        %3371 = vadd.xlane.f32.xlu0 %v3370
        %v3372 = vpop.xlane.xlu0 %3371
        %v3373 = vsel %vm3357, %v3369, 0.0
        %3374 = vadd.xlane.f32.xlu0 %v3373
        %v3375 = vpop.xlane.xlu0 %3374
        %v3376 = vlog2.pop %v3372
        %v3377 = vmul.f32 %v3376, 0.6931472
        %v3378 = vlog2.pop %v3375
        %v3379 = vmul.f32 %v3378, 0.6931472
        %v3380 = vsub.f32 %v3364, %v3377
        %v3381 = vsub.f32 %v3365, %v3379
        %3382 = vst.msk [vmem:[%s558] sm:$0xff] %vm3357, %v3380
        %3383 = vst.msk [vmem:[%s558 + $0x8] sm:$0xff] %vm3357, %v3381
        %s3384 = smul.u32 2, %s20
        %p3385 = scmp.lt.s32.totalorder %s3384, 3
        %s3386 = scalar_select %p3385, %s3384, 3
        %s3387 = smul.addr %s3386, 8
        %s3388 = scalar_lea.vmem %s9, %s3387
        // Predicated region
        $region95: #{net_forward.1} parent=89 // pred_check
          %p3389 = pneg %p232
        $region96: #{net_forward.1} parent=89 // pred_check_branch
          %3391 = sbr.rel (%p3389) target = $region98
        $region97: #{net_forward.1} parent=89 // pred_region
          %s3392 = smul.u32 2, %s20
        $region98: #{net_forward.1} parent=89 // pred_fallthru
          _
      $region90: #{net_forward.1} parent=5 // pred_fallthru
        _
      %p3393 = scmp.le.s32.totalorder 2, %s15
      // Predicated region
      $region99: #{net_forward.1} parent=5 // pred_check
        %p3394 = pneg %p3393
      $region100: #{net_forward.1} parent=5 // pred_check_branch
        %3396 = sbr.rel (%p3394) target = $region102
      $region101: #{net_forward.1} parent=5 // pred_region
        %s3397 = ssub.s32 %s15, 2
        // Predicated region
        $region103: #{net_forward.1} parent=101 // pred_check
          %p3398 = pneg %p238
        $region104: #{net_forward.1} parent=101 // pred_check_branch
          %3400 = sbr.rel (%p3398) target = $region106
        $region105: #{net_forward.1} parent=101 // pred_region
          %s3401 = smul.u32 2, %s21
          %p3402 = scmp.lt.s32.totalorder %s3401, 3
          %s3403 = scalar_select %p3402, %s3401, 3
          %s3404 = smul.addr %s3403, 8
          %s3405 = scalar_lea.vmem %s9, %s3404
        $region106: #{net_forward.1} parent=101 // pred_fallthru
          _
      $region102: #{net_forward.1} parent=5 // pred_fallthru
        _
    $region6: #{net_forward.1} parent=1 // loop_footer
      %s19 = sadd.s32 1, %s15
    $region7: #{net_forward.1} parent=1 // loop_footer_branch
      %14 = sbr.rel target = $region3
    $region8: #{net_forward.1} parent=1 // loop_exit
      _

</llo_original>
